<compile_context>
chip_gen: v6e
topology: v6e:2x2x1
jax: 0.10.0
libtpu: 0.0.40
codegen_flags: <defaults>
</compile_context>

<pallas_src>
import functools

import numpy as np
import jax
import jax.numpy as jnp
from jax import lax
from jax.experimental import pallas as pl
from jax.experimental.pallas import tpu as pltpu

# ----------------------------- small synthetic cfg -----------------------------
NUM_CLASSES = 5          # cfg.MODEL.NUM_CLASSES
REFINE_TIMES = 3         # cfg.REFINE_TIMES
DEDUP_BOXES = 0.25       # cfg.DEDUP_BOXES
IMG_H = IMG_W = 16       # spatial = 16
IN_CH = 3
C1, C2 = 16, 32          # small "VGG16" backbone channels (dim_out = C2)
SPATIAL_SCALE = 0.5      # one 2x2 max-pool -> stride 2
ROI_POOL = 4             # RoiPoolLayer pooled size (7 in the real model)
HIDDEN = 64              # fc6 / fc7 width (4096 in the real model)
NUM_ROIS = 8
LANE = 128               # lane-padding width for the fused head outputs


# ----------------------------- Pallas kernel: 3x3 conv + ReLU ------------------
def _conv3x3_relu_kernel(xp_ref, w_ref, b_ref, o_ref):
    # xp_ref: [H+2, W+2, Cin] f32 (padded NHWC, batch squeezed), VMEM-resident.
    # w_ref:  [9, Cin, Cout] bf16 (tap-major: (di,dj) -> di*3+dj), b_ref: [1, Cout] f32.
    # o_ref:  block [1, W, Cout] -> output row `h` (conv + bias + ReLU).
    h = pl.program_id(0)
    W = o_ref.shape[1]
    Cout = o_ref.shape[2]
    acc = jnp.zeros((W, Cout), jnp.float32)
    for di in range(3):
        for dj in range(3):
            patch = xp_ref[h + di, pl.ds(dj, W), :]          # [W, Cin]
            wk = w_ref[di * 3 + dj, :, :]                    # [Cin, Cout] bf16
            acc = acc + jnp.dot(patch.astype(jnp.bfloat16), wk,
                                preferred_element_type=jnp.float32)
    o_ref[0, :, :] = jnp.maximum(acc + b_ref[...], 0.0)


def conv3x3_relu(x_hwc, w_taps, b):
    """'same' 3x3 conv + ReLU. x_hwc: [H, W, Cin] f32, w_taps: [9, Cin, Cout]."""
    H, W, Cin = x_hwc.shape
    Cout = w_taps.shape[-1]
    xp = jnp.pad(x_hwc, ((1, 1), (1, 1), (0, 0)))            # single cheap XLA pad
    return pl.pallas_call(
        _conv3x3_relu_kernel,
        out_shape=jax.ShapeDtypeStruct((H, W, Cout), jnp.float32),
        grid=(H,),
        in_specs=[
            pl.BlockSpec((H + 2, W + 2, Cin), lambda h: (0, 0, 0)),
            pl.BlockSpec((9, Cin, Cout), lambda h: (0, 0, 0)),
            pl.BlockSpec((1, Cout), lambda h: (0, 0)),
        ],
        out_specs=pl.BlockSpec((1, W, Cout), lambda h: (h, 0, 0)),
        compiler_params=pltpu.CompilerParams(dimension_semantics=("parallel",)),
    )(xp, w_taps.astype(jnp.bfloat16), b.reshape(1, Cout).astype(jnp.float32))


# ----------------------------- Pallas kernel: RoI max-pool ---------------------
def _roi_max_pool_kernel(tbl_ref, feat_ref, o_ref):
    # tbl_ref:  SMEM int32 [R * PP * 4], flat (hs, he, ws, we) per (roi, bin).
    # feat_ref: [Hf, Wf, C] f32 feature map, VMEM-resident across the grid.
    # o_ref:    block [1, PP, C] -> pooled bins for roi `r` (flatten order (bin, c)).
    r = pl.program_id(0)
    Hf, Wf, C = feat_ref.shape
    PP = o_ref.shape[1]
    f = feat_ref[...]
    hh = lax.broadcasted_iota(jnp.int32, (Hf, Wf, C), 0)
    ww = lax.broadcasted_iota(jnp.int32, (Hf, Wf, C), 1)
    base = r * (PP * 4)
    bins = []
    for bidx in range(PP):                                    # static unroll (PP = 16)
        hs = tbl_ref[base + bidx * 4 + 0]
        he = tbl_ref[base + bidx * 4 + 1]
        ws = tbl_ref[base + bidx * 4 + 2]
        we = tbl_ref[base + bidx * 4 + 3]
        m = (hh >= hs) & (hh < he) & (ww >= ws) & (ww < we)
        vals = jnp.where(m, f, jnp.float32(-1e30))
        bmax = jnp.max(jnp.max(vals, axis=0), axis=0, keepdims=True)   # [1, C]
        valid = ((he > hs) & (we > ws)).astype(jnp.float32)
        bins.append(bmax * valid)                             # empty bin -> 0 (Caffe RoIPool)
    o_ref[0, :, :] = jnp.concatenate(bins, axis=0)            # one dense [PP, C] store


def roi_max_pool(feat_hwc, bin_tbl, num_rois, pool):
    Hf, Wf, C = feat_hwc.shape
    PP = pool * pool
    grid_spec = pltpu.PrefetchScalarGridSpec(
        num_scalar_prefetch=1,
        grid=(num_rois,),
        in_specs=[pl.BlockSpec((Hf, Wf, C), lambda r, tbl: (0, 0, 0))],
        out_specs=pl.BlockSpec((1, PP, C), lambda r, tbl: (r, 0, 0)),
    )
    out = pl.pallas_call(
        _roi_max_pool_kernel,
        out_shape=jax.ShapeDtypeStruct((num_rois, PP, C), jnp.float32),
        grid_spec=grid_spec,
        compiler_params=pltpu.CompilerParams(dimension_semantics=("arbitrary",)),
    )(bin_tbl, feat_hwc)
    # TODO(synk): flatten order here is (ph, pw, c); PyTorch RoIPool on NCHW is (c, ph, pw) —
    # real fc6 weights must be permuted accordingly when porting trained weights.
    return out.reshape(num_rois, PP * C)


# ----------------------------- Pallas kernel: fused MIDN+OICR head --------------
def _head_kernel(box_ref, fc6w_ref, fc6b_ref, fc7w_ref, fc7b_ref, hw_ref, hb_ref,
                 mil_ref, imcls_ref, refine_ref, final_ref, *, num_classes, refine_times):
    R = box_ref.shape[0]
    C = num_classes
    T = refine_times
    # fc6 / fc7 + ReLU.  TODO(synk): dropout after fc6/fc7 is an inference identity, omitted.
    h = jnp.dot(box_ref[...].astype(jnp.bfloat16), fc6w_ref[...],
                preferred_element_type=jnp.float32)
    h = jnp.maximum(h + fc6b_ref[...], 0.0)
    h = jnp.dot(h.astype(jnp.bfloat16), fc7w_ref[...],
                preferred_element_type=jnp.float32)
    h = jnp.maximum(h + fc7b_ref[...], 0.0)

    # one lane-dense matmul: [mil_cls | mil_det | refine_0..T-1], each segment padded to 128.
    s = jnp.dot(h.astype(jnp.bfloat16), hw_ref[...], preferred_element_type=jnp.float32)
    s = s + hb_ref[...]

    col = lax.broadcasted_iota(jnp.int32, (R, LANE), 1)
    mask_c = col < C
    mask_c1 = col < (C + 1)
    neg = jnp.float32(-1e30)

    # --- MIL: softmax over classes (cls) * softmax over rois (det) ---
    cls_l = jnp.where(mask_c, s[:, 0:LANE], neg)
    det_l = s[:, LANE:2 * LANE]
    cm = jnp.max(cls_l, axis=1, keepdims=True)
    ce = jnp.where(mask_c, jnp.exp(cls_l - cm), 0.0)
    cls_sm = ce * pl.reciprocal(jnp.sum(ce, axis=1, keepdims=True), approx=True)
    dm = jnp.max(det_l, axis=0, keepdims=True)
    de = jnp.exp(det_l - dm)
    det_sm = de * pl.reciprocal(jnp.sum(de, axis=0, keepdims=True), approx=True)
    mil = cls_sm * jnp.where(mask_c, det_sm, 0.0)
    mil_ref[...] = mil
    imcls_ref[...] = jnp.sum(mil, axis=0, keepdims=True)      # mil_score.sum(dim=0, keepdim=True)

    # --- refinement agents: per-head class softmax over C+1, then mean over heads ---
    acc = jnp.zeros((R, LANE), jnp.float32)
    for t in range(T):
        r_l = jnp.where(mask_c1, s[:, (2 + t) * LANE:(3 + t) * LANE], neg)
        rm = jnp.max(r_l, axis=1, keepdims=True)
        re_ = jnp.where(mask_c1, jnp.exp(r_l - rm), 0.0)
        r_sm = re_ * pl.reciprocal(jnp.sum(re_, axis=1, keepdims=True), approx=True)
        refine_ref[t, :, :] = r_sm
        acc = acc + r_sm
    final_ref[...] = acc * jnp.float32(1.0 / T)


def fused_head(box, fc6_w, fc6_b, fc7_w, fc7_b, head_w, head_b):
    R, F = box.shape
    HID = fc6_w.shape[1]
    Wtot = head_w.shape[1]                                   # (2 + T) * LANE
    T = REFINE_TIMES
    kern = functools.partial(_head_kernel, num_classes=NUM_CLASSES, refine_times=T)
    out_shape = (
        jax.ShapeDtypeStruct((R, LANE), jnp.float32),        # mil_score (lane-padded)
        jax.ShapeDtypeStruct((1, LANE), jnp.float32),        # im_cls_score (lane-padded)
        jax.ShapeDtypeStruct((T, R, LANE), jnp.float32),     # refine_score (lane-padded)
        jax.ShapeDtypeStruct((R, LANE), jnp.float32),        # final (deduped, lane-padded)
    )
    return pl.pallas_call(
        kern,
        out_shape=out_shape,
        grid=(1,),
        in_specs=[
            pl.BlockSpec((R, F), lambda i: (0, 0)),
            pl.BlockSpec((F, HID), lambda i: (0, 0)),
            pl.BlockSpec((1, HID), lambda i: (0, 0)),
            pl.BlockSpec((HID, HID), lambda i: (0, 0)),
            pl.BlockSpec((1, HID), lambda i: (0, 0)),
            pl.BlockSpec((HID, Wtot), lambda i: (0, 0)),
            pl.BlockSpec((1, Wtot), lambda i: (0, 0)),
        ],
        out_specs=(
            pl.BlockSpec((R, LANE), lambda i: (0, 0)),
            pl.BlockSpec((1, LANE), lambda i: (0, 0)),
            pl.BlockSpec((T, R, LANE), lambda i: (0, 0, 0)),
            pl.BlockSpec((R, LANE), lambda i: (0, 0)),
        ),
        compiler_params=pltpu.CompilerParams(dimension_semantics=("arbitrary",)),
    )(box,
      fc6_w.astype(jnp.bfloat16), fc6_b.reshape(1, HID).astype(jnp.float32),
      fc7_w.astype(jnp.bfloat16), fc7_b.reshape(1, HID).astype(jnp.float32),
      head_w.astype(jnp.bfloat16), head_b.astype(jnp.float32))


# ----------------------------- parameters --------------------------------------
def init_params(key):
    ks = jax.random.split(key, 8 + REFINE_TIMES)
    n = lambda k, s, sc: sc * jax.random.normal(k, s, dtype=jnp.float32)
    return {
        # conv weights stored tap-major for the fused conv kernel: [9, in_c, out_c]
        # TODO(synk): PyTorch conv weights are (out,in,kh,kw); transpose needed for real weights.
        'conv1_w': n(ks[0], (9, IN_CH, C1), 0.05), 'conv1_b': jnp.zeros((C1,), jnp.float32),
        'conv2_w': n(ks[1], (9, C1, C2), 0.05),    'conv2_b': jnp.zeros((C2,), jnp.float32),
        'fc6_w': n(ks[2], (C2 * ROI_POOL * ROI_POOL, HIDDEN), 0.02),
        'fc6_b': jnp.zeros((HIDDEN,), jnp.float32),
        'fc7_w': n(ks[3], (HIDDEN, HIDDEN), 0.02), 'fc7_b': jnp.zeros((HIDDEN,), jnp.float32),
        'mil_cls_w': n(ks[4], (HIDDEN, NUM_CLASSES), 0.02),
        'mil_cls_b': jnp.zeros((NUM_CLASSES,), jnp.float32),
        'mil_det_w': n(ks[5], (HIDDEN, NUM_CLASSES), 0.02),
        'mil_det_b': jnp.zeros((NUM_CLASSES,), jnp.float32),
        'refine_w': [n(ks[6 + i], (HIDDEN, NUM_CLASSES + 1), 0.02) for i in range(REFINE_TIMES)],
        'refine_b': [jnp.zeros((NUM_CLASSES + 1,), jnp.float32) for _ in range(REFINE_TIMES)],
    }


def _pack_head_weights(params):
    """Concat mil_cls | mil_det | refine heads into one lane-padded weight/bias matrix."""
    def pad_seg(w, b):
        width = w.shape[1]
        return (jnp.pad(w, ((0, 0), (0, LANE - width))),
                jnp.pad(b.reshape(1, -1), ((0, 0), (0, LANE - width))))
    segs = [(params['mil_cls_w'], params['mil_cls_b']),
            (params['mil_det_w'], params['mil_det_b'])] + \
           list(zip(params['refine_w'], params['refine_b']))
    ws, bs = zip(*[pad_seg(w, b) for w, b in segs])
    return jnp.concatenate(ws, axis=1), jnp.concatenate(bs, axis=1)


# ----------------------------- host-side glue ----------------------------------
def compute_roi_bin_table(rois_np, spatial_scale, pool, Hf, Wf):
    """Caffe-style quantized RoIPool bin bounds (hs, he, ws, we) per (roi, bin), int32 flat."""
    # TODO(synk): batch index rois[:,0] assumed 0 (single-image WSDDN batch).
    R = rois_np.shape[0]
    tbl = np.zeros((R, pool * pool, 4), np.int32)
    for i, r in enumerate(rois_np):
        x1 = min(max(int(round(float(r[1]) * spatial_scale)), 0), Wf - 1)
        y1 = min(max(int(round(float(r[2]) * spatial_scale)), 0), Hf - 1)
        x2 = min(max(int(round(float(r[3]) * spatial_scale)), 0), Wf - 1)
        y2 = min(max(int(round(float(r[4]) * spatial_scale)), 0), Hf - 1)
        w = max(x2 - x1 + 1, 1)
        h = max(y2 - y1 + 1, 1)
        for ph in range(pool):
            hs = min(max(y1 + int(np.floor(ph * h / pool)), 0), Hf)
            he = min(max(y1 + int(np.ceil((ph + 1) * h / pool)), 0), Hf)
            for pw in range(pool):
                ws = min(max(x1 + int(np.floor(pw * w / pool)), 0), Wf)
                we = min(max(x1 + int(np.ceil((pw + 1) * w / pool)), 0), Wf)
                tbl[i, ph * pool + pw] = (hs, he, ws, we)
    return tbl.reshape(-1)


# ----------------------------- forward (eval path) -----------------------------
@jax.jit
def _device_forward(params, data_nchw, bin_tbl, inv_index):
    # backbone (NHWC, batch squeezed; fused Pallas conv kernels)
    x = jnp.transpose(data_nchw.astype(jnp.float32), (0, 2, 3, 1))[0]     # [H, W, Cin]
    x = conv3x3_relu(x, params['conv1_w'], params['conv1_b'])             # [H, W, C1]
    H, W, _ = x.shape
    x = jnp.max(x.reshape(H // 2, 2, W // 2, 2, C1), axis=(1, 3))         # 2x2 max-pool
    feat = conv3x3_relu(x, params['conv2_w'], params['conv2_b'])          # [Hf, Wf, C2]

    # RoI max-pool (Pallas, scalar-prefetch bin tables)
    num_rois = bin_tbl.shape[0] // (ROI_POOL * ROI_POOL * 4)
    box = roi_max_pool(feat, bin_tbl, num_rois, ROI_POOL)                 # [Rd, P*P*C2]

    # fused MIDN + OICR head (single pallas_call, lane-padded outputs)
    head_w, head_b = _pack_head_weights(params)
    mil_p, imcls_p, refine_p, final_p = fused_head(
        box, params['fc6_w'], params['fc6_b'], params['fc7_w'], params['fc7_b'],
        head_w, head_b)

    C = NUM_CLASSES
    mil_score = mil_p[:, :C]
    im_cls_score = imcls_p[:, :C]
    refine_score = refine_p[:, :, :C + 1]
    final_scores = jnp.take(final_p[:, :C + 1], inv_index, axis=0)        # un-dedup on device
    return {'final_scores': final_scores, 'im_cls_score': im_cls_score,
            'mil_score': mil_score, 'refine_score': refine_score}


def detection_model_forward(params, data_nchw, rois, labels):
    del labels  # only used by the training branch (losses), not implemented here
    # DEDUP_BOXES hashing on host numpy, exactly as the reference (rois.cpu().numpy()).
    rois_np = np.asarray(rois, dtype=np.float64)
    v = np.array([1, 1e3, 1e6, 1e9, 1e12])
    hashes = np.round(rois_np * DEDUP_BOXES).dot(v)
    _, index, inv_index = np.unique(hashes, return_index=True, return_inverse=True)
    rois_dedup = rois_np[index, :]

    Hf, Wf = IMG_H // 2, IMG_W // 2
    bin_tbl = compute_roi_bin_table(rois_dedup, SPATIAL_SCALE, ROI_POOL, Hf, Wf)
    return _device_forward(params, data_nchw,
                           jnp.asarray(bin_tbl, jnp.int32),
                           jnp.asarray(np.asarray(inv_index).reshape(-1), jnp.int32))


# ----------------------------- main ---------------------------------------------
if __name__ == "__main__":
    key = jax.random.PRNGKey(0)
    k_p, k_d, k_r1, k_r2, k_l = jax.random.split(key, 5)

    params = init_params(k_p)
    data = jax.random.normal(k_d, (1, IN_CH, IMG_H, IMG_W), dtype=jnp.float32)  # NCHW like PyTorch

    # rois: [R, 5] = (batch_idx, x1, y1, x2, y2) in image coordinates
    x1y1 = jax.random.randint(k_r1, (NUM_ROIS, 2), 0, IMG_W // 2)
    wh = jax.random.randint(k_r2, (NUM_ROIS, 2), 2, IMG_W // 2)
    x2y2 = jnp.clip(x1y1 + wh, 0, IMG_W - 1)
    rois = jnp.concatenate(
        [jnp.zeros((NUM_ROIS, 1), jnp.float32), x1y1.astype(jnp.float32), x2y2.astype(jnp.float32)],
        axis=1)
    labels = (jax.random.uniform(k_l, (1, NUM_CLASSES)) > 0.5).astype(jnp.float32)

    out = detection_model_forward(params, data, rois, labels)
    jax.block_until_ready(out['final_scores'])
    jax.block_until_ready(out['im_cls_score'])

    assert out['final_scores'].shape == (NUM_ROIS, NUM_CLASSES + 1)
    assert out['im_cls_score'].shape == (1, NUM_CLASSES)
    print("KERNEL_OK")
</pallas_src>

<mosaic_0001>
module attributes {stable_mosaic.version = 11 : i64} {
  func.func @_conv3x3_relu_kernel(%arg0: i32, %arg1: memref<18x18x3xf32, #tpu.memory_space<vmem>>, %arg2: memref<9x3x16xbf16, #tpu.memory_space<vmem>>, %arg3: memref<1x16xf32, #tpu.memory_space<vmem>>, %arg4: memref<1x16x16xf32, #tpu.memory_space<vmem>>) attributes {dimension_semantics = [#tpu.dimension_semantics<parallel>], iteration_bounds = array<i64: 16>, scalar_prefetch = 0 : i64, scratch_operands = 0 : i64, tpu.core_type = #tpu.core_type<tc>, window_params = [{pipeline_mode = #tpu.pipeline_mode<synchronous>, transform_indices = @transform_0, window_bounds = array<i64: 18, 18, 3>}, {pipeline_mode = #tpu.pipeline_mode<synchronous>, transform_indices = @transform_1, window_bounds = array<i64: 9, 3, 16>}, {pipeline_mode = #tpu.pipeline_mode<synchronous>, transform_indices = @transform_2, window_bounds = array<i64: 1, 16>}, {transform_indices = @transform_3, window_bounds = array<i64: 1, 16, 16>}]} {
    %cst = arith.constant 0.000000e+00 : f32
    %0 = vector.broadcast %cst : f32 to vector<16x16xf32>
    %c0_i32 = arith.constant 0 : i32
    %1 = arith.addi %arg0, %c0_i32 : i32
    %2 = arith.index_cast %1 : i32 to index
    %c0 = arith.constant 0 : index
    %c0_0 = arith.constant 0 : index
    %3 = vector.load %arg1[%2, %c0, %c0_0] : memref<18x18x3xf32, #tpu.memory_space<vmem>>, vector<1x16x3xf32>
    %4 = vector.shape_cast %3 : vector<1x16x3xf32> to vector<16x3xf32>
    %c0_1 = arith.constant 0 : index
    %c0_2 = arith.constant 0 : index
    %c0_3 = arith.constant 0 : index
    %5 = vector.load %arg2[%c0_1, %c0_2, %c0_3] : memref<9x3x16xbf16, #tpu.memory_space<vmem>>, vector<1x3x16xbf16>
    %6 = vector.shape_cast %5 : vector<1x3x16xbf16> to vector<3x16xbf16>
    %7 = arith.truncf %4 : vector<16x3xf32> to vector<16x3xbf16>
    %cst_4 = arith.constant dense<0.000000e+00> : vector<16x16xf32>
    %8 = tpu.matmul %7, %6, %cst_4 {dimension_numbers = #tpu.dot_dimension_numbers<[1], [0], [0], [1], [0, 0, 1, 1], [], []>} : vector<16x3xbf16>, vector<3x16xbf16>, vector<16x16xf32> -> vector<16x16xf32>
    %9 = arith.addf %0, %8 : vector<16x16xf32>
    %c0_i32_5 = arith.constant 0 : i32
    %10 = arith.addi %arg0, %c0_i32_5 : i32
    %11 = arith.index_cast %10 : i32 to index
    %c1 = arith.constant 1 : index
    %c0_6 = arith.constant 0 : index
    %12 = vector.load %arg1[%11, %c1, %c0_6] : memref<18x18x3xf32, #tpu.memory_space<vmem>>, vector<1x16x3xf32>
    %13 = vector.shape_cast %12 : vector<1x16x3xf32> to vector<16x3xf32>
    %c1_7 = arith.constant 1 : index
    %c0_8 = arith.constant 0 : index
    %c0_9 = arith.constant 0 : index
    %14 = vector.load %arg2[%c1_7, %c0_8, %c0_9] : memref<9x3x16xbf16, #tpu.memory_space<vmem>>, vector<1x3x16xbf16>
    %15 = vector.shape_cast %14 : vector<1x3x16xbf16> to vector<3x16xbf16>
    %16 = arith.truncf %13 : vector<16x3xf32> to vector<16x3xbf16>
    %cst_10 = arith.constant dense<0.000000e+00> : vector<16x16xf32>
    %17 = tpu.matmul %16, %15, %cst_10 {dimension_numbers = #tpu.dot_dimension_numbers<[1], [0], [0], [1], [0, 0, 1, 1], [], []>} : vector<16x3xbf16>, vector<3x16xbf16>, vector<16x16xf32> -> vector<16x16xf32>
    %18 = arith.addf %9, %17 : vector<16x16xf32>
    %c0_i32_11 = arith.constant 0 : i32
    %19 = arith.addi %arg0, %c0_i32_11 : i32
    %20 = arith.index_cast %19 : i32 to index
    %c2 = arith.constant 2 : index
    %c0_12 = arith.constant 0 : index
    %21 = vector.load %arg1[%20, %c2, %c0_12] : memref<18x18x3xf32, #tpu.memory_space<vmem>>, vector<1x16x3xf32>
    %22 = vector.shape_cast %21 : vector<1x16x3xf32> to vector<16x3xf32>
    %c2_13 = arith.constant 2 : index
    %c0_14 = arith.constant 0 : index
    %c0_15 = arith.constant 0 : index
    %23 = vector.load %arg2[%c2_13, %c0_14, %c0_15] : memref<9x3x16xbf16, #tpu.memory_space<vmem>>, vector<1x3x16xbf16>
    %24 = vector.shape_cast %23 : vector<1x3x16xbf16> to vector<3x16xbf16>
    %25 = arith.truncf %22 : vector<16x3xf32> to vector<16x3xbf16>
    %cst_16 = arith.constant dense<0.000000e+00> : vector<16x16xf32>
    %26 = tpu.matmul %25, %24, %cst_16 {dimension_numbers = #tpu.dot_dimension_numbers<[1], [0], [0], [1], [0, 0, 1, 1], [], []>} : vector<16x3xbf16>, vector<3x16xbf16>, vector<16x16xf32> -> vector<16x16xf32>
    %27 = arith.addf %18, %26 : vector<16x16xf32>
    %c1_i32 = arith.constant 1 : i32
    %28 = arith.addi %arg0, %c1_i32 : i32
    %29 = arith.index_cast %28 : i32 to index
    %c0_17 = arith.constant 0 : index
    %c0_18 = arith.constant 0 : index
    %30 = vector.load %arg1[%29, %c0_17, %c0_18] : memref<18x18x3xf32, #tpu.memory_space<vmem>>, vector<1x16x3xf32>
    %31 = vector.shape_cast %30 : vector<1x16x3xf32> to vector<16x3xf32>
    %c3 = arith.constant 3 : index
    %c0_19 = arith.constant 0 : index
    %c0_20 = arith.constant 0 : index
    %32 = vector.load %arg2[%c3, %c0_19, %c0_20] : memref<9x3x16xbf16, #tpu.memory_space<vmem>>, vector<1x3x16xbf16>
    %33 = vector.shape_cast %32 : vector<1x3x16xbf16> to vector<3x16xbf16>
    %34 = arith.truncf %31 : vector<16x3xf32> to vector<16x3xbf16>
    %cst_21 = arith.constant dense<0.000000e+00> : vector<16x16xf32>
    %35 = tpu.matmul %34, %33, %cst_21 {dimension_numbers = #tpu.dot_dimension_numbers<[1], [0], [0], [1], [0, 0, 1, 1], [], []>} : vector<16x3xbf16>, vector<3x16xbf16>, vector<16x16xf32> -> vector<16x16xf32>
    %36 = arith.addf %27, %35 : vector<16x16xf32>
    %c1_i32_22 = arith.constant 1 : i32
    %37 = arith.addi %arg0, %c1_i32_22 : i32
    %38 = arith.index_cast %37 : i32 to index
    %c1_23 = arith.constant 1 : index
    %c0_24 = arith.constant 0 : index
    %39 = vector.load %arg1[%38, %c1_23, %c0_24] : memref<18x18x3xf32, #tpu.memory_space<vmem>>, vector<1x16x3xf32>
    %40 = vector.shape_cast %39 : vector<1x16x3xf32> to vector<16x3xf32>
    %c4 = arith.constant 4 : index
    %c0_25 = arith.constant 0 : index
    %c0_26 = arith.constant 0 : index
    %41 = vector.load %arg2[%c4, %c0_25, %c0_26] : memref<9x3x16xbf16, #tpu.memory_space<vmem>>, vector<1x3x16xbf16>
    %42 = vector.shape_cast %41 : vector<1x3x16xbf16> to vector<3x16xbf16>
    %43 = arith.truncf %40 : vector<16x3xf32> to vector<16x3xbf16>
    %cst_27 = arith.constant dense<0.000000e+00> : vector<16x16xf32>
    %44 = tpu.matmul %43, %42, %cst_27 {dimension_numbers = #tpu.dot_dimension_numbers<[1], [0], [0], [1], [0, 0, 1, 1], [], []>} : vector<16x3xbf16>, vector<3x16xbf16>, vector<16x16xf32> -> vector<16x16xf32>
    %45 = arith.addf %36, %44 : vector<16x16xf32>
    %c1_i32_28 = arith.constant 1 : i32
    %46 = arith.addi %arg0, %c1_i32_28 : i32
    %47 = arith.index_cast %46 : i32 to index
    %c2_29 = arith.constant 2 : index
    %c0_30 = arith.constant 0 : index
    %48 = vector.load %arg1[%47, %c2_29, %c0_30] : memref<18x18x3xf32, #tpu.memory_space<vmem>>, vector<1x16x3xf32>
    %49 = vector.shape_cast %48 : vector<1x16x3xf32> to vector<16x3xf32>
    %c5 = arith.constant 5 : index
    %c0_31 = arith.constant 0 : index
    %c0_32 = arith.constant 0 : index
    %50 = vector.load %arg2[%c5, %c0_31, %c0_32] : memref<9x3x16xbf16, #tpu.memory_space<vmem>>, vector<1x3x16xbf16>
    %51 = vector.shape_cast %50 : vector<1x3x16xbf16> to vector<3x16xbf16>
    %52 = arith.truncf %49 : vector<16x3xf32> to vector<16x3xbf16>
    %cst_33 = arith.constant dense<0.000000e+00> : vector<16x16xf32>
    %53 = tpu.matmul %52, %51, %cst_33 {dimension_numbers = #tpu.dot_dimension_numbers<[1], [0], [0], [1], [0, 0, 1, 1], [], []>} : vector<16x3xbf16>, vector<3x16xbf16>, vector<16x16xf32> -> vector<16x16xf32>
    %54 = arith.addf %45, %53 : vector<16x16xf32>
    %c2_i32 = arith.constant 2 : i32
    %55 = arith.addi %arg0, %c2_i32 : i32
    %56 = arith.index_cast %55 : i32 to index
    %c0_34 = arith.constant 0 : index
    %c0_35 = arith.constant 0 : index
    %57 = vector.load %arg1[%56, %c0_34, %c0_35] : memref<18x18x3xf32, #tpu.memory_space<vmem>>, vector<1x16x3xf32>
    %58 = vector.shape_cast %57 : vector<1x16x3xf32> to vector<16x3xf32>
    %c6 = arith.constant 6 : index
    %c0_36 = arith.constant 0 : index
    %c0_37 = arith.constant 0 : index
    %59 = vector.load %arg2[%c6, %c0_36, %c0_37] : memref<9x3x16xbf16, #tpu.memory_space<vmem>>, vector<1x3x16xbf16>
    %60 = vector.shape_cast %59 : vector<1x3x16xbf16> to vector<3x16xbf16>
    %61 = arith.truncf %58 : vector<16x3xf32> to vector<16x3xbf16>
    %cst_38 = arith.constant dense<0.000000e+00> : vector<16x16xf32>
    %62 = tpu.matmul %61, %60, %cst_38 {dimension_numbers = #tpu.dot_dimension_numbers<[1], [0], [0], [1], [0, 0, 1, 1], [], []>} : vector<16x3xbf16>, vector<3x16xbf16>, vector<16x16xf32> -> vector<16x16xf32>
    %63 = arith.addf %54, %62 : vector<16x16xf32>
    %c2_i32_39 = arith.constant 2 : i32
    %64 = arith.addi %arg0, %c2_i32_39 : i32
    %65 = arith.index_cast %64 : i32 to index
    %c1_40 = arith.constant 1 : index
    %c0_41 = arith.constant 0 : index
    %66 = vector.load %arg1[%65, %c1_40, %c0_41] : memref<18x18x3xf32, #tpu.memory_space<vmem>>, vector<1x16x3xf32>
    %67 = vector.shape_cast %66 : vector<1x16x3xf32> to vector<16x3xf32>
    %c7 = arith.constant 7 : index
    %c0_42 = arith.constant 0 : index
    %c0_43 = arith.constant 0 : index
    %68 = vector.load %arg2[%c7, %c0_42, %c0_43] : memref<9x3x16xbf16, #tpu.memory_space<vmem>>, vector<1x3x16xbf16>
    %69 = vector.shape_cast %68 : vector<1x3x16xbf16> to vector<3x16xbf16>
    %70 = arith.truncf %67 : vector<16x3xf32> to vector<16x3xbf16>
    %cst_44 = arith.constant dense<0.000000e+00> : vector<16x16xf32>
    %71 = tpu.matmul %70, %69, %cst_44 {dimension_numbers = #tpu.dot_dimension_numbers<[1], [0], [0], [1], [0, 0, 1, 1], [], []>} : vector<16x3xbf16>, vector<3x16xbf16>, vector<16x16xf32> -> vector<16x16xf32>
    %72 = arith.addf %63, %71 : vector<16x16xf32>
    %c2_i32_45 = arith.constant 2 : i32
    %73 = arith.addi %arg0, %c2_i32_45 : i32
    %74 = arith.index_cast %73 : i32 to index
    %c2_46 = arith.constant 2 : index
    %c0_47 = arith.constant 0 : index
    %75 = vector.load %arg1[%74, %c2_46, %c0_47] : memref<18x18x3xf32, #tpu.memory_space<vmem>>, vector<1x16x3xf32>
    %76 = vector.shape_cast %75 : vector<1x16x3xf32> to vector<16x3xf32>
    %c8 = arith.constant 8 : index
    %c0_48 = arith.constant 0 : index
    %c0_49 = arith.constant 0 : index
    %77 = vector.load %arg2[%c8, %c0_48, %c0_49] : memref<9x3x16xbf16, #tpu.memory_space<vmem>>, vector<1x3x16xbf16>
    %78 = vector.shape_cast %77 : vector<1x3x16xbf16> to vector<3x16xbf16>
    %79 = arith.truncf %76 : vector<16x3xf32> to vector<16x3xbf16>
    %cst_50 = arith.constant dense<0.000000e+00> : vector<16x16xf32>
    %80 = tpu.matmul %79, %78, %cst_50 {dimension_numbers = #tpu.dot_dimension_numbers<[1], [0], [0], [1], [0, 0, 1, 1], [], []>} : vector<16x3xbf16>, vector<3x16xbf16>, vector<16x16xf32> -> vector<16x16xf32>
    %81 = arith.addf %72, %80 : vector<16x16xf32>
    %c0_51 = arith.constant 0 : index
    %c0_52 = arith.constant 0 : index
    %82 = vector.load %arg3[%c0_51, %c0_52] : memref<1x16xf32, #tpu.memory_space<vmem>>, vector<1x16xf32>
    %83 = vector.broadcast %82 : vector<1x16xf32> to vector<16x16xf32>
    %84 = arith.addf %81, %83 : vector<16x16xf32>
    %cst_53 = arith.constant 0.000000e+00 : f32
    %85 = vector.broadcast %cst_53 : f32 to vector<16x16xf32>
    %86 = arith.maximumf %84, %85 : vector<16x16xf32>
    %c0_54 = arith.constant 0 : index
    %c0_55 = arith.constant 0 : index
    %c0_56 = arith.constant 0 : index
    %87 = vector.load %arg4[%c0_54, %c0_55, %c0_56] : memref<1x16x16xf32, #tpu.memory_space<vmem>>, vector<1x16x16xf32>
    %88 = vector.shape_cast %87 : vector<1x16x16xf32> to vector<16x16xf32>
    %89 = vector.shape_cast %86 : vector<16x16xf32> to vector<1x16x16xf32>
    tpu.vector_store %arg4[%c0_54, %c0_55, %c0_56], %89 {strides = array<i32>} : memref<1x16x16xf32, #tpu.memory_space<vmem>>, vector<1x16x16xf32>,
    return
  }
  func.func @transform_0(%arg0: i32) -> (i32, i32, i32) {
    %c0_i32 = arith.constant 0 : i32
    %c0_i32_0 = arith.constant 0 : i32
    %c0_i32_1 = arith.constant 0 : i32
    %c0_i32_2 = arith.constant 0 : i32
    return %c0_i32, %c0_i32_0, %c0_i32_1 : i32, i32, i32
  }
  func.func @transform_1(%arg0: i32) -> (i32, i32, i32) {
    %c0_i32 = arith.constant 0 : i32
    %c0_i32_0 = arith.constant 0 : i32
    %c0_i32_1 = arith.constant 0 : i32
    %c0_i32_2 = arith.constant 0 : i32
    return %c0_i32, %c0_i32_0, %c0_i32_1 : i32, i32, i32
  }
  func.func @transform_2(%arg0: i32) -> (i32, i32) {
    %c0_i32 = arith.constant 0 : i32
    %c0_i32_0 = arith.constant 0 : i32
    %c0_i32_1 = arith.constant 0 : i32
    return %c0_i32, %c0_i32_0 : i32, i32
  }
  func.func @transform_3(%arg0: i32) -> (i32, i32, i32) {
    %c0_i32 = arith.constant 0 : i32
    %c0_i32_0 = arith.constant 0 : i32
    %c0_i32_1 = arith.constant 0 : i32
    return %arg0, %c0_i32, %c0_i32_0 : i32, i32, i32
  }
}

module attributes {stable_mosaic.version = 11 : i64} {
  func.func @_conv3x3_relu_kernel(%arg0: i32, %arg1: memref<10x10x16xf32, #tpu.memory_space<vmem>>, %arg2: memref<9x16x32xbf16, #tpu.memory_space<vmem>>, %arg3: memref<1x32xf32, #tpu.memory_space<vmem>>, %arg4: memref<1x8x32xf32, #tpu.memory_space<vmem>>) attributes {dimension_semantics = [#tpu.dimension_semantics<parallel>], iteration_bounds = array<i64: 8>, scalar_prefetch = 0 : i64, scratch_operands = 0 : i64, tpu.core_type = #tpu.core_type<tc>, window_params = [{pipeline_mode = #tpu.pipeline_mode<synchronous>, transform_indices = @transform_0, window_bounds = array<i64: 10, 10, 16>}, {pipeline_mode = #tpu.pipeline_mode<synchronous>, transform_indices = @transform_1, window_bounds = array<i64: 9, 16, 32>}, {pipeline_mode = #tpu.pipeline_mode<synchronous>, transform_indices = @transform_2, window_bounds = array<i64: 1, 32>}, {transform_indices = @transform_3, window_bounds = array<i64: 1, 8, 32>}]} {
    %cst = arith.constant 0.000000e+00 : f32
    %0 = vector.broadcast %cst : f32 to vector<8x32xf32>
    %c0_i32 = arith.constant 0 : i32
    %1 = arith.addi %arg0, %c0_i32 : i32
    %2 = arith.index_cast %1 : i32 to index
    %c0 = arith.constant 0 : index
    %c0_0 = arith.constant 0 : index
    %3 = vector.load %arg1[%2, %c0, %c0_0] : memref<10x10x16xf32, #tpu.memory_space<vmem>>, vector<1x8x16xf32>
    %4 = vector.shape_cast %3 : vector<1x8x16xf32> to vector<8x16xf32>
    %c0_1 = arith.constant 0 : index
    %c0_2 = arith.constant 0 : index
    %c0_3 = arith.constant 0 : index
    %5 = vector.load %arg2[%c0_1, %c0_2, %c0_3] : memref<9x16x32xbf16, #tpu.memory_space<vmem>>, vector<1x16x32xbf16>
    %6 = vector.shape_cast %5 : vector<1x16x32xbf16> to vector<16x32xbf16>
    %7 = arith.truncf %4 : vector<8x16xf32> to vector<8x16xbf16>
    %cst_4 = arith.constant dense<0.000000e+00> : vector<8x32xf32>
    %8 = tpu.matmul %7, %6, %cst_4 {dimension_numbers = #tpu.dot_dimension_numbers<[1], [0], [0], [1], [0, 0, 1, 1], [], []>} : vector<8x16xbf16>, vector<16x32xbf16>, vector<8x32xf32> -> vector<8x32xf32>
    %9 = arith.addf %0, %8 : vector<8x32xf32>
    %c0_i32_5 = arith.constant 0 : i32
    %10 = arith.addi %arg0, %c0_i32_5 : i32
    %11 = arith.index_cast %10 : i32 to index
    %c1 = arith.constant 1 : index
    %c0_6 = arith.constant 0 : index
    %12 = vector.load %arg1[%11, %c1, %c0_6] : memref<10x10x16xf32, #tpu.memory_space<vmem>>, vector<1x8x16xf32>
    %13 = vector.shape_cast %12 : vector<1x8x16xf32> to vector<8x16xf32>
    %c1_7 = arith.constant 1 : index
    %c0_8 = arith.constant 0 : index
    %c0_9 = arith.constant 0 : index
    %14 = vector.load %arg2[%c1_7, %c0_8, %c0_9] : memref<9x16x32xbf16, #tpu.memory_space<vmem>>, vector<1x16x32xbf16>
    %15 = vector.shape_cast %14 : vector<1x16x32xbf16> to vector<16x32xbf16>
    %16 = arith.truncf %13 : vector<8x16xf32> to vector<8x16xbf16>
    %cst_10 = arith.constant dense<0.000000e+00> : vector<8x32xf32>
    %17 = tpu.matmul %16, %15, %cst_10 {dimension_numbers = #tpu.dot_dimension_numbers<[1], [0], [0], [1], [0, 0, 1, 1], [], []>} : vector<8x16xbf16>, vector<16x32xbf16>, vector<8x32xf32> -> vector<8x32xf32>
    %18 = arith.addf %9, %17 : vector<8x32xf32>
    %c0_i32_11 = arith.constant 0 : i32
    %19 = arith.addi %arg0, %c0_i32_11 : i32
    %20 = arith.index_cast %19 : i32 to index
    %c2 = arith.constant 2 : index
    %c0_12 = arith.constant 0 : index
    %21 = vector.load %arg1[%20, %c2, %c0_12] : memref<10x10x16xf32, #tpu.memory_space<vmem>>, vector<1x8x16xf32>
    %22 = vector.shape_cast %21 : vector<1x8x16xf32> to vector<8x16xf32>
    %c2_13 = arith.constant 2 : index
    %c0_14 = arith.constant 0 : index
    %c0_15 = arith.constant 0 : index
    %23 = vector.load %arg2[%c2_13, %c0_14, %c0_15] : memref<9x16x32xbf16, #tpu.memory_space<vmem>>, vector<1x16x32xbf16>
    %24 = vector.shape_cast %23 : vector<1x16x32xbf16> to vector<16x32xbf16>
    %25 = arith.truncf %22 : vector<8x16xf32> to vector<8x16xbf16>
    %cst_16 = arith.constant dense<0.000000e+00> : vector<8x32xf32>
    %26 = tpu.matmul %25, %24, %cst_16 {dimension_numbers = #tpu.dot_dimension_numbers<[1], [0], [0], [1], [0, 0, 1, 1], [], []>} : vector<8x16xbf16>, vector<16x32xbf16>, vector<8x32xf32> -> vector<8x32xf32>
    %27 = arith.addf %18, %26 : vector<8x32xf32>
    %c1_i32 = arith.constant 1 : i32
    %28 = arith.addi %arg0, %c1_i32 : i32
    %29 = arith.index_cast %28 : i32 to index
    %c0_17 = arith.constant 0 : index
    %c0_18 = arith.constant 0 : index
    %30 = vector.load %arg1[%29, %c0_17, %c0_18] : memref<10x10x16xf32, #tpu.memory_space<vmem>>, vector<1x8x16xf32>
    %31 = vector.shape_cast %30 : vector<1x8x16xf32> to vector<8x16xf32>
    %c3 = arith.constant 3 : index
    %c0_19 = arith.constant 0 : index
    %c0_20 = arith.constant 0 : index
    %32 = vector.load %arg2[%c3, %c0_19, %c0_20] : memref<9x16x32xbf16, #tpu.memory_space<vmem>>, vector<1x16x32xbf16>
    %33 = vector.shape_cast %32 : vector<1x16x32xbf16> to vector<16x32xbf16>
    %34 = arith.truncf %31 : vector<8x16xf32> to vector<8x16xbf16>
    %cst_21 = arith.constant dense<0.000000e+00> : vector<8x32xf32>
    %35 = tpu.matmul %34, %33, %cst_21 {dimension_numbers = #tpu.dot_dimension_numbers<[1], [0], [0], [1], [0, 0, 1, 1], [], []>} : vector<8x16xbf16>, vector<16x32xbf16>, vector<8x32xf32> -> vector<8x32xf32>
    %36 = arith.addf %27, %35 : vector<8x32xf32>
    %c1_i32_22 = arith.constant 1 : i32
    %37 = arith.addi %arg0, %c1_i32_22 : i32
    %38 = arith.index_cast %37 : i32 to index
    %c1_23 = arith.constant 1 : index
    %c0_24 = arith.constant 0 : index
    %39 = vector.load %arg1[%38, %c1_23, %c0_24] : memref<10x10x16xf32, #tpu.memory_space<vmem>>, vector<1x8x16xf32>
    %40 = vector.shape_cast %39 : vector<1x8x16xf32> to vector<8x16xf32>
    %c4 = arith.constant 4 : index
    %c0_25 = arith.constant 0 : index
    %c0_26 = arith.constant 0 : index
    %41 = vector.load %arg2[%c4, %c0_25, %c0_26] : memref<9x16x32xbf16, #tpu.memory_space<vmem>>, vector<1x16x32xbf16>
    %42 = vector.shape_cast %41 : vector<1x16x32xbf16> to vector<16x32xbf16>
    %43 = arith.truncf %40 : vector<8x16xf32> to vector<8x16xbf16>
    %cst_27 = arith.constant dense<0.000000e+00> : vector<8x32xf32>
    %44 = tpu.matmul %43, %42, %cst_27 {dimension_numbers = #tpu.dot_dimension_numbers<[1], [0], [0], [1], [0, 0, 1, 1], [], []>} : vector<8x16xbf16>, vector<16x32xbf16>, vector<8x32xf32> -> vector<8x32xf32>
    %45 = arith.addf %36, %44 : vector<8x32xf32>
    %c1_i32_28 = arith.constant 1 : i32
    %46 = arith.addi %arg0, %c1_i32_28 : i32
    %47 = arith.index_cast %46 : i32 to index
    %c2_29 = arith.constant 2 : index
    %c0_30 = arith.constant 0 : index
    %48 = vector.load %arg1[%47, %c2_29, %c0_30] : memref<10x10x16xf32, #tpu.memory_space<vmem>>, vector<1x8x16xf32>
    %49 = vector.shape_cast %48 : vector<1x8x16xf32> to vector<8x16xf32>
    %c5 = arith.constant 5 : index
    %c0_31 = arith.constant 0 : index
    %c0_32 = arith.constant 0 : index
    %50 = vector.load %arg2[%c5, %c0_31, %c0_32] : memref<9x16x32xbf16, #tpu.memory_space<vmem>>, vector<1x16x32xbf16>
    %51 = vector.shape_cast %50 : vector<1x16x32xbf16> to vector<16x32xbf16>
    %52 = arith.truncf %49 : vector<8x16xf32> to vector<8x16xbf16>
    %cst_33 = arith.constant dense<0.000000e+00> : vector<8x32xf32>
    %53 = tpu.matmul %52, %51, %cst_33 {dimension_numbers = #tpu.dot_dimension_numbers<[1], [0], [0], [1], [0, 0, 1, 1], [], []>} : vector<8x16xbf16>, vector<16x32xbf16>, vector<8x32xf32> -> vector<8x32xf32>
    %54 = arith.addf %45, %53 : vector<8x32xf32>
    %c2_i32 = arith.constant 2 : i32
    %55 = arith.addi %arg0, %c2_i32 : i32
    %56 = arith.index_cast %55 : i32 to index
    %c0_34 = arith.constant 0 : index
    %c0_35 = arith.constant 0 : index
    %57 = vector.load %arg1[%56, %c0_34, %c0_35] : memref<10x10x16xf32, #tpu.memory_space<vmem>>, vector<1x8x16xf32>
    %58 = vector.shape_cast %57 : vector<1x8x16xf32> to vector<8x16xf32>
    %c6 = arith.constant 6 : index
    %c0_36 = arith.constant 0 : index
    %c0_37 = arith.constant 0 : index
    %59 = vector.load %arg2[%c6, %c0_36, %c0_37] : memref<9x16x32xbf16, #tpu.memory_space<vmem>>, vector<1x16x32xbf16>
    %60 = vector.shape_cast %59 : vector<1x16x32xbf16> to vector<16x32xbf16>
    %61 = arith.truncf %58 : vector<8x16xf32> to vector<8x16xbf16>
    %cst_38 = arith.constant dense<0.000000e+00> : vector<8x32xf32>
    %62 = tpu.matmul %61, %60, %cst_38 {dimension_numbers = #tpu.dot_dimension_numbers<[1], [0], [0], [1], [0, 0, 1, 1], [], []>} : vector<8x16xbf16>, vector<16x32xbf16>, vector<8x32xf32> -> vector<8x32xf32>
    %63 = arith.addf %54, %62 : vector<8x32xf32>
    %c2_i32_39 = arith.constant 2 : i32
    %64 = arith.addi %arg0, %c2_i32_39 : i32
    %65 = arith.index_cast %64 : i32 to index
    %c1_40 = arith.constant 1 : index
    %c0_41 = arith.constant 0 : index
    %66 = vector.load %arg1[%65, %c1_40, %c0_41] : memref<10x10x16xf32, #tpu.memory_space<vmem>>, vector<1x8x16xf32>
    %67 = vector.shape_cast %66 : vector<1x8x16xf32> to vector<8x16xf32>
    %c7 = arith.constant 7 : index
    %c0_42 = arith.constant 0 : index
    %c0_43 = arith.constant 0 : index
    %68 = vector.load %arg2[%c7, %c0_42, %c0_43] : memref<9x16x32xbf16, #tpu.memory_space<vmem>>, vector<1x16x32xbf16>
    %69 = vector.shape_cast %68 : vector<1x16x32xbf16> to vector<16x32xbf16>
    %70 = arith.truncf %67 : vector<8x16xf32> to vector<8x16xbf16>
    %cst_44 = arith.constant dense<0.000000e+00> : vector<8x32xf32>
    %71 = tpu.matmul %70, %69, %cst_44 {dimension_numbers = #tpu.dot_dimension_numbers<[1], [0], [0], [1], [0, 0, 1, 1], [], []>} : vector<8x16xbf16>, vector<16x32xbf16>, vector<8x32xf32> -> vector<8x32xf32>
    %72 = arith.addf %63, %71 : vector<8x32xf32>
    %c2_i32_45 = arith.constant 2 : i32
    %73 = arith.addi %arg0, %c2_i32_45 : i32
    %74 = arith.index_cast %73 : i32 to index
    %c2_46 = arith.constant 2 : index
    %c0_47 = arith.constant 0 : index
    %75 = vector.load %arg1[%74, %c2_46, %c0_47] : memref<10x10x16xf32, #tpu.memory_space<vmem>>, vector<1x8x16xf32>
    %76 = vector.shape_cast %75 : vector<1x8x16xf32> to vector<8x16xf32>
    %c8 = arith.constant 8 : index
    %c0_48 = arith.constant 0 : index
    %c0_49 = arith.constant 0 : index
    %77 = vector.load %arg2[%c8, %c0_48, %c0_49] : memref<9x16x32xbf16, #tpu.memory_space<vmem>>, vector<1x16x32xbf16>
    %78 = vector.shape_cast %77 : vector<1x16x32xbf16> to vector<16x32xbf16>
    %79 = arith.truncf %76 : vector<8x16xf32> to vector<8x16xbf16>
    %cst_50 = arith.constant dense<0.000000e+00> : vector<8x32xf32>
    %80 = tpu.matmul %79, %78, %cst_50 {dimension_numbers = #tpu.dot_dimension_numbers<[1], [0], [0], [1], [0, 0, 1, 1], [], []>} : vector<8x16xbf16>, vector<16x32xbf16>, vector<8x32xf32> -> vector<8x32xf32>
    %81 = arith.addf %72, %80 : vector<8x32xf32>
    %c0_51 = arith.constant 0 : index
    %c0_52 = arith.constant 0 : index
    %82 = vector.load %arg3[%c0_51, %c0_52] : memref<1x32xf32, #tpu.memory_space<vmem>>, vector<1x32xf32>
    %83 = vector.broadcast %82 : vector<1x32xf32> to vector<8x32xf32>
    %84 = arith.addf %81, %83 : vector<8x32xf32>
    %cst_53 = arith.constant 0.000000e+00 : f32
    %85 = vector.broadcast %cst_53 : f32 to vector<8x32xf32>
    %86 = arith.maximumf %84, %85 : vector<8x32xf32>
    %c0_54 = arith.constant 0 : index
    %c0_55 = arith.constant 0 : index
    %c0_56 = arith.constant 0 : index
    %87 = vector.load %arg4[%c0_54, %c0_55, %c0_56] : memref<1x8x32xf32, #tpu.memory_space<vmem>>, vector<1x8x32xf32>
    %88 = vector.shape_cast %87 : vector<1x8x32xf32> to vector<8x32xf32>
    %89 = vector.shape_cast %86 : vector<8x32xf32> to vector<1x8x32xf32>
    tpu.vector_store %arg4[%c0_54, %c0_55, %c0_56], %89 {strides = array<i32>} : memref<1x8x32xf32, #tpu.memory_space<vmem>>, vector<1x8x32xf32>,
    return
  }
  func.func @transform_0(%arg0: i32) -> (i32, i32, i32) {
    %c0_i32 = arith.constant 0 : i32
    %c0_i32_0 = arith.constant 0 : i32
    %c0_i32_1 = arith.constant 0 : i32
    %c0_i32_2 = arith.constant 0 : i32
    return %c0_i32, %c0_i32_0, %c0_i32_1 : i32, i32, i32
  }
  func.func @transform_1(%arg0: i32) -> (i32, i32, i32) {
    %c0_i32 = arith.constant 0 : i32
    %c0_i32_0 = arith.constant 0 : i32
    %c0_i32_1 = arith.constant 0 : i32
    %c0_i32_2 = arith.constant 0 : i32
    return %c0_i32, %c0_i32_0, %c0_i32_1 : i32, i32, i32
  }
  func.func @transform_2(%arg0: i32) -> (i32, i32) {
    %c0_i32 = arith.constant 0 : i32
    %c0_i32_0 = arith.constant 0 : i32
    %c0_i32_1 = arith.constant 0 : i32
    return %c0_i32, %c0_i32_0 : i32, i32
  }
  func.func @transform_3(%arg0: i32) -> (i32, i32, i32) {
    %c0_i32 = arith.constant 0 : i32
    %c0_i32_0 = arith.constant 0 : i32
    %c0_i32_1 = arith.constant 0 : i32
    return %arg0, %c0_i32, %c0_i32_0 : i32, i32, i32
  }
}

module attributes {stable_mosaic.version = 11 : i64} {
  func.func @_roi_max_pool_kernel(%arg0: i32, %arg1: memref<448xi32, #tpu.memory_space<smem>>, %arg2: memref<8x8x32xf32, #tpu.memory_space<vmem>>, %arg3: memref<1x16x32xf32, #tpu.memory_space<vmem>>) attributes {dimension_semantics = [#tpu.dimension_semantics<arbitrary>], iteration_bounds = array<i64: 7>, scalar_prefetch = 1 : i64, scratch_operands = 0 : i64, tpu.core_type = #tpu.core_type<tc>, window_params = [{pipeline_mode = #tpu.pipeline_mode<synchronous>, transform_indices = @transform_0, window_bounds = array<i64: 8, 8, 32>}, {transform_indices = @transform_1, window_bounds = array<i64: 1, 16, 32>}]} {
    %c0 = arith.constant 0 : index
    %c0_0 = arith.constant 0 : index
    %c0_1 = arith.constant 0 : index
    %0 = vector.load %arg2[%c0, %c0_0, %c0_1] : memref<8x8x32xf32, #tpu.memory_space<vmem>>, vector<8x8x32xf32>
    %1 = tpu.iota {dimensions = array<i32: 0>} : vector<8x8x32xi32>
    %2 = tpu.iota {dimensions = array<i32: 1>} : vector<8x8x32xi32>
    %c64_i32 = arith.constant 64 : i32
    %3 = arith.muli %arg0, %c64_i32 : i32
    %c0_i32 = arith.constant 0 : i32
    %4 = arith.addi %3, %c0_i32 : i32
    %c0_i32_2 = arith.constant 0 : i32
    %5 = arith.addi %4, %c0_i32_2 : i32
    %6 = arith.index_cast %5 : i32 to index
    %7 = memref.load %arg1[%6] : memref<448xi32, #tpu.memory_space<smem>>
    %c0_i32_3 = arith.constant 0 : i32
    %8 = arith.addi %3, %c0_i32_3 : i32
    %c1_i32 = arith.constant 1 : i32
    %9 = arith.addi %8, %c1_i32 : i32
    %10 = arith.index_cast %9 : i32 to index
    %11 = memref.load %arg1[%10] : memref<448xi32, #tpu.memory_space<smem>>
    %c0_i32_4 = arith.constant 0 : i32
    %12 = arith.addi %3, %c0_i32_4 : i32
    %c2_i32 = arith.constant 2 : i32
    %13 = arith.addi %12, %c2_i32 : i32
    %14 = arith.index_cast %13 : i32 to index
    %15 = memref.load %arg1[%14] : memref<448xi32, #tpu.memory_space<smem>>
    %c0_i32_5 = arith.constant 0 : i32
    %16 = arith.addi %3, %c0_i32_5 : i32
    %c3_i32 = arith.constant 3 : i32
    %17 = arith.addi %16, %c3_i32 : i32
    %18 = arith.index_cast %17 : i32 to index
    %19 = memref.load %arg1[%18] : memref<448xi32, #tpu.memory_space<smem>>
    %20 = vector.broadcast %7 : i32 to vector<8x8x32xi32>
    %21 = arith.cmpi sge, %1, %20 : vector<8x8x32xi32>
    %22 = vector.broadcast %11 : i32 to vector<8x8x32xi32>
    %23 = arith.cmpi slt, %1, %22 : vector<8x8x32xi32>
    %24 = arith.andi %21, %23 : vector<8x8x32xi1>
    %25 = vector.broadcast %15 : i32 to vector<8x8x32xi32>
    %26 = arith.cmpi sge, %2, %25 : vector<8x8x32xi32>
    %27 = arith.andi %24, %26 : vector<8x8x32xi1>
    %28 = vector.broadcast %19 : i32 to vector<8x8x32xi32>
    %29 = arith.cmpi slt, %2, %28 : vector<8x8x32xi32>
    %30 = arith.andi %27, %29 : vector<8x8x32xi1>
    %cst = arith.constant -1.000000e+30 : f32
    %31 = vector.broadcast %cst : f32 to vector<8x8x32xf32>
    %32 = arith.select %30, %0, %31 : vector<8x8x32xi1>, vector<8x8x32xf32>
    %cst_6 = arith.constant dense<0xFF800000> : vector<8x32xf32>
    %33 = vector.multi_reduction <maximumf>, %32, %cst_6 [0] : vector<8x8x32xf32> to vector<8x32xf32>
    %cst_7 = arith.constant dense<0xFF800000> : vector<32xf32>
    %34 = vector.multi_reduction <maximumf>, %33, %cst_7 [0] : vector<8x32xf32> to vector<32xf32>
    %35 = vector.shape_cast %34 : vector<32xf32> to vector<1x32xf32>
    %36 = arith.cmpi sgt, %11, %7 : i32
    %37 = arith.cmpi sgt, %19, %15 : i32
    %38 = arith.andi %36, %37 : i1
    %39 = arith.extui %38 : i1 to i32
    %40 = arith.sitofp %39 : i32 to f32
    %41 = vector.broadcast %40 : f32 to vector<1x32xf32>
    %42 = arith.mulf %35, %41 : vector<1x32xf32>
    %c4_i32 = arith.constant 4 : i32
    %43 = arith.addi %3, %c4_i32 : i32
    %c0_i32_8 = arith.constant 0 : i32
    %44 = arith.addi %43, %c0_i32_8 : i32
    %45 = arith.index_cast %44 : i32 to index
    %46 = memref.load %arg1[%45] : memref<448xi32, #tpu.memory_space<smem>>
    %c4_i32_9 = arith.constant 4 : i32
    %47 = arith.addi %3, %c4_i32_9 : i32
    %c1_i32_10 = arith.constant 1 : i32
    %48 = arith.addi %47, %c1_i32_10 : i32
    %49 = arith.index_cast %48 : i32 to index
    %50 = memref.load %arg1[%49] : memref<448xi32, #tpu.memory_space<smem>>
    %c4_i32_11 = arith.constant 4 : i32
    %51 = arith.addi %3, %c4_i32_11 : i32
    %c2_i32_12 = arith.constant 2 : i32
    %52 = arith.addi %51, %c2_i32_12 : i32
    %53 = arith.index_cast %52 : i32 to index
    %54 = memref.load %arg1[%53] : memref<448xi32, #tpu.memory_space<smem>>
    %c4_i32_13 = arith.constant 4 : i32
    %55 = arith.addi %3, %c4_i32_13 : i32
    %c3_i32_14 = arith.constant 3 : i32
    %56 = arith.addi %55, %c3_i32_14 : i32
    %57 = arith.index_cast %56 : i32 to index
    %58 = memref.load %arg1[%57] : memref<448xi32, #tpu.memory_space<smem>>
    %59 = vector.broadcast %46 : i32 to vector<8x8x32xi32>
    %60 = arith.cmpi sge, %1, %59 : vector<8x8x32xi32>
    %61 = vector.broadcast %50 : i32 to vector<8x8x32xi32>
    %62 = arith.cmpi slt, %1, %61 : vector<8x8x32xi32>
    %63 = arith.andi %60, %62 : vector<8x8x32xi1>
    %64 = vector.broadcast %54 : i32 to vector<8x8x32xi32>
    %65 = arith.cmpi sge, %2, %64 : vector<8x8x32xi32>
    %66 = arith.andi %63, %65 : vector<8x8x32xi1>
    %67 = vector.broadcast %58 : i32 to vector<8x8x32xi32>
    %68 = arith.cmpi slt, %2, %67 : vector<8x8x32xi32>
    %69 = arith.andi %66, %68 : vector<8x8x32xi1>
    %cst_15 = arith.constant -1.000000e+30 : f32
    %70 = vector.broadcast %cst_15 : f32 to vector<8x8x32xf32>
    %71 = arith.select %69, %0, %70 : vector<8x8x32xi1>, vector<8x8x32xf32>
    %cst_16 = arith.constant dense<0xFF800000> : vector<8x32xf32>
    %72 = vector.multi_reduction <maximumf>, %71, %cst_16 [0] : vector<8x8x32xf32> to vector<8x32xf32>
    %cst_17 = arith.constant dense<0xFF800000> : vector<32xf32>
    %73 = vector.multi_reduction <maximumf>, %72, %cst_17 [0] : vector<8x32xf32> to vector<32xf32>
    %74 = vector.shape_cast %73 : vector<32xf32> to vector<1x32xf32>
    %75 = arith.cmpi sgt, %50, %46 : i32
    %76 = arith.cmpi sgt, %58, %54 : i32
    %77 = arith.andi %75, %76 : i1
    %78 = arith.extui %77 : i1 to i32
    %79 = arith.sitofp %78 : i32 to f32
    %80 = vector.broadcast %79 : f32 to vector<1x32xf32>
    %81 = arith.mulf %74, %80 : vector<1x32xf32>
    %c8_i32 = arith.constant 8 : i32
    %82 = arith.addi %3, %c8_i32 : i32
    %c0_i32_18 = arith.constant 0 : i32
    %83 = arith.addi %82, %c0_i32_18 : i32
    %84 = arith.index_cast %83 : i32 to index
    %85 = memref.load %arg1[%84] : memref<448xi32, #tpu.memory_space<smem>>
    %c8_i32_19 = arith.constant 8 : i32
    %86 = arith.addi %3, %c8_i32_19 : i32
    %c1_i32_20 = arith.constant 1 : i32
    %87 = arith.addi %86, %c1_i32_20 : i32
    %88 = arith.index_cast %87 : i32 to index
    %89 = memref.load %arg1[%88] : memref<448xi32, #tpu.memory_space<smem>>
    %c8_i32_21 = arith.constant 8 : i32
    %90 = arith.addi %3, %c8_i32_21 : i32
    %c2_i32_22 = arith.constant 2 : i32
    %91 = arith.addi %90, %c2_i32_22 : i32
    %92 = arith.index_cast %91 : i32 to index
    %93 = memref.load %arg1[%92] : memref<448xi32, #tpu.memory_space<smem>>
    %c8_i32_23 = arith.constant 8 : i32
    %94 = arith.addi %3, %c8_i32_23 : i32
    %c3_i32_24 = arith.constant 3 : i32
    %95 = arith.addi %94, %c3_i32_24 : i32
    %96 = arith.index_cast %95 : i32 to index
    %97 = memref.load %arg1[%96] : memref<448xi32, #tpu.memory_space<smem>>
    %98 = vector.broadcast %85 : i32 to vector<8x8x32xi32>
    %99 = arith.cmpi sge, %1, %98 : vector<8x8x32xi32>
    %100 = vector.broadcast %89 : i32 to vector<8x8x32xi32>
    %101 = arith.cmpi slt, %1, %100 : vector<8x8x32xi32>
    %102 = arith.andi %99, %101 : vector<8x8x32xi1>
    %103 = vector.broadcast %93 : i32 to vector<8x8x32xi32>
    %104 = arith.cmpi sge, %2, %103 : vector<8x8x32xi32>
    %105 = arith.andi %102, %104 : vector<8x8x32xi1>
    %106 = vector.broadcast %97 : i32 to vector<8x8x32xi32>
    %107 = arith.cmpi slt, %2, %106 : vector<8x8x32xi32>
    %108 = arith.andi %105, %107 : vector<8x8x32xi1>
    %cst_25 = arith.constant -1.000000e+30 : f32
    %109 = vector.broadcast %cst_25 : f32 to vector<8x8x32xf32>
    %110 = arith.select %108, %0, %109 : vector<8x8x32xi1>, vector<8x8x32xf32>
    %cst_26 = arith.constant dense<0xFF800000> : vector<8x32xf32>
    %111 = vector.multi_reduction <maximumf>, %110, %cst_26 [0] : vector<8x8x32xf32> to vector<8x32xf32>
    %cst_27 = arith.constant dense<0xFF800000> : vector<32xf32>
    %112 = vector.multi_reduction <maximumf>, %111, %cst_27 [0] : vector<8x32xf32> to vector<32xf32>
    %113 = vector.shape_cast %112 : vector<32xf32> to vector<1x32xf32>
    %114 = arith.cmpi sgt, %89, %85 : i32
    %115 = arith.cmpi sgt, %97, %93 : i32
    %116 = arith.andi %114, %115 : i1
    %117 = arith.extui %116 : i1 to i32
    %118 = arith.sitofp %117 : i32 to f32
    %119 = vector.broadcast %118 : f32 to vector<1x32xf32>
    %120 = arith.mulf %113, %119 : vector<1x32xf32>
    %c12_i32 = arith.constant 12 : i32
    %121 = arith.addi %3, %c12_i32 : i32
    %c0_i32_28 = arith.constant 0 : i32
    %122 = arith.addi %121, %c0_i32_28 : i32
    %123 = arith.index_cast %122 : i32 to index
    %124 = memref.load %arg1[%123] : memref<448xi32, #tpu.memory_space<smem>>
    %c12_i32_29 = arith.constant 12 : i32
    %125 = arith.addi %3, %c12_i32_29 : i32
    %c1_i32_30 = arith.constant 1 : i32
    %126 = arith.addi %125, %c1_i32_30 : i32
    %127 = arith.index_cast %126 : i32 to index
    %128 = memref.load %arg1[%127] : memref<448xi32, #tpu.memory_space<smem>>
    %c12_i32_31 = arith.constant 12 : i32
    %129 = arith.addi %3, %c12_i32_31 : i32
    %c2_i32_32 = arith.constant 2 : i32
    %130 = arith.addi %129, %c2_i32_32 : i32
    %131 = arith.index_cast %130 : i32 to index
    %132 = memref.load %arg1[%131] : memref<448xi32, #tpu.memory_space<smem>>
    %c12_i32_33 = arith.constant 12 : i32
    %133 = arith.addi %3, %c12_i32_33 : i32
    %c3_i32_34 = arith.constant 3 : i32
    %134 = arith.addi %133, %c3_i32_34 : i32
    %135 = arith.index_cast %134 : i32 to index
    %136 = memref.load %arg1[%135] : memref<448xi32, #tpu.memory_space<smem>>
    %137 = vector.broadcast %124 : i32 to vector<8x8x32xi32>
    %138 = arith.cmpi sge, %1, %137 : vector<8x8x32xi32>
    %139 = vector.broadcast %128 : i32 to vector<8x8x32xi32>
    %140 = arith.cmpi slt, %1, %139 : vector<8x8x32xi32>
    %141 = arith.andi %138, %140 : vector<8x8x32xi1>
    %142 = vector.broadcast %132 : i32 to vector<8x8x32xi32>
    %143 = arith.cmpi sge, %2, %142 : vector<8x8x32xi32>
    %144 = arith.andi %141, %143 : vector<8x8x32xi1>
    %145 = vector.broadcast %136 : i32 to vector<8x8x32xi32>
    %146 = arith.cmpi slt, %2, %145 : vector<8x8x32xi32>
    %147 = arith.andi %144, %146 : vector<8x8x32xi1>
    %cst_35 = arith.constant -1.000000e+30 : f32
    %148 = vector.broadcast %cst_35 : f32 to vector<8x8x32xf32>
    %149 = arith.select %147, %0, %148 : vector<8x8x32xi1>, vector<8x8x32xf32>
    %cst_36 = arith.constant dense<0xFF800000> : vector<8x32xf32>
    %150 = vector.multi_reduction <maximumf>, %149, %cst_36 [0] : vector<8x8x32xf32> to vector<8x32xf32>
    %cst_37 = arith.constant dense<0xFF800000> : vector<32xf32>
    %151 = vector.multi_reduction <maximumf>, %150, %cst_37 [0] : vector<8x32xf32> to vector<32xf32>
    %152 = vector.shape_cast %151 : vector<32xf32> to vector<1x32xf32>
    %153 = arith.cmpi sgt, %128, %124 : i32
    %154 = arith.cmpi sgt, %136, %132 : i32
    %155 = arith.andi %153, %154 : i1
    %156 = arith.extui %155 : i1 to i32
    %157 = arith.sitofp %156 : i32 to f32
    %158 = vector.broadcast %157 : f32 to vector<1x32xf32>
    %159 = arith.mulf %152, %158 : vector<1x32xf32>
    %c16_i32 = arith.constant 16 : i32
    %160 = arith.addi %3, %c16_i32 : i32
    %c0_i32_38 = arith.constant 0 : i32
    %161 = arith.addi %160, %c0_i32_38 : i32
    %162 = arith.index_cast %161 : i32 to index
    %163 = memref.load %arg1[%162] : memref<448xi32, #tpu.memory_space<smem>>
    %c16_i32_39 = arith.constant 16 : i32
    %164 = arith.addi %3, %c16_i32_39 : i32
    %c1_i32_40 = arith.constant 1 : i32
    %165 = arith.addi %164, %c1_i32_40 : i32
    %166 = arith.index_cast %165 : i32 to index
    %167 = memref.load %arg1[%166] : memref<448xi32, #tpu.memory_space<smem>>
    %c16_i32_41 = arith.constant 16 : i32
    %168 = arith.addi %3, %c16_i32_41 : i32
    %c2_i32_42 = arith.constant 2 : i32
    %169 = arith.addi %168, %c2_i32_42 : i32
    %170 = arith.index_cast %169 : i32 to index
    %171 = memref.load %arg1[%170] : memref<448xi32, #tpu.memory_space<smem>>
    %c16_i32_43 = arith.constant 16 : i32
    %172 = arith.addi %3, %c16_i32_43 : i32
    %c3_i32_44 = arith.constant 3 : i32
    %173 = arith.addi %172, %c3_i32_44 : i32
    %174 = arith.index_cast %173 : i32 to index
    %175 = memref.load %arg1[%174] : memref<448xi32, #tpu.memory_space<smem>>
    %176 = vector.broadcast %163 : i32 to vector<8x8x32xi32>
    %177 = arith.cmpi sge, %1, %176 : vector<8x8x32xi32>
    %178 = vector.broadcast %167 : i32 to vector<8x8x32xi32>
    %179 = arith.cmpi slt, %1, %178 : vector<8x8x32xi32>
    %180 = arith.andi %177, %179 : vector<8x8x32xi1>
    %181 = vector.broadcast %171 : i32 to vector<8x8x32xi32>
    %182 = arith.cmpi sge, %2, %181 : vector<8x8x32xi32>
    %183 = arith.andi %180, %182 : vector<8x8x32xi1>
    %184 = vector.broadcast %175 : i32 to vector<8x8x32xi32>
    %185 = arith.cmpi slt, %2, %184 : vector<8x8x32xi32>
    %186 = arith.andi %183, %185 : vector<8x8x32xi1>
    %cst_45 = arith.constant -1.000000e+30 : f32
    %187 = vector.broadcast %cst_45 : f32 to vector<8x8x32xf32>
    %188 = arith.select %186, %0, %187 : vector<8x8x32xi1>, vector<8x8x32xf32>
    %cst_46 = arith.constant dense<0xFF800000> : vector<8x32xf32>
    %189 = vector.multi_reduction <maximumf>, %188, %cst_46 [0] : vector<8x8x32xf32> to vector<8x32xf32>
    %cst_47 = arith.constant dense<0xFF800000> : vector<32xf32>
    %190 = vector.multi_reduction <maximumf>, %189, %cst_47 [0] : vector<8x32xf32> to vector<32xf32>
    %191 = vector.shape_cast %190 : vector<32xf32> to vector<1x32xf32>
    %192 = arith.cmpi sgt, %167, %163 : i32
    %193 = arith.cmpi sgt, %175, %171 : i32
    %194 = arith.andi %192, %193 : i1
    %195 = arith.extui %194 : i1 to i32
    %196 = arith.sitofp %195 : i32 to f32
    %197 = vector.broadcast %196 : f32 to vector<1x32xf32>
    %198 = arith.mulf %191, %197 : vector<1x32xf32>
    %c20_i32 = arith.constant 20 : i32
    %199 = arith.addi %3, %c20_i32 : i32
    %c0_i32_48 = arith.constant 0 : i32
    %200 = arith.addi %199, %c0_i32_48 : i32
    %201 = arith.index_cast %200 : i32 to index
    %202 = memref.load %arg1[%201] : memref<448xi32, #tpu.memory_space<smem>>
    %c20_i32_49 = arith.constant 20 : i32
    %203 = arith.addi %3, %c20_i32_49 : i32
    %c1_i32_50 = arith.constant 1 : i32
    %204 = arith.addi %203, %c1_i32_50 : i32
    %205 = arith.index_cast %204 : i32 to index
    %206 = memref.load %arg1[%205] : memref<448xi32, #tpu.memory_space<smem>>
    %c20_i32_51 = arith.constant 20 : i32
    %207 = arith.addi %3, %c20_i32_51 : i32
    %c2_i32_52 = arith.constant 2 : i32
    %208 = arith.addi %207, %c2_i32_52 : i32
    %209 = arith.index_cast %208 : i32 to index
    %210 = memref.load %arg1[%209] : memref<448xi32, #tpu.memory_space<smem>>
    %c20_i32_53 = arith.constant 20 : i32
    %211 = arith.addi %3, %c20_i32_53 : i32
    %c3_i32_54 = arith.constant 3 : i32
    %212 = arith.addi %211, %c3_i32_54 : i32
    %213 = arith.index_cast %212 : i32 to index
    %214 = memref.load %arg1[%213] : memref<448xi32, #tpu.memory_space<smem>>
    %215 = vector.broadcast %202 : i32 to vector<8x8x32xi32>
    %216 = arith.cmpi sge, %1, %215 : vector<8x8x32xi32>
    %217 = vector.broadcast %206 : i32 to vector<8x8x32xi32>
    %218 = arith.cmpi slt, %1, %217 : vector<8x8x32xi32>
    %219 = arith.andi %216, %218 : vector<8x8x32xi1>
    %220 = vector.broadcast %210 : i32 to vector<8x8x32xi32>
    %221 = arith.cmpi sge, %2, %220 : vector<8x8x32xi32>
    %222 = arith.andi %219, %221 : vector<8x8x32xi1>
    %223 = vector.broadcast %214 : i32 to vector<8x8x32xi32>
    %224 = arith.cmpi slt, %2, %223 : vector<8x8x32xi32>
    %225 = arith.andi %222, %224 : vector<8x8x32xi1>
    %cst_55 = arith.constant -1.000000e+30 : f32
    %226 = vector.broadcast %cst_55 : f32 to vector<8x8x32xf32>
    %227 = arith.select %225, %0, %226 : vector<8x8x32xi1>, vector<8x8x32xf32>
    %cst_56 = arith.constant dense<0xFF800000> : vector<8x32xf32>
    %228 = vector.multi_reduction <maximumf>, %227, %cst_56 [0] : vector<8x8x32xf32> to vector<8x32xf32>
    %cst_57 = arith.constant dense<0xFF800000> : vector<32xf32>
    %229 = vector.multi_reduction <maximumf>, %228, %cst_57 [0] : vector<8x32xf32> to vector<32xf32>
    %230 = vector.shape_cast %229 : vector<32xf32> to vector<1x32xf32>
    %231 = arith.cmpi sgt, %206, %202 : i32
    %232 = arith.cmpi sgt, %214, %210 : i32
    %233 = arith.andi %231, %232 : i1
    %234 = arith.extui %233 : i1 to i32
    %235 = arith.sitofp %234 : i32 to f32
    %236 = vector.broadcast %235 : f32 to vector<1x32xf32>
    %237 = arith.mulf %230, %236 : vector<1x32xf32>
    %c24_i32 = arith.constant 24 : i32
    %238 = arith.addi %3, %c24_i32 : i32
    %c0_i32_58 = arith.constant 0 : i32
    %239 = arith.addi %238, %c0_i32_58 : i32
    %240 = arith.index_cast %239 : i32 to index
    %241 = memref.load %arg1[%240] : memref<448xi32, #tpu.memory_space<smem>>
    %c24_i32_59 = arith.constant 24 : i32
    %242 = arith.addi %3, %c24_i32_59 : i32
    %c1_i32_60 = arith.constant 1 : i32
    %243 = arith.addi %242, %c1_i32_60 : i32
    %244 = arith.index_cast %243 : i32 to index
    %245 = memref.load %arg1[%244] : memref<448xi32, #tpu.memory_space<smem>>
    %c24_i32_61 = arith.constant 24 : i32
    %246 = arith.addi %3, %c24_i32_61 : i32
    %c2_i32_62 = arith.constant 2 : i32
    %247 = arith.addi %246, %c2_i32_62 : i32
    %248 = arith.index_cast %247 : i32 to index
    %249 = memref.load %arg1[%248] : memref<448xi32, #tpu.memory_space<smem>>
    %c24_i32_63 = arith.constant 24 : i32
    %250 = arith.addi %3, %c24_i32_63 : i32
    %c3_i32_64 = arith.constant 3 : i32
    %251 = arith.addi %250, %c3_i32_64 : i32
    %252 = arith.index_cast %251 : i32 to index
    %253 = memref.load %arg1[%252] : memref<448xi32, #tpu.memory_space<smem>>
    %254 = vector.broadcast %241 : i32 to vector<8x8x32xi32>
    %255 = arith.cmpi sge, %1, %254 : vector<8x8x32xi32>
    %256 = vector.broadcast %245 : i32 to vector<8x8x32xi32>
    %257 = arith.cmpi slt, %1, %256 : vector<8x8x32xi32>
    %258 = arith.andi %255, %257 : vector<8x8x32xi1>
    %259 = vector.broadcast %249 : i32 to vector<8x8x32xi32>
    %260 = arith.cmpi sge, %2, %259 : vector<8x8x32xi32>
    %261 = arith.andi %258, %260 : vector<8x8x32xi1>
    %262 = vector.broadcast %253 : i32 to vector<8x8x32xi32>
    %263 = arith.cmpi slt, %2, %262 : vector<8x8x32xi32>
    %264 = arith.andi %261, %263 : vector<8x8x32xi1>
    %cst_65 = arith.constant -1.000000e+30 : f32
    %265 = vector.broadcast %cst_65 : f32 to vector<8x8x32xf32>
    %266 = arith.select %264, %0, %265 : vector<8x8x32xi1>, vector<8x8x32xf32>
    %cst_66 = arith.constant dense<0xFF800000> : vector<8x32xf32>
    %267 = vector.multi_reduction <maximumf>, %266, %cst_66 [0] : vector<8x8x32xf32> to vector<8x32xf32>
    %cst_67 = arith.constant dense<0xFF800000> : vector<32xf32>
    %268 = vector.multi_reduction <maximumf>, %267, %cst_67 [0] : vector<8x32xf32> to vector<32xf32>
    %269 = vector.shape_cast %268 : vector<32xf32> to vector<1x32xf32>
    %270 = arith.cmpi sgt, %245, %241 : i32
    %271 = arith.cmpi sgt, %253, %249 : i32
    %272 = arith.andi %270, %271 : i1
    %273 = arith.extui %272 : i1 to i32
    %274 = arith.sitofp %273 : i32 to f32
    %275 = vector.broadcast %274 : f32 to vector<1x32xf32>
    %276 = arith.mulf %269, %275 : vector<1x32xf32>
    %c28_i32 = arith.constant 28 : i32
    %277 = arith.addi %3, %c28_i32 : i32
    %c0_i32_68 = arith.constant 0 : i32
    %278 = arith.addi %277, %c0_i32_68 : i32
    %279 = arith.index_cast %278 : i32 to index
    %280 = memref.load %arg1[%279] : memref<448xi32, #tpu.memory_space<smem>>
    %c28_i32_69 = arith.constant 28 : i32
    %281 = arith.addi %3, %c28_i32_69 : i32
    %c1_i32_70 = arith.constant 1 : i32
    %282 = arith.addi %281, %c1_i32_70 : i32
    %283 = arith.index_cast %282 : i32 to index
    %284 = memref.load %arg1[%283] : memref<448xi32, #tpu.memory_space<smem>>
    %c28_i32_71 = arith.constant 28 : i32
    %285 = arith.addi %3, %c28_i32_71 : i32
    %c2_i32_72 = arith.constant 2 : i32
    %286 = arith.addi %285, %c2_i32_72 : i32
    %287 = arith.index_cast %286 : i32 to index
    %288 = memref.load %arg1[%287] : memref<448xi32, #tpu.memory_space<smem>>
    %c28_i32_73 = arith.constant 28 : i32
    %289 = arith.addi %3, %c28_i32_73 : i32
    %c3_i32_74 = arith.constant 3 : i32
    %290 = arith.addi %289, %c3_i32_74 : i32
    %291 = arith.index_cast %290 : i32 to index
    %292 = memref.load %arg1[%291] : memref<448xi32, #tpu.memory_space<smem>>
    %293 = vector.broadcast %280 : i32 to vector<8x8x32xi32>
    %294 = arith.cmpi sge, %1, %293 : vector<8x8x32xi32>
    %295 = vector.broadcast %284 : i32 to vector<8x8x32xi32>
    %296 = arith.cmpi slt, %1, %295 : vector<8x8x32xi32>
    %297 = arith.andi %294, %296 : vector<8x8x32xi1>
    %298 = vector.broadcast %288 : i32 to vector<8x8x32xi32>
    %299 = arith.cmpi sge, %2, %298 : vector<8x8x32xi32>
    %300 = arith.andi %297, %299 : vector<8x8x32xi1>
    %301 = vector.broadcast %292 : i32 to vector<8x8x32xi32>
    %302 = arith.cmpi slt, %2, %301 : vector<8x8x32xi32>
    %303 = arith.andi %300, %302 : vector<8x8x32xi1>
    %cst_75 = arith.constant -1.000000e+30 : f32
    %304 = vector.broadcast %cst_75 : f32 to vector<8x8x32xf32>
    %305 = arith.select %303, %0, %304 : vector<8x8x32xi1>, vector<8x8x32xf32>
    %cst_76 = arith.constant dense<0xFF800000> : vector<8x32xf32>
    %306 = vector.multi_reduction <maximumf>, %305, %cst_76 [0] : vector<8x8x32xf32> to vector<8x32xf32>
    %cst_77 = arith.constant dense<0xFF800000> : vector<32xf32>
    %307 = vector.multi_reduction <maximumf>, %306, %cst_77 [0] : vector<8x32xf32> to vector<32xf32>
    %308 = vector.shape_cast %307 : vector<32xf32> to vector<1x32xf32>
    %309 = arith.cmpi sgt, %284, %280 : i32
    %310 = arith.cmpi sgt, %292, %288 : i32
    %311 = arith.andi %309, %310 : i1
    %312 = arith.extui %311 : i1 to i32
    %313 = arith.sitofp %312 : i32 to f32
    %314 = vector.broadcast %313 : f32 to vector<1x32xf32>
    %315 = arith.mulf %308, %314 : vector<1x32xf32>
    %c32_i32 = arith.constant 32 : i32
    %316 = arith.addi %3, %c32_i32 : i32
    %c0_i32_78 = arith.constant 0 : i32
    %317 = arith.addi %316, %c0_i32_78 : i32
    %318 = arith.index_cast %317 : i32 to index
    %319 = memref.load %arg1[%318] : memref<448xi32, #tpu.memory_space<smem>>
    %c32_i32_79 = arith.constant 32 : i32
    %320 = arith.addi %3, %c32_i32_79 : i32
    %c1_i32_80 = arith.constant 1 : i32
    %321 = arith.addi %320, %c1_i32_80 : i32
    %322 = arith.index_cast %321 : i32 to index
    %323 = memref.load %arg1[%322] : memref<448xi32, #tpu.memory_space<smem>>
    %c32_i32_81 = arith.constant 32 : i32
    %324 = arith.addi %3, %c32_i32_81 : i32
    %c2_i32_82 = arith.constant 2 : i32
    %325 = arith.addi %324, %c2_i32_82 : i32
    %326 = arith.index_cast %325 : i32 to index
    %327 = memref.load %arg1[%326] : memref<448xi32, #tpu.memory_space<smem>>
    %c32_i32_83 = arith.constant 32 : i32
    %328 = arith.addi %3, %c32_i32_83 : i32
    %c3_i32_84 = arith.constant 3 : i32
    %329 = arith.addi %328, %c3_i32_84 : i32
    %330 = arith.index_cast %329 : i32 to index
    %331 = memref.load %arg1[%330] : memref<448xi32, #tpu.memory_space<smem>>
    %332 = vector.broadcast %319 : i32 to vector<8x8x32xi32>
    %333 = arith.cmpi sge, %1, %332 : vector<8x8x32xi32>
    %334 = vector.broadcast %323 : i32 to vector<8x8x32xi32>
    %335 = arith.cmpi slt, %1, %334 : vector<8x8x32xi32>
    %336 = arith.andi %333, %335 : vector<8x8x32xi1>
    %337 = vector.broadcast %327 : i32 to vector<8x8x32xi32>
    %338 = arith.cmpi sge, %2, %337 : vector<8x8x32xi32>
    %339 = arith.andi %336, %338 : vector<8x8x32xi1>
    %340 = vector.broadcast %331 : i32 to vector<8x8x32xi32>
    %341 = arith.cmpi slt, %2, %340 : vector<8x8x32xi32>
    %342 = arith.andi %339, %341 : vector<8x8x32xi1>
    %cst_85 = arith.constant -1.000000e+30 : f32
    %343 = vector.broadcast %cst_85 : f32 to vector<8x8x32xf32>
    %344 = arith.select %342, %0, %343 : vector<8x8x32xi1>, vector<8x8x32xf32>
    %cst_86 = arith.constant dense<0xFF800000> : vector<8x32xf32>
    %345 = vector.multi_reduction <maximumf>, %344, %cst_86 [0] : vector<8x8x32xf32> to vector<8x32xf32>
    %cst_87 = arith.constant dense<0xFF800000> : vector<32xf32>
    %346 = vector.multi_reduction <maximumf>, %345, %cst_87 [0] : vector<8x32xf32> to vector<32xf32>
    %347 = vector.shape_cast %346 : vector<32xf32> to vector<1x32xf32>
    %348 = arith.cmpi sgt, %323, %319 : i32
    %349 = arith.cmpi sgt, %331, %327 : i32
    %350 = arith.andi %348, %349 : i1
    %351 = arith.extui %350 : i1 to i32
    %352 = arith.sitofp %351 : i32 to f32
    %353 = vector.broadcast %352 : f32 to vector<1x32xf32>
    %354 = arith.mulf %347, %353 : vector<1x32xf32>
    %c36_i32 = arith.constant 36 : i32
    %355 = arith.addi %3, %c36_i32 : i32
    %c0_i32_88 = arith.constant 0 : i32
    %356 = arith.addi %355, %c0_i32_88 : i32
    %357 = arith.index_cast %356 : i32 to index
    %358 = memref.load %arg1[%357] : memref<448xi32, #tpu.memory_space<smem>>
    %c36_i32_89 = arith.constant 36 : i32
    %359 = arith.addi %3, %c36_i32_89 : i32
    %c1_i32_90 = arith.constant 1 : i32
    %360 = arith.addi %359, %c1_i32_90 : i32
    %361 = arith.index_cast %360 : i32 to index
    %362 = memref.load %arg1[%361] : memref<448xi32, #tpu.memory_space<smem>>
    %c36_i32_91 = arith.constant 36 : i32
    %363 = arith.addi %3, %c36_i32_91 : i32
    %c2_i32_92 = arith.constant 2 : i32
    %364 = arith.addi %363, %c2_i32_92 : i32
    %365 = arith.index_cast %364 : i32 to index
    %366 = memref.load %arg1[%365] : memref<448xi32, #tpu.memory_space<smem>>
    %c36_i32_93 = arith.constant 36 : i32
    %367 = arith.addi %3, %c36_i32_93 : i32
    %c3_i32_94 = arith.constant 3 : i32
    %368 = arith.addi %367, %c3_i32_94 : i32
    %369 = arith.index_cast %368 : i32 to index
    %370 = memref.load %arg1[%369] : memref<448xi32, #tpu.memory_space<smem>>
    %371 = vector.broadcast %358 : i32 to vector<8x8x32xi32>
    %372 = arith.cmpi sge, %1, %371 : vector<8x8x32xi32>
    %373 = vector.broadcast %362 : i32 to vector<8x8x32xi32>
    %374 = arith.cmpi slt, %1, %373 : vector<8x8x32xi32>
    %375 = arith.andi %372, %374 : vector<8x8x32xi1>
    %376 = vector.broadcast %366 : i32 to vector<8x8x32xi32>
    %377 = arith.cmpi sge, %2, %376 : vector<8x8x32xi32>
    %378 = arith.andi %375, %377 : vector<8x8x32xi1>
    %379 = vector.broadcast %370 : i32 to vector<8x8x32xi32>
    %380 = arith.cmpi slt, %2, %379 : vector<8x8x32xi32>
    %381 = arith.andi %378, %380 : vector<8x8x32xi1>
    %cst_95 = arith.constant -1.000000e+30 : f32
    %382 = vector.broadcast %cst_95 : f32 to vector<8x8x32xf32>
    %383 = arith.select %381, %0, %382 : vector<8x8x32xi1>, vector<8x8x32xf32>
    %cst_96 = arith.constant dense<0xFF800000> : vector<8x32xf32>
    %384 = vector.multi_reduction <maximumf>, %383, %cst_96 [0] : vector<8x8x32xf32> to vector<8x32xf32>
    %cst_97 = arith.constant dense<0xFF800000> : vector<32xf32>
    %385 = vector.multi_reduction <maximumf>, %384, %cst_97 [0] : vector<8x32xf32> to vector<32xf32>
    %386 = vector.shape_cast %385 : vector<32xf32> to vector<1x32xf32>
    %387 = arith.cmpi sgt, %362, %358 : i32
    %388 = arith.cmpi sgt, %370, %366 : i32
    %389 = arith.andi %387, %388 : i1
    %390 = arith.extui %389 : i1 to i32
    %391 = arith.sitofp %390 : i32 to f32
    %392 = vector.broadcast %391 : f32 to vector<1x32xf32>
    %393 = arith.mulf %386, %392 : vector<1x32xf32>
    %c40_i32 = arith.constant 40 : i32
    %394 = arith.addi %3, %c40_i32 : i32
    %c0_i32_98 = arith.constant 0 : i32
    %395 = arith.addi %394, %c0_i32_98 : i32
    %396 = arith.index_cast %395 : i32 to index
    %397 = memref.load %arg1[%396] : memref<448xi32, #tpu.memory_space<smem>>
    %c40_i32_99 = arith.constant 40 : i32
    %398 = arith.addi %3, %c40_i32_99 : i32
    %c1_i32_100 = arith.constant 1 : i32
    %399 = arith.addi %398, %c1_i32_100 : i32
    %400 = arith.index_cast %399 : i32 to index
    %401 = memref.load %arg1[%400] : memref<448xi32, #tpu.memory_space<smem>>
    %c40_i32_101 = arith.constant 40 : i32
    %402 = arith.addi %3, %c40_i32_101 : i32
    %c2_i32_102 = arith.constant 2 : i32
    %403 = arith.addi %402, %c2_i32_102 : i32
    %404 = arith.index_cast %403 : i32 to index
    %405 = memref.load %arg1[%404] : memref<448xi32, #tpu.memory_space<smem>>
    %c40_i32_103 = arith.constant 40 : i32
    %406 = arith.addi %3, %c40_i32_103 : i32
    %c3_i32_104 = arith.constant 3 : i32
    %407 = arith.addi %406, %c3_i32_104 : i32
    %408 = arith.index_cast %407 : i32 to index
    %409 = memref.load %arg1[%408] : memref<448xi32, #tpu.memory_space<smem>>
    %410 = vector.broadcast %397 : i32 to vector<8x8x32xi32>
    %411 = arith.cmpi sge, %1, %410 : vector<8x8x32xi32>
    %412 = vector.broadcast %401 : i32 to vector<8x8x32xi32>
    %413 = arith.cmpi slt, %1, %412 : vector<8x8x32xi32>
    %414 = arith.andi %411, %413 : vector<8x8x32xi1>
    %415 = vector.broadcast %405 : i32 to vector<8x8x32xi32>
    %416 = arith.cmpi sge, %2, %415 : vector<8x8x32xi32>
    %417 = arith.andi %414, %416 : vector<8x8x32xi1>
    %418 = vector.broadcast %409 : i32 to vector<8x8x32xi32>
    %419 = arith.cmpi slt, %2, %418 : vector<8x8x32xi32>
    %420 = arith.andi %417, %419 : vector<8x8x32xi1>
    %cst_105 = arith.constant -1.000000e+30 : f32
    %421 = vector.broadcast %cst_105 : f32 to vector<8x8x32xf32>
    %422 = arith.select %420, %0, %421 : vector<8x8x32xi1>, vector<8x8x32xf32>
    %cst_106 = arith.constant dense<0xFF800000> : vector<8x32xf32>
    %423 = vector.multi_reduction <maximumf>, %422, %cst_106 [0] : vector<8x8x32xf32> to vector<8x32xf32>
    %cst_107 = arith.constant dense<0xFF800000> : vector<32xf32>
    %424 = vector.multi_reduction <maximumf>, %423, %cst_107 [0] : vector<8x32xf32> to vector<32xf32>
    %425 = vector.shape_cast %424 : vector<32xf32> to vector<1x32xf32>
    %426 = arith.cmpi sgt, %401, %397 : i32
    %427 = arith.cmpi sgt, %409, %405 : i32
    %428 = arith.andi %426, %427 : i1
    %429 = arith.extui %428 : i1 to i32
    %430 = arith.sitofp %429 : i32 to f32
    %431 = vector.broadcast %430 : f32 to vector<1x32xf32>
    %432 = arith.mulf %425, %431 : vector<1x32xf32>
    %c44_i32 = arith.constant 44 : i32
    %433 = arith.addi %3, %c44_i32 : i32
    %c0_i32_108 = arith.constant 0 : i32
    %434 = arith.addi %433, %c0_i32_108 : i32
    %435 = arith.index_cast %434 : i32 to index
    %436 = memref.load %arg1[%435] : memref<448xi32, #tpu.memory_space<smem>>
    %c44_i32_109 = arith.constant 44 : i32
    %437 = arith.addi %3, %c44_i32_109 : i32
    %c1_i32_110 = arith.constant 1 : i32
    %438 = arith.addi %437, %c1_i32_110 : i32
    %439 = arith.index_cast %438 : i32 to index
    %440 = memref.load %arg1[%439] : memref<448xi32, #tpu.memory_space<smem>>
    %c44_i32_111 = arith.constant 44 : i32
    %441 = arith.addi %3, %c44_i32_111 : i32
    %c2_i32_112 = arith.constant 2 : i32
    %442 = arith.addi %441, %c2_i32_112 : i32
    %443 = arith.index_cast %442 : i32 to index
    %444 = memref.load %arg1[%443] : memref<448xi32, #tpu.memory_space<smem>>
    %c44_i32_113 = arith.constant 44 : i32
    %445 = arith.addi %3, %c44_i32_113 : i32
    %c3_i32_114 = arith.constant 3 : i32
    %446 = arith.addi %445, %c3_i32_114 : i32
    %447 = arith.index_cast %446 : i32 to index
    %448 = memref.load %arg1[%447] : memref<448xi32, #tpu.memory_space<smem>>
    %449 = vector.broadcast %436 : i32 to vector<8x8x32xi32>
    %450 = arith.cmpi sge, %1, %449 : vector<8x8x32xi32>
    %451 = vector.broadcast %440 : i32 to vector<8x8x32xi32>
    %452 = arith.cmpi slt, %1, %451 : vector<8x8x32xi32>
    %453 = arith.andi %450, %452 : vector<8x8x32xi1>
    %454 = vector.broadcast %444 : i32 to vector<8x8x32xi32>
    %455 = arith.cmpi sge, %2, %454 : vector<8x8x32xi32>
    %456 = arith.andi %453, %455 : vector<8x8x32xi1>
    %457 = vector.broadcast %448 : i32 to vector<8x8x32xi32>
    %458 = arith.cmpi slt, %2, %457 : vector<8x8x32xi32>
    %459 = arith.andi %456, %458 : vector<8x8x32xi1>
    %cst_115 = arith.constant -1.000000e+30 : f32
    %460 = vector.broadcast %cst_115 : f32 to vector<8x8x32xf32>
    %461 = arith.select %459, %0, %460 : vector<8x8x32xi1>, vector<8x8x32xf32>
    %cst_116 = arith.constant dense<0xFF800000> : vector<8x32xf32>
    %462 = vector.multi_reduction <maximumf>, %461, %cst_116 [0] : vector<8x8x32xf32> to vector<8x32xf32>
    %cst_117 = arith.constant dense<0xFF800000> : vector<32xf32>
    %463 = vector.multi_reduction <maximumf>, %462, %cst_117 [0] : vector<8x32xf32> to vector<32xf32>
    %464 = vector.shape_cast %463 : vector<32xf32> to vector<1x32xf32>
    %465 = arith.cmpi sgt, %440, %436 : i32
    %466 = arith.cmpi sgt, %448, %444 : i32
    %467 = arith.andi %465, %466 : i1
    %468 = arith.extui %467 : i1 to i32
    %469 = arith.sitofp %468 : i32 to f32
    %470 = vector.broadcast %469 : f32 to vector<1x32xf32>
    %471 = arith.mulf %464, %470 : vector<1x32xf32>
    %c48_i32 = arith.constant 48 : i32
    %472 = arith.addi %3, %c48_i32 : i32
    %c0_i32_118 = arith.constant 0 : i32
    %473 = arith.addi %472, %c0_i32_118 : i32
    %474 = arith.index_cast %473 : i32 to index
    %475 = memref.load %arg1[%474] : memref<448xi32, #tpu.memory_space<smem>>
    %c48_i32_119 = arith.constant 48 : i32
    %476 = arith.addi %3, %c48_i32_119 : i32
    %c1_i32_120 = arith.constant 1 : i32
    %477 = arith.addi %476, %c1_i32_120 : i32
    %478 = arith.index_cast %477 : i32 to index
    %479 = memref.load %arg1[%478] : memref<448xi32, #tpu.memory_space<smem>>
    %c48_i32_121 = arith.constant 48 : i32
    %480 = arith.addi %3, %c48_i32_121 : i32
    %c2_i32_122 = arith.constant 2 : i32
    %481 = arith.addi %480, %c2_i32_122 : i32
    %482 = arith.index_cast %481 : i32 to index
    %483 = memref.load %arg1[%482] : memref<448xi32, #tpu.memory_space<smem>>
    %c48_i32_123 = arith.constant 48 : i32
    %484 = arith.addi %3, %c48_i32_123 : i32
    %c3_i32_124 = arith.constant 3 : i32
    %485 = arith.addi %484, %c3_i32_124 : i32
    %486 = arith.index_cast %485 : i32 to index
    %487 = memref.load %arg1[%486] : memref<448xi32, #tpu.memory_space<smem>>
    %488 = vector.broadcast %475 : i32 to vector<8x8x32xi32>
    %489 = arith.cmpi sge, %1, %488 : vector<8x8x32xi32>
    %490 = vector.broadcast %479 : i32 to vector<8x8x32xi32>
    %491 = arith.cmpi slt, %1, %490 : vector<8x8x32xi32>
    %492 = arith.andi %489, %491 : vector<8x8x32xi1>
    %493 = vector.broadcast %483 : i32 to vector<8x8x32xi32>
    %494 = arith.cmpi sge, %2, %493 : vector<8x8x32xi32>
    %495 = arith.andi %492, %494 : vector<8x8x32xi1>
    %496 = vector.broadcast %487 : i32 to vector<8x8x32xi32>
    %497 = arith.cmpi slt, %2, %496 : vector<8x8x32xi32>
    %498 = arith.andi %495, %497 : vector<8x8x32xi1>
    %cst_125 = arith.constant -1.000000e+30 : f32
    %499 = vector.broadcast %cst_125 : f32 to vector<8x8x32xf32>
    %500 = arith.select %498, %0, %499 : vector<8x8x32xi1>, vector<8x8x32xf32>
    %cst_126 = arith.constant dense<0xFF800000> : vector<8x32xf32>
    %501 = vector.multi_reduction <maximumf>, %500, %cst_126 [0] : vector<8x8x32xf32> to vector<8x32xf32>
    %cst_127 = arith.constant dense<0xFF800000> : vector<32xf32>
    %502 = vector.multi_reduction <maximumf>, %501, %cst_127 [0] : vector<8x32xf32> to vector<32xf32>
    %503 = vector.shape_cast %502 : vector<32xf32> to vector<1x32xf32>
    %504 = arith.cmpi sgt, %479, %475 : i32
    %505 = arith.cmpi sgt, %487, %483 : i32
    %506 = arith.andi %504, %505 : i1
    %507 = arith.extui %506 : i1 to i32
    %508 = arith.sitofp %507 : i32 to f32
    %509 = vector.broadcast %508 : f32 to vector<1x32xf32>
    %510 = arith.mulf %503, %509 : vector<1x32xf32>
    %c52_i32 = arith.constant 52 : i32
    %511 = arith.addi %3, %c52_i32 : i32
    %c0_i32_128 = arith.constant 0 : i32
    %512 = arith.addi %511, %c0_i32_128 : i32
    %513 = arith.index_cast %512 : i32 to index
    %514 = memref.load %arg1[%513] : memref<448xi32, #tpu.memory_space<smem>>
    %c52_i32_129 = arith.constant 52 : i32
    %515 = arith.addi %3, %c52_i32_129 : i32
    %c1_i32_130 = arith.constant 1 : i32
    %516 = arith.addi %515, %c1_i32_130 : i32
    %517 = arith.index_cast %516 : i32 to index
    %518 = memref.load %arg1[%517] : memref<448xi32, #tpu.memory_space<smem>>
    %c52_i32_131 = arith.constant 52 : i32
    %519 = arith.addi %3, %c52_i32_131 : i32
    %c2_i32_132 = arith.constant 2 : i32
    %520 = arith.addi %519, %c2_i32_132 : i32
    %521 = arith.index_cast %520 : i32 to index
    %522 = memref.load %arg1[%521] : memref<448xi32, #tpu.memory_space<smem>>
    %c52_i32_133 = arith.constant 52 : i32
    %523 = arith.addi %3, %c52_i32_133 : i32
    %c3_i32_134 = arith.constant 3 : i32
    %524 = arith.addi %523, %c3_i32_134 : i32
    %525 = arith.index_cast %524 : i32 to index
    %526 = memref.load %arg1[%525] : memref<448xi32, #tpu.memory_space<smem>>
    %527 = vector.broadcast %514 : i32 to vector<8x8x32xi32>
    %528 = arith.cmpi sge, %1, %527 : vector<8x8x32xi32>
    %529 = vector.broadcast %518 : i32 to vector<8x8x32xi32>
    %530 = arith.cmpi slt, %1, %529 : vector<8x8x32xi32>
    %531 = arith.andi %528, %530 : vector<8x8x32xi1>
    %532 = vector.broadcast %522 : i32 to vector<8x8x32xi32>
    %533 = arith.cmpi sge, %2, %532 : vector<8x8x32xi32>
    %534 = arith.andi %531, %533 : vector<8x8x32xi1>
    %535 = vector.broadcast %526 : i32 to vector<8x8x32xi32>
    %536 = arith.cmpi slt, %2, %535 : vector<8x8x32xi32>
    %537 = arith.andi %534, %536 : vector<8x8x32xi1>
    %cst_135 = arith.constant -1.000000e+30 : f32
    %538 = vector.broadcast %cst_135 : f32 to vector<8x8x32xf32>
    %539 = arith.select %537, %0, %538 : vector<8x8x32xi1>, vector<8x8x32xf32>
    %cst_136 = arith.constant dense<0xFF800000> : vector<8x32xf32>
    %540 = vector.multi_reduction <maximumf>, %539, %cst_136 [0] : vector<8x8x32xf32> to vector<8x32xf32>
    %cst_137 = arith.constant dense<0xFF800000> : vector<32xf32>
    %541 = vector.multi_reduction <maximumf>, %540, %cst_137 [0] : vector<8x32xf32> to vector<32xf32>
    %542 = vector.shape_cast %541 : vector<32xf32> to vector<1x32xf32>
    %543 = arith.cmpi sgt, %518, %514 : i32
    %544 = arith.cmpi sgt, %526, %522 : i32
    %545 = arith.andi %543, %544 : i1
    %546 = arith.extui %545 : i1 to i32
    %547 = arith.sitofp %546 : i32 to f32
    %548 = vector.broadcast %547 : f32 to vector<1x32xf32>
    %549 = arith.mulf %542, %548 : vector<1x32xf32>
    %c56_i32 = arith.constant 56 : i32
    %550 = arith.addi %3, %c56_i32 : i32
    %c0_i32_138 = arith.constant 0 : i32
    %551 = arith.addi %550, %c0_i32_138 : i32
    %552 = arith.index_cast %551 : i32 to index
    %553 = memref.load %arg1[%552] : memref<448xi32, #tpu.memory_space<smem>>
    %c56_i32_139 = arith.constant 56 : i32
    %554 = arith.addi %3, %c56_i32_139 : i32
    %c1_i32_140 = arith.constant 1 : i32
    %555 = arith.addi %554, %c1_i32_140 : i32
    %556 = arith.index_cast %555 : i32 to index
    %557 = memref.load %arg1[%556] : memref<448xi32, #tpu.memory_space<smem>>
    %c56_i32_141 = arith.constant 56 : i32
    %558 = arith.addi %3, %c56_i32_141 : i32
    %c2_i32_142 = arith.constant 2 : i32
    %559 = arith.addi %558, %c2_i32_142 : i32
    %560 = arith.index_cast %559 : i32 to index
    %561 = memref.load %arg1[%560] : memref<448xi32, #tpu.memory_space<smem>>
    %c56_i32_143 = arith.constant 56 : i32
    %562 = arith.addi %3, %c56_i32_143 : i32
    %c3_i32_144 = arith.constant 3 : i32
    %563 = arith.addi %562, %c3_i32_144 : i32
    %564 = arith.index_cast %563 : i32 to index
    %565 = memref.load %arg1[%564] : memref<448xi32, #tpu.memory_space<smem>>
    %566 = vector.broadcast %553 : i32 to vector<8x8x32xi32>
    %567 = arith.cmpi sge, %1, %566 : vector<8x8x32xi32>
    %568 = vector.broadcast %557 : i32 to vector<8x8x32xi32>
    %569 = arith.cmpi slt, %1, %568 : vector<8x8x32xi32>
    %570 = arith.andi %567, %569 : vector<8x8x32xi1>
    %571 = vector.broadcast %561 : i32 to vector<8x8x32xi32>
    %572 = arith.cmpi sge, %2, %571 : vector<8x8x32xi32>
    %573 = arith.andi %570, %572 : vector<8x8x32xi1>
    %574 = vector.broadcast %565 : i32 to vector<8x8x32xi32>
    %575 = arith.cmpi slt, %2, %574 : vector<8x8x32xi32>
    %576 = arith.andi %573, %575 : vector<8x8x32xi1>
    %cst_145 = arith.constant -1.000000e+30 : f32
    %577 = vector.broadcast %cst_145 : f32 to vector<8x8x32xf32>
    %578 = arith.select %576, %0, %577 : vector<8x8x32xi1>, vector<8x8x32xf32>
    %cst_146 = arith.constant dense<0xFF800000> : vector<8x32xf32>
    %579 = vector.multi_reduction <maximumf>, %578, %cst_146 [0] : vector<8x8x32xf32> to vector<8x32xf32>
    %cst_147 = arith.constant dense<0xFF800000> : vector<32xf32>
    %580 = vector.multi_reduction <maximumf>, %579, %cst_147 [0] : vector<8x32xf32> to vector<32xf32>
    %581 = vector.shape_cast %580 : vector<32xf32> to vector<1x32xf32>
    %582 = arith.cmpi sgt, %557, %553 : i32
    %583 = arith.cmpi sgt, %565, %561 : i32
    %584 = arith.andi %582, %583 : i1
    %585 = arith.extui %584 : i1 to i32
    %586 = arith.sitofp %585 : i32 to f32
    %587 = vector.broadcast %586 : f32 to vector<1x32xf32>
    %588 = arith.mulf %581, %587 : vector<1x32xf32>
    %c60_i32 = arith.constant 60 : i32
    %589 = arith.addi %3, %c60_i32 : i32
    %c0_i32_148 = arith.constant 0 : i32
    %590 = arith.addi %589, %c0_i32_148 : i32
    %591 = arith.index_cast %590 : i32 to index
    %592 = memref.load %arg1[%591] : memref<448xi32, #tpu.memory_space<smem>>
    %c60_i32_149 = arith.constant 60 : i32
    %593 = arith.addi %3, %c60_i32_149 : i32
    %c1_i32_150 = arith.constant 1 : i32
    %594 = arith.addi %593, %c1_i32_150 : i32
    %595 = arith.index_cast %594 : i32 to index
    %596 = memref.load %arg1[%595] : memref<448xi32, #tpu.memory_space<smem>>
    %c60_i32_151 = arith.constant 60 : i32
    %597 = arith.addi %3, %c60_i32_151 : i32
    %c2_i32_152 = arith.constant 2 : i32
    %598 = arith.addi %597, %c2_i32_152 : i32
    %599 = arith.index_cast %598 : i32 to index
    %600 = memref.load %arg1[%599] : memref<448xi32, #tpu.memory_space<smem>>
    %c60_i32_153 = arith.constant 60 : i32
    %601 = arith.addi %3, %c60_i32_153 : i32
    %c3_i32_154 = arith.constant 3 : i32
    %602 = arith.addi %601, %c3_i32_154 : i32
    %603 = arith.index_cast %602 : i32 to index
    %604 = memref.load %arg1[%603] : memref<448xi32, #tpu.memory_space<smem>>
    %605 = vector.broadcast %592 : i32 to vector<8x8x32xi32>
    %606 = arith.cmpi sge, %1, %605 : vector<8x8x32xi32>
    %607 = vector.broadcast %596 : i32 to vector<8x8x32xi32>
    %608 = arith.cmpi slt, %1, %607 : vector<8x8x32xi32>
    %609 = arith.andi %606, %608 : vector<8x8x32xi1>
    %610 = vector.broadcast %600 : i32 to vector<8x8x32xi32>
    %611 = arith.cmpi sge, %2, %610 : vector<8x8x32xi32>
    %612 = arith.andi %609, %611 : vector<8x8x32xi1>
    %613 = vector.broadcast %604 : i32 to vector<8x8x32xi32>
    %614 = arith.cmpi slt, %2, %613 : vector<8x8x32xi32>
    %615 = arith.andi %612, %614 : vector<8x8x32xi1>
    %cst_155 = arith.constant -1.000000e+30 : f32
    %616 = vector.broadcast %cst_155 : f32 to vector<8x8x32xf32>
    %617 = arith.select %615, %0, %616 : vector<8x8x32xi1>, vector<8x8x32xf32>
    %cst_156 = arith.constant dense<0xFF800000> : vector<8x32xf32>
    %618 = vector.multi_reduction <maximumf>, %617, %cst_156 [0] : vector<8x8x32xf32> to vector<8x32xf32>
    %cst_157 = arith.constant dense<0xFF800000> : vector<32xf32>
    %619 = vector.multi_reduction <maximumf>, %618, %cst_157 [0] : vector<8x32xf32> to vector<32xf32>
    %620 = vector.shape_cast %619 : vector<32xf32> to vector<1x32xf32>
    %621 = arith.cmpi sgt, %596, %592 : i32
    %622 = arith.cmpi sgt, %604, %600 : i32
    %623 = arith.andi %621, %622 : i1
    %624 = arith.extui %623 : i1 to i32
    %625 = arith.sitofp %624 : i32 to f32
    %626 = vector.broadcast %625 : f32 to vector<1x32xf32>
    %627 = arith.mulf %620, %626 : vector<1x32xf32>
    %628 = tpu.concatenate %42, %81, %120, %159, %198, %237, %276, %315, %354, %393, %432, %471, %510, %549, %588, %627 in 0 : vector<1x32xf32>, vector<1x32xf32>, vector<1x32xf32>, vector<1x32xf32>, vector<1x32xf32>, vector<1x32xf32>, vector<1x32xf32>, vector<1x32xf32>, vector<1x32xf32>, vector<1x32xf32>, vector<1x32xf32>, vector<1x32xf32>, vector<1x32xf32>, vector<1x32xf32>, vector<1x32xf32>, vector<1x32xf32> -> vector<16x32xf32>
    %c0_158 = arith.constant 0 : index
    %c0_159 = arith.constant 0 : index
    %c0_160 = arith.constant 0 : index
    %629 = vector.load %arg3[%c0_158, %c0_159, %c0_160] : memref<1x16x32xf32, #tpu.memory_space<vmem>>, vector<1x16x32xf32>
    %630 = vector.shape_cast %629 : vector<1x16x32xf32> to vector<16x32xf32>
    %631 = vector.shape_cast %628 : vector<16x32xf32> to vector<1x16x32xf32>
    tpu.vector_store %arg3[%c0_158, %c0_159, %c0_160], %631 {strides = array<i32>} : memref<1x16x32xf32, #tpu.memory_space<vmem>>, vector<1x16x32xf32>,
    return
  }
  func.func @transform_0(%arg0: i32, %arg1: memref<448xi32, #tpu.memory_space<smem>>) -> (i32, i32, i32) {
    %c0_i32 = arith.constant 0 : i32
    %c0_i32_0 = arith.constant 0 : i32
    %c0_i32_1 = arith.constant 0 : i32
    %c0_i32_2 = arith.constant 0 : i32
    return %c0_i32, %c0_i32_0, %c0_i32_1 : i32, i32, i32
  }
  func.func @transform_1(%arg0: i32, %arg1: memref<448xi32, #tpu.memory_space<smem>>) -> (i32, i32, i32) {
    %c0_i32 = arith.constant 0 : i32
    %c0_i32_0 = arith.constant 0 : i32
    %c0_i32_1 = arith.constant 0 : i32
    return %arg0, %c0_i32, %c0_i32_0 : i32, i32, i32
  }
}

module attributes {stable_mosaic.version = 11 : i64} {
  func.func @_head_kernel(%arg0: i32, %arg1: memref<7x512xf32, #tpu.memory_space<vmem>>, %arg2: memref<512x64xbf16, #tpu.memory_space<vmem>>, %arg3: memref<1x64xf32, #tpu.memory_space<vmem>>, %arg4: memref<64x64xbf16, #tpu.memory_space<vmem>>, %arg5: memref<1x64xf32, #tpu.memory_space<vmem>>, %arg6: memref<64x640xbf16, #tpu.memory_space<vmem>>, %arg7: memref<1x640xf32, #tpu.memory_space<vmem>>, %arg8: memref<7x128xf32, #tpu.memory_space<vmem>>, %arg9: memref<1x128xf32, #tpu.memory_space<vmem>>, %arg10: memref<3x7x128xf32, #tpu.memory_space<vmem>>, %arg11: memref<7x128xf32, #tpu.memory_space<vmem>>) attributes {dimension_semantics = [#tpu.dimension_semantics<arbitrary>], iteration_bounds = array<i64: 1>, scalar_prefetch = 0 : i64, scratch_operands = 0 : i64, tpu.core_type = #tpu.core_type<tc>, window_params = [{pipeline_mode = #tpu.pipeline_mode<synchronous>, transform_indices = @transform_0, window_bounds = array<i64: 7, 512>}, {pipeline_mode = #tpu.pipeline_mode<synchronous>, transform_indices = @transform_1, window_bounds = array<i64: 512, 64>}, {pipeline_mode = #tpu.pipeline_mode<synchronous>, transform_indices = @transform_2, window_bounds = array<i64: 1, 64>}, {pipeline_mode = #tpu.pipeline_mode<synchronous>, transform_indices = @transform_3, window_bounds = array<i64: 64, 64>}, {pipeline_mode = #tpu.pipeline_mode<synchronous>, transform_indices = @transform_4, window_bounds = array<i64: 1, 64>}, {pipeline_mode = #tpu.pipeline_mode<synchronous>, transform_indices = @transform_5, window_bounds = array<i64: 64, 640>}, {pipeline_mode = #tpu.pipeline_mode<synchronous>, transform_indices = @transform_6, window_bounds = array<i64: 1, 640>}, {pipeline_mode = #tpu.pipeline_mode<synchronous>, transform_indices = @transform_7, window_bounds = array<i64: 7, 128>}, {pipeline_mode = #tpu.pipeline_mode<synchronous>, transform_indices = @transform_8, window_bounds = array<i64: 1, 128>}, {pipeline_mode = #tpu.pipeline_mode<synchronous>, transform_indices = @transform_9, window_bounds = array<i64: 3, 7, 128>}, {pipeline_mode = #tpu.pipeline_mode<synchronous>, transform_indices = @transform_10, window_bounds = array<i64: 7, 128>}]} {
    %c0 = arith.constant 0 : index
    %c0_0 = arith.constant 0 : index
    %0 = vector.load %arg1[%c0, %c0_0] : memref<7x512xf32, #tpu.memory_space<vmem>>, vector<7x512xf32>
    %1 = arith.truncf %0 : vector<7x512xf32> to vector<7x512xbf16>
    %c0_1 = arith.constant 0 : index
    %c0_2 = arith.constant 0 : index
    %2 = vector.load %arg2[%c0_1, %c0_2] : memref<512x64xbf16, #tpu.memory_space<vmem>>, vector<512x64xbf16>
    %cst = arith.constant dense<0.000000e+00> : vector<7x64xf32>
    %3 = tpu.matmul %1, %2, %cst {dimension_numbers = #tpu.dot_dimension_numbers<[1], [0], [0], [1], [0, 0, 1, 1], [], []>} : vector<7x512xbf16>, vector<512x64xbf16>, vector<7x64xf32> -> vector<7x64xf32>
    %c0_3 = arith.constant 0 : index
    %c0_4 = arith.constant 0 : index
    %4 = vector.load %arg3[%c0_3, %c0_4] : memref<1x64xf32, #tpu.memory_space<vmem>>, vector<1x64xf32>
    %5 = vector.broadcast %4 : vector<1x64xf32> to vector<7x64xf32>
    %6 = arith.addf %3, %5 : vector<7x64xf32>
    %cst_5 = arith.constant 0.000000e+00 : f32
    %7 = vector.broadcast %cst_5 : f32 to vector<7x64xf32>
    %8 = arith.maximumf %6, %7 : vector<7x64xf32>
    %9 = arith.truncf %8 : vector<7x64xf32> to vector<7x64xbf16>
    %c0_6 = arith.constant 0 : index
    %c0_7 = arith.constant 0 : index
    %10 = vector.load %arg4[%c0_6, %c0_7] : memref<64x64xbf16, #tpu.memory_space<vmem>>, vector<64x64xbf16>
    %cst_8 = arith.constant dense<0.000000e+00> : vector<7x64xf32>
    %11 = tpu.matmul %9, %10, %cst_8 {dimension_numbers = #tpu.dot_dimension_numbers<[1], [0], [0], [1], [0, 0, 1, 1], [], []>} : vector<7x64xbf16>, vector<64x64xbf16>, vector<7x64xf32> -> vector<7x64xf32>
    %c0_9 = arith.constant 0 : index
    %c0_10 = arith.constant 0 : index
    %12 = vector.load %arg5[%c0_9, %c0_10] : memref<1x64xf32, #tpu.memory_space<vmem>>, vector<1x64xf32>
    %13 = vector.broadcast %12 : vector<1x64xf32> to vector<7x64xf32>
    %14 = arith.addf %11, %13 : vector<7x64xf32>
    %cst_11 = arith.constant 0.000000e+00 : f32
    %15 = vector.broadcast %cst_11 : f32 to vector<7x64xf32>
    %16 = arith.maximumf %14, %15 : vector<7x64xf32>
    %17 = arith.truncf %16 : vector<7x64xf32> to vector<7x64xbf16>
    %c0_12 = arith.constant 0 : index
    %c0_13 = arith.constant 0 : index
    %18 = vector.load %arg6[%c0_12, %c0_13] : memref<64x640xbf16, #tpu.memory_space<vmem>>, vector<64x640xbf16>
    %cst_14 = arith.constant dense<0.000000e+00> : vector<7x640xf32>
    %19 = tpu.matmul %17, %18, %cst_14 {dimension_numbers = #tpu.dot_dimension_numbers<[1], [0], [0], [1], [0, 0, 1, 1], [], []>} : vector<7x64xbf16>, vector<64x640xbf16>, vector<7x640xf32> -> vector<7x640xf32>
    %c0_15 = arith.constant 0 : index
    %c0_16 = arith.constant 0 : index
    %20 = vector.load %arg7[%c0_15, %c0_16] : memref<1x640xf32, #tpu.memory_space<vmem>>, vector<1x640xf32>
    %21 = vector.broadcast %20 : vector<1x640xf32> to vector<7x640xf32>
    %22 = arith.addf %19, %21 : vector<7x640xf32>
    %23 = tpu.iota {dimensions = array<i32: 1>} : vector<7x128xi32>
    %c5_i32 = arith.constant 5 : i32
    %24 = vector.broadcast %c5_i32 : i32 to vector<7x128xi32>
    %25 = arith.cmpi slt, %23, %24 : vector<7x128xi32>
    %c6_i32 = arith.constant 6 : i32
    %26 = vector.broadcast %c6_i32 : i32 to vector<7x128xi32>
    %27 = arith.cmpi slt, %23, %26 : vector<7x128xi32>
    %28 = vector.extract_strided_slice %22 {offsets = [0, 0], sizes = [7, 128], strides = [1, 1]} : vector<7x640xf32> to vector<7x128xf32>
    %cst_17 = arith.constant -1.000000e+30 : f32
    %29 = vector.broadcast %cst_17 : f32 to vector<7x128xf32>
    %30 = arith.select %25, %28, %29 : vector<7x128xi1>, vector<7x128xf32>
    %31 = vector.extract_strided_slice %22 {offsets = [0, 128], sizes = [7, 128], strides = [1, 1]} : vector<7x640xf32> to vector<7x128xf32>
    %cst_18 = arith.constant dense<0xFF800000> : vector<7xf32>
    %32 = vector.multi_reduction <maximumf>, %30, %cst_18 [1] : vector<7x128xf32> to vector<7xf32>
    %33 = vector.shape_cast %32 : vector<7xf32> to vector<7x1xf32>
    %34 = vector.broadcast %33 : vector<7x1xf32> to vector<7x128xf32>
    %35 = arith.subf %30, %34 : vector<7x128xf32>
    %36 = math.exp %35 : vector<7x128xf32>
    %cst_19 = arith.constant 0.000000e+00 : f32
    %37 = vector.broadcast %cst_19 : f32 to vector<7x128xf32>
    %38 = arith.select %25, %36, %37 : vector<7x128xi1>, vector<7x128xf32>
    %cst_20 = arith.constant dense<0.000000e+00> : vector<7xf32>
    %39 = vector.multi_reduction <add>, %38, %cst_20 [1] : vector<7x128xf32> to vector<7xf32>
    %40 = vector.shape_cast %39 : vector<7xf32> to vector<7x1xf32>
    %41 = tpu.reciprocal %40 {approx = true} : vector<7x1xf32> -> vector<7x1xf32>
    %42 = vector.broadcast %41 : vector<7x1xf32> to vector<7x128xf32>
    %43 = arith.mulf %38, %42 : vector<7x128xf32>
    %cst_21 = arith.constant dense<0xFF800000> : vector<128xf32>
    %44 = vector.multi_reduction <maximumf>, %31, %cst_21 [0] : vector<7x128xf32> to vector<128xf32>
    %45 = vector.shape_cast %44 : vector<128xf32> to vector<1x128xf32>
    %46 = vector.broadcast %45 : vector<1x128xf32> to vector<7x128xf32>
    %47 = arith.subf %31, %46 : vector<7x128xf32>
    %48 = math.exp %47 : vector<7x128xf32>
    %cst_22 = arith.constant dense<0.000000e+00> : vector<128xf32>
    %49 = vector.multi_reduction <add>, %48, %cst_22 [0] : vector<7x128xf32> to vector<128xf32>
    %50 = vector.shape_cast %49 : vector<128xf32> to vector<1x128xf32>
    %51 = tpu.reciprocal %50 {approx = true} : vector<1x128xf32> -> vector<1x128xf32>
    %52 = vector.broadcast %51 : vector<1x128xf32> to vector<7x128xf32>
    %53 = arith.mulf %48, %52 : vector<7x128xf32>
    %cst_23 = arith.constant 0.000000e+00 : f32
    %54 = vector.broadcast %cst_23 : f32 to vector<7x128xf32>
    %55 = arith.select %25, %53, %54 : vector<7x128xi1>, vector<7x128xf32>
    %56 = arith.mulf %43, %55 : vector<7x128xf32>
    %c0_24 = arith.constant 0 : index
    %c0_25 = arith.constant 0 : index
    %57 = vector.load %arg8[%c0_24, %c0_25] : memref<7x128xf32, #tpu.memory_space<vmem>>, vector<7x128xf32>
    tpu.vector_store %arg8[%c0_24, %c0_25], %56 {strides = array<i32>} : memref<7x128xf32, #tpu.memory_space<vmem>>, vector<7x128xf32>,
    %cst_26 = arith.constant dense<0.000000e+00> : vector<128xf32>
    %58 = vector.multi_reduction <add>, %56, %cst_26 [0] : vector<7x128xf32> to vector<128xf32>
    %59 = vector.shape_cast %58 : vector<128xf32> to vector<1x128xf32>
    %c0_27 = arith.constant 0 : index
    %c0_28 = arith.constant 0 : index
    %60 = vector.load %arg9[%c0_27, %c0_28] : memref<1x128xf32, #tpu.memory_space<vmem>>, vector<1x128xf32>
    tpu.vector_store %arg9[%c0_27, %c0_28], %59 {strides = array<i32>} : memref<1x128xf32, #tpu.memory_space<vmem>>, vector<1x128xf32>,
    %cst_29 = arith.constant 0.000000e+00 : f32
    %61 = vector.broadcast %cst_29 : f32 to vector<7x128xf32>
    %62 = vector.extract_strided_slice %22 {offsets = [0, 256], sizes = [7, 128], strides = [1, 1]} : vector<7x640xf32> to vector<7x128xf32>
    %cst_30 = arith.constant -1.000000e+30 : f32
    %63 = vector.broadcast %cst_30 : f32 to vector<7x128xf32>
    %64 = arith.select %27, %62, %63 : vector<7x128xi1>, vector<7x128xf32>
    %cst_31 = arith.constant dense<0xFF800000> : vector<7xf32>
    %65 = vector.multi_reduction <maximumf>, %64, %cst_31 [1] : vector<7x128xf32> to vector<7xf32>
    %66 = vector.shape_cast %65 : vector<7xf32> to vector<7x1xf32>
    %67 = vector.broadcast %66 : vector<7x1xf32> to vector<7x128xf32>
    %68 = arith.subf %64, %67 : vector<7x128xf32>
    %69 = math.exp %68 : vector<7x128xf32>
    %cst_32 = arith.constant 0.000000e+00 : f32
    %70 = vector.broadcast %cst_32 : f32 to vector<7x128xf32>
    %71 = arith.select %27, %69, %70 : vector<7x128xi1>, vector<7x128xf32>
    %cst_33 = arith.constant dense<0.000000e+00> : vector<7xf32>
    %72 = vector.multi_reduction <add>, %71, %cst_33 [1] : vector<7x128xf32> to vector<7xf32>
    %73 = vector.shape_cast %72 : vector<7xf32> to vector<7x1xf32>
    %74 = tpu.reciprocal %73 {approx = true} : vector<7x1xf32> -> vector<7x1xf32>
    %75 = vector.broadcast %74 : vector<7x1xf32> to vector<7x128xf32>
    %76 = arith.mulf %71, %75 : vector<7x128xf32>
    %c0_34 = arith.constant 0 : index
    %c0_35 = arith.constant 0 : index
    %c0_36 = arith.constant 0 : index
    %77 = vector.load %arg10[%c0_34, %c0_35, %c0_36] : memref<3x7x128xf32, #tpu.memory_space<vmem>>, vector<1x7x128xf32>
    %78 = vector.shape_cast %77 : vector<1x7x128xf32> to vector<7x128xf32>
    %79 = vector.shape_cast %76 : vector<7x128xf32> to vector<1x7x128xf32>
    tpu.vector_store %arg10[%c0_34, %c0_35, %c0_36], %79 {strides = array<i32>} : memref<3x7x128xf32, #tpu.memory_space<vmem>>, vector<1x7x128xf32>,
    %80 = arith.addf %61, %76 : vector<7x128xf32>
    %81 = vector.extract_strided_slice %22 {offsets = [0, 384], sizes = [7, 128], strides = [1, 1]} : vector<7x640xf32> to vector<7x128xf32>
    %cst_37 = arith.constant -1.000000e+30 : f32
    %82 = vector.broadcast %cst_37 : f32 to vector<7x128xf32>
    %83 = arith.select %27, %81, %82 : vector<7x128xi1>, vector<7x128xf32>
    %cst_38 = arith.constant dense<0xFF800000> : vector<7xf32>
    %84 = vector.multi_reduction <maximumf>, %83, %cst_38 [1] : vector<7x128xf32> to vector<7xf32>
    %85 = vector.shape_cast %84 : vector<7xf32> to vector<7x1xf32>
    %86 = vector.broadcast %85 : vector<7x1xf32> to vector<7x128xf32>
    %87 = arith.subf %83, %86 : vector<7x128xf32>
    %88 = math.exp %87 : vector<7x128xf32>
    %cst_39 = arith.constant 0.000000e+00 : f32
    %89 = vector.broadcast %cst_39 : f32 to vector<7x128xf32>
    %90 = arith.select %27, %88, %89 : vector<7x128xi1>, vector<7x128xf32>
    %cst_40 = arith.constant dense<0.000000e+00> : vector<7xf32>
    %91 = vector.multi_reduction <add>, %90, %cst_40 [1] : vector<7x128xf32> to vector<7xf32>
    %92 = vector.shape_cast %91 : vector<7xf32> to vector<7x1xf32>
    %93 = tpu.reciprocal %92 {approx = true} : vector<7x1xf32> -> vector<7x1xf32>
    %94 = vector.broadcast %93 : vector<7x1xf32> to vector<7x128xf32>
    %95 = arith.mulf %90, %94 : vector<7x128xf32>
    %c1 = arith.constant 1 : index
    %c0_41 = arith.constant 0 : index
    %c0_42 = arith.constant 0 : index
    %96 = vector.load %arg10[%c1, %c0_41, %c0_42] : memref<3x7x128xf32, #tpu.memory_space<vmem>>, vector<1x7x128xf32>
    %97 = vector.shape_cast %96 : vector<1x7x128xf32> to vector<7x128xf32>
    %98 = vector.shape_cast %95 : vector<7x128xf32> to vector<1x7x128xf32>
    tpu.vector_store %arg10[%c1, %c0_41, %c0_42], %98 {strides = array<i32>} : memref<3x7x128xf32, #tpu.memory_space<vmem>>, vector<1x7x128xf32>,
    %99 = arith.addf %80, %95 : vector<7x128xf32>
    %100 = vector.extract_strided_slice %22 {offsets = [0, 512], sizes = [7, 128], strides = [1, 1]} : vector<7x640xf32> to vector<7x128xf32>
    %cst_43 = arith.constant -1.000000e+30 : f32
    %101 = vector.broadcast %cst_43 : f32 to vector<7x128xf32>
    %102 = arith.select %27, %100, %101 : vector<7x128xi1>, vector<7x128xf32>
    %cst_44 = arith.constant dense<0xFF800000> : vector<7xf32>
    %103 = vector.multi_reduction <maximumf>, %102, %cst_44 [1] : vector<7x128xf32> to vector<7xf32>
    %104 = vector.shape_cast %103 : vector<7xf32> to vector<7x1xf32>
    %105 = vector.broadcast %104 : vector<7x1xf32> to vector<7x128xf32>
    %106 = arith.subf %102, %105 : vector<7x128xf32>
    %107 = math.exp %106 : vector<7x128xf32>
    %cst_45 = arith.constant 0.000000e+00 : f32
    %108 = vector.broadcast %cst_45 : f32 to vector<7x128xf32>
    %109 = arith.select %27, %107, %108 : vector<7x128xi1>, vector<7x128xf32>
    %cst_46 = arith.constant dense<0.000000e+00> : vector<7xf32>
    %110 = vector.multi_reduction <add>, %109, %cst_46 [1] : vector<7x128xf32> to vector<7xf32>
    %111 = vector.shape_cast %110 : vector<7xf32> to vector<7x1xf32>
    %112 = tpu.reciprocal %111 {approx = true} : vector<7x1xf32> -> vector<7x1xf32>
    %113 = vector.broadcast %112 : vector<7x1xf32> to vector<7x128xf32>
    %114 = arith.mulf %109, %113 : vector<7x128xf32>
    %c2 = arith.constant 2 : index
    %c0_47 = arith.constant 0 : index
    %c0_48 = arith.constant 0 : index
    %115 = vector.load %arg10[%c2, %c0_47, %c0_48] : memref<3x7x128xf32, #tpu.memory_space<vmem>>, vector<1x7x128xf32>
    %116 = vector.shape_cast %115 : vector<1x7x128xf32> to vector<7x128xf32>
    %117 = vector.shape_cast %114 : vector<7x128xf32> to vector<1x7x128xf32>
    tpu.vector_store %arg10[%c2, %c0_47, %c0_48], %117 {strides = array<i32>} : memref<3x7x128xf32, #tpu.memory_space<vmem>>, vector<1x7x128xf32>,
    %118 = arith.addf %99, %114 : vector<7x128xf32>
    %cst_49 = arith.constant 0.333333343 : f32
    %119 = vector.broadcast %cst_49 : f32 to vector<7x128xf32>
    %120 = arith.mulf %118, %119 : vector<7x128xf32>
    %c0_50 = arith.constant 0 : index
    %c0_51 = arith.constant 0 : index
    %121 = vector.load %arg11[%c0_50, %c0_51] : memref<7x128xf32, #tpu.memory_space<vmem>>, vector<7x128xf32>
    tpu.vector_store %arg11[%c0_50, %c0_51], %120 {strides = array<i32>} : memref<7x128xf32, #tpu.memory_space<vmem>>, vector<7x128xf32>,
    return
  }
  func.func @transform_0(%arg0: i32) -> (i32, i32) {
    %c0_i32 = arith.constant 0 : i32
    %c0_i32_0 = arith.constant 0 : i32
    %c0_i32_1 = arith.constant 0 : i32
    return %c0_i32, %c0_i32_0 : i32, i32
  }
  func.func @transform_1(%arg0: i32) -> (i32, i32) {
    %c0_i32 = arith.constant 0 : i32
    %c0_i32_0 = arith.constant 0 : i32
    %c0_i32_1 = arith.constant 0 : i32
    return %c0_i32, %c0_i32_0 : i32, i32
  }
  func.func @transform_2(%arg0: i32) -> (i32, i32) {
    %c0_i32 = arith.constant 0 : i32
    %c0_i32_0 = arith.constant 0 : i32
    %c0_i32_1 = arith.constant 0 : i32
    return %c0_i32, %c0_i32_0 : i32, i32
  }
  func.func @transform_3(%arg0: i32) -> (i32, i32) {
    %c0_i32 = arith.constant 0 : i32
    %c0_i32_0 = arith.constant 0 : i32
    %c0_i32_1 = arith.constant 0 : i32
    return %c0_i32, %c0_i32_0 : i32, i32
  }
  func.func @transform_4(%arg0: i32) -> (i32, i32) {
    %c0_i32 = arith.constant 0 : i32
    %c0_i32_0 = arith.constant 0 : i32
    %c0_i32_1 = arith.constant 0 : i32
    return %c0_i32, %c0_i32_0 : i32, i32
  }
  func.func @transform_5(%arg0: i32) -> (i32, i32) {
    %c0_i32 = arith.constant 0 : i32
    %c0_i32_0 = arith.constant 0 : i32
    %c0_i32_1 = arith.constant 0 : i32
    return %c0_i32, %c0_i32_0 : i32, i32
  }
  func.func @transform_6(%arg0: i32) -> (i32, i32) {
    %c0_i32 = arith.constant 0 : i32
    %c0_i32_0 = arith.constant 0 : i32
    %c0_i32_1 = arith.constant 0 : i32
    return %c0_i32, %c0_i32_0 : i32, i32
  }
  func.func @transform_7(%arg0: i32) -> (i32, i32) {
    %c0_i32 = arith.constant 0 : i32
    %c0_i32_0 = arith.constant 0 : i32
    %c0_i32_1 = arith.constant 0 : i32
    return %c0_i32, %c0_i32_0 : i32, i32
  }
  func.func @transform_8(%arg0: i32) -> (i32, i32) {
    %c0_i32 = arith.constant 0 : i32
    %c0_i32_0 = arith.constant 0 : i32
    %c0_i32_1 = arith.constant 0 : i32
    return %c0_i32, %c0_i32_0 : i32, i32
  }
  func.func @transform_9(%arg0: i32) -> (i32, i32, i32) {
    %c0_i32 = arith.constant 0 : i32
    %c0_i32_0 = arith.constant 0 : i32
    %c0_i32_1 = arith.constant 0 : i32
    %c0_i32_2 = arith.constant 0 : i32
    return %c0_i32, %c0_i32_0, %c0_i32_1 : i32, i32, i32
  }
  func.func @transform_10(%arg0: i32) -> (i32, i32) {
    %c0_i32 = arith.constant 0 : i32
    %c0_i32_0 = arith.constant 0 : i32
    %c0_i32_1 = arith.constant 0 : i32
    return %c0_i32, %c0_i32_0 : i32, i32
  }
}

</mosaic_0001>

<llo_original>
// kernel: _device_forward.4
$region0: #{_device_forward.4}
  #allocation0 [shape = 'u32[]', space=smem, size = 0x4, offset = 0x4, fixed_abs, tag = 'smem constant byte address 0x4 - core index']
  #allocation1 [shape = 'u32[144,128]{1,0:T(1,128)}', space=vmem, size = 0x12000, scoped, tag = 'internal scratch']
  %s0 = inlined_call_operand.vmem [shape: f32[18,18,3], index: 0, kind: input, shape index: {}]
  %s1 = inlined_call_operand.vmem [shape: bf16[9,3,16], index: 1, kind: input, shape index: {}]
  %s2 = inlined_call_operand.vmem [shape: f32[1,16], index: 2, kind: input, shape index: {}]
  %s3 = inlined_call_operand.vmem [shape: f32[16,16,16], index: 3, kind: output, shape index: {}]
  %s4 = sld [smem:[#allocation0]]
  $region45: #{_device_forward.4} parent=0
    _
  %s6 = ssub.s32 1, %s4
  %s7 = scalar_select 0, %s6, %s4
  loop: start=0, step=1, limit=18
  $region2: #{_device_forward.4} parent=0 // loop_pre_header
    _
  $region3: #{_device_forward.4} parent=0 // loop_header
    %s9 = sphi 0, %s13
    %p10 = scmp.ge.s32.totalorder %s9, 18
    %s17 = sphi 0, %s17
    %s19 = sphi 0, %s17
    %s20 = sphi 0, %s19
    %s34 = sphi 0, %s20
    %s38 = sphi 0, %s38
    %s40 = sphi 0, %s38
    %s41 = sphi 0, %s40
    %s55 = sphi 0, %s41
    %s59 = sphi 0, %s59
    %s61 = sphi 0, %s59
    %s62 = sphi 0, %s61
    %s76 = sphi 0, %s62
    %s82 = sphi 0, %s84
    %s85 = sphi 0, %s82
    %s86 = sphi 0, %s85
    %s102 = sphi 0, %s86
  $region4: #{_device_forward.4} parent=0 // loop_header_branch
    %12 = sbr.rel (%p10) target = $region8
  $region5: #{_device_forward.4} parent=0 // loop_body
    %s14 = ssub.s32 %s9, 1
    %s15 = ssub.s32 %s9, 2
    %s16 = sadd.s32 %s9, 1
    %s18 = sadd.s32 %s17, 1
    %p21 = scmp.eq.s32.totalorder %s9, 15
    %p22 = scmp.ne.s32.totalorder %s17, %s19
    %p23 = scmp.eq.s32.totalorder %s9, 0
    %p24 = por %p22, %p23
    %p25 = scmp.ne.s32.totalorder %s17, %s19
    %p26 = scmp.eq.s32.totalorder %s14, 15
    %p27 = por %p25, %p26
    %p28 = scmp.ne.s32.totalorder %s19, %s20
    %p29 = scmp.eq.s32.totalorder %s14, 0
    %p30 = por %p28, %p29
    %p31 = scmp.ne.s32.totalorder %s19, %s20
    %p32 = scmp.eq.s32.totalorder %s15, 15
    %p33 = por %p31, %p32
    %p35 = scmp.ne.s32.totalorder %s20, %s34
    %p36 = scmp.eq.s32.totalorder %s15, 0
    %p37 = por %p35, %p36
    %s39 = sadd.s32 %s38, 1
    %p42 = scmp.eq.s32.totalorder %s9, 15
    %p43 = scmp.ne.s32.totalorder %s38, %s40
    %p44 = scmp.eq.s32.totalorder %s9, 0
    %p45 = por %p43, %p44
    %p46 = scmp.ne.s32.totalorder %s38, %s40
    %p47 = scmp.eq.s32.totalorder %s14, 15
    %p48 = por %p46, %p47
    %p49 = scmp.ne.s32.totalorder %s40, %s41
    %p50 = scmp.eq.s32.totalorder %s14, 0
    %p51 = por %p49, %p50
    %p52 = scmp.ne.s32.totalorder %s40, %s41
    %p53 = scmp.eq.s32.totalorder %s15, 15
    %p54 = por %p52, %p53
    %p56 = scmp.ne.s32.totalorder %s41, %s55
    %p57 = scmp.eq.s32.totalorder %s15, 0
    %p58 = por %p56, %p57
    %s60 = sadd.s32 %s59, 1
    %p63 = scmp.eq.s32.totalorder %s9, 15
    %p64 = scmp.ne.s32.totalorder %s59, %s61
    %p65 = scmp.eq.s32.totalorder %s9, 0
    %p66 = por %p64, %p65
    %p67 = scmp.ne.s32.totalorder %s59, %s61
    %p68 = scmp.eq.s32.totalorder %s14, 15
    %p69 = por %p67, %p68
    %p70 = scmp.ne.s32.totalorder %s61, %s62
    %p71 = scmp.eq.s32.totalorder %s14, 0
    %p72 = por %p70, %p71
    %p73 = scmp.ne.s32.totalorder %s61, %s62
    %p74 = scmp.eq.s32.totalorder %s15, 15
    %p75 = por %p73, %p74
    %p77 = scmp.ne.s32.totalorder %s62, %s76
    %p78 = scmp.eq.s32.totalorder %s15, 0
    %p79 = por %p77, %p78
    %s80 = ssub.s32 %s9, %s16
    %p81 = scmp.eq.s32.totalorder %s80, 0
    %s83 = sadd.s32 %s82, 1
    %s84 = scalar_select %p81, %s82, %s83
    %p87 = pneg %p81
    %p88 = scmp.eq.s32.totalorder %s9, 15
    %p89 = por %p87, %p88
    %p90 = scmp.ne.s32.totalorder %s82, %s85
    %p91 = scmp.eq.s32.totalorder %s9, 0
    %p92 = por %p90, %p91
    %p93 = scmp.ne.s32.totalorder %s82, %s85
    %p94 = scmp.eq.s32.totalorder %s14, 15
    %p95 = por %p93, %p94
    %p96 = scmp.ne.s32.totalorder %s85, %s86
    %p97 = scmp.eq.s32.totalorder %s14, 0
    %p98 = por %p96, %p97
    %p99 = scmp.ne.s32.totalorder %s85, %s86
    %p100 = scmp.eq.s32.totalorder %s15, 15
    %p101 = por %p99, %p100
    %p103 = scmp.ne.s32.totalorder %s86, %s102
    %p104 = scmp.eq.s32.totalorder %s15, 0
    %p105 = por %p103, %p104
    %p106 = scmp.le.s32.totalorder 1, %s9
    %p107 = scmp.lt.s32.totalorder %s9, 17
    %p108 = pnand %p106, %p107
    %p109 = pneg %p108
    // Predicated region
    $region9: #{_device_forward.4} parent=5 // pred_check
      _
    $region10: #{_device_forward.4} parent=5 // pred_check_branch
      %111 = sbr.rel (%p108) target = $region12
    $region11: #{_device_forward.4} parent=5 // pred_region
      %s112 = ssub.s32 %s9, 1
      // Predicated region
      $region13: #{_device_forward.4} parent=11 // pred_check
        %p113 = pneg %p30
      $region14: #{_device_forward.4} parent=11 // pred_check_branch
        %115 = sbr.rel (%p113) target = $region16
      $region15: #{_device_forward.4} parent=11 // pred_region
        _
      $region16: #{_device_forward.4} parent=11 // pred_fallthru
        _
      // Predicated region
      $region17: #{_device_forward.4} parent=11 // pred_check
        %p116 = pneg %p51
      $region18: #{_device_forward.4} parent=11 // pred_check_branch
        %118 = sbr.rel (%p116) target = $region20
      $region19: #{_device_forward.4} parent=11 // pred_region
        _
      $region20: #{_device_forward.4} parent=11 // pred_fallthru
        _
      // Predicated region
      $region21: #{_device_forward.4} parent=11 // pred_check
        %p119 = pneg %p72
      $region22: #{_device_forward.4} parent=11 // pred_check_branch
        %121 = sbr.rel (%p119) target = $region24
      $region23: #{_device_forward.4} parent=11 // pred_region
        _
      $region24: #{_device_forward.4} parent=11 // pred_fallthru
        _
    $region12: #{_device_forward.4} parent=5 // pred_fallthru
      _
    %p122 = scmp.lt.s32.totalorder %s9, 16
    // Predicated region
    $region25: #{_device_forward.4} parent=5 // pred_check
      %p123 = pneg %p122
    $region26: #{_device_forward.4} parent=5 // pred_check_branch
      %125 = sbr.rel (%p123) target = $region28
    $region27: #{_device_forward.4} parent=5 // pred_region
      _
    $region28: #{_device_forward.4} parent=5 // pred_fallthru
      _
    %p126 = scmp.le.s32.totalorder 1, %s9
    %p127 = scmp.lt.s32.totalorder %s9, 17
    %p128 = pnand %p126, %p127
    %p129 = pneg %p128
    // Predicated region
    $region29: #{_device_forward.4} parent=5 // pred_check
      _
    $region30: #{_device_forward.4} parent=5 // pred_check_branch
      %131 = sbr.rel (%p128) target = $region32
    $region31: #{_device_forward.4} parent=5 // pred_region
      %s132 = ssub.s32 %s9, 1
      %p133 = pneg %p30
      %p134 = pneg %p27
      %p135 = pneg %p51
      %p136 = pneg %p48
      %p137 = pneg %p72
      %p138 = pneg %p69
      %p139 = pneg %p98
      %p140 = pneg %p95
      %p141 = scmp.lt.s32.totalorder %s14, 15
      %s142 = scalar_select %p141, %s14, 15
      %s143 = smul.addr %s142, 2
      %s144 = smul.addr %s143, 8
      %s145 = scalar_lea.vmem %s3, %s144
      %p146 = scmp.lt.s32.totalorder %s14, 15
      %s147 = scalar_select %p146, %s14, 15
      %s148 = smul.addr %s147, 2
      %s149 = smul.addr %s148, 8
      %s150 = scalar_lea.vmem %s3, %s149
      %s152 = smul.u32 %s14, 24
      %s153 = scalar_lea.vmem %s0, %s152
      %v154 = vld [vmem:[%s153] sm:$0xff]
      %v155 = vld [vmem:[%s153 + $0x8] sm:$0xff]
      %v156 = vld [vmem:[%s1] sm:$0x3]
      %v157 = vpack.c.bf16 %v155, %v154
      %v158 = vld [vmem:[%s153 + $0x1] sm:$0xff]
      %v159 = vld [vmem:[%s153 + $0x9] sm:$0xff]
      %s160 = scalar_lea.vmem %s1, 2
      %v161 = vld [vmem:[%s160] sm:$0x3]
      %v162 = vpack.c.bf16 %v159, %v158
      %vm163 = vcmask 23552
      %v165 = vsel %vm163, %v162, 0
      %vm167 = vcmask 1040384
      %vm168 = vcmask 1041408
      %v169 = vsel %vm167, 4294967295, 65535
      %v170 = vsel %vm168, %v169, 0
      %v172 = vand.u32 %v161, %v170
      %174 = vmatprep.subr.bf16.mxu0 0
      %175 = vmatpush1.bf16.msra.mxu0 0
      %176 = vmatprep.subr.bf16.mxu0 0
      %177 = vmatpush1.bf16.msra.mxu0 0
      %178 = vmatprep.subr.bf16.mxu0 0
      %179 = vmatpush1.bf16.msra.mxu0 0
      %180 = vmatprep.subr.bf16.mxu0 0
      %181 = vmatpush1.bf16.msra.mxu0 0
      %182 = vmatprep.subr.bf16.mxu0 0
      %183 = vmatpush1.bf16.msra.mxu0 0
      %184 = vmatprep.subr.bf16.mxu0 0
      %185 = vmatpush1.bf16.msra.mxu0 0
      %186 = vmatprep.subr.bf16.mxu0 0
      %187 = vmatpush1.bf16.msra.mxu0 0
      %188 = vmatprep.subr.bf16.mxu0 0
      %189 = vmatpush1.bf16.msra.mxu0 %v172
      %190 = vmatprep.subr.bf16.mxu0 0
      %191 = vmatpush2.bf16.msra.mxu0 0
      %192 = vmatprep.subr.bf16.mxu0 0
      %193 = vmatpush2.bf16.msra.mxu0 0
      %194 = vmatprep.subr.bf16.mxu0 0
      %195 = vmatpush2.bf16.msra.mxu0 0
      %196 = vmatprep.subr.bf16.mxu0 0
      %197 = vmatpush2.bf16.msra.mxu0 0
      %198 = vmatprep.subr.bf16.mxu0 0
      %199 = vmatpush2.bf16.msra.mxu0 0
      %200 = vmatprep.subr.bf16.mxu0 0
      %201 = vmatpush2.bf16.msra.mxu0 0
      %202 = vmatprep.subr.bf16.mxu0 0
      %203 = vmatpush2.bf16.msra.mxu0 0
      %204 = vmatprep.subr.bf16.mxu0 0
      %205 = vmatpush2.bf16.msra.mxu0 0
      %206 = vmatprep.mubr.bf16.mxu0 0
      %207 = vmatmul.mubr.bf16.gmra.mxu0 %v165
      %v208 = vpop.f32.mrf.mxu0
      %v209 = vadd.f32 0.0, %v208
      %v210 = vpop.f32.mrf.mxu0
      %v211 = vpop.f32.mrf.mxu0
      %v212 = vadd.f32 0.0, %v211
      %v213 = vpop.f32.mrf.mxu0
      %214 = vdwg.mxu0
      %v216 = vsel %vm163, %v157, 0
      %v219 = vand.u32 %v156, %v170
      %221 = vmatprep.subr.bf16.mxu0 0
      %222 = vmatpush1.bf16.msra.mxu0 0
      %223 = vmatprep.subr.bf16.mxu0 0
      %224 = vmatpush1.bf16.msra.mxu0 0
      %225 = vmatprep.subr.bf16.mxu0 0
      %226 = vmatpush1.bf16.msra.mxu0 0
      %227 = vmatprep.subr.bf16.mxu0 0
      %228 = vmatpush1.bf16.msra.mxu0 0
      %229 = vmatprep.subr.bf16.mxu0 0
      %230 = vmatpush1.bf16.msra.mxu0 0
      %231 = vmatprep.subr.bf16.mxu0 0
      %232 = vmatpush1.bf16.msra.mxu0 0
      %233 = vmatprep.subr.bf16.mxu0 0
      %234 = vmatpush1.bf16.msra.mxu0 0
      %235 = vmatprep.subr.bf16.mxu0 0
      %236 = vmatpush1.bf16.msra.mxu0 %v219
      %237 = vmatprep.subr.bf16.mxu0 0
      %238 = vmatpush2.bf16.msra.mxu0 0
      %239 = vmatprep.subr.bf16.mxu0 0
      %240 = vmatpush2.bf16.msra.mxu0 0
      %241 = vmatprep.subr.bf16.mxu0 0
      %242 = vmatpush2.bf16.msra.mxu0 0
      %243 = vmatprep.subr.bf16.mxu0 0
      %244 = vmatpush2.bf16.msra.mxu0 0
      %245 = vmatprep.subr.bf16.mxu0 0
      %246 = vmatpush2.bf16.msra.mxu0 0
      %247 = vmatprep.subr.bf16.mxu0 0
      %248 = vmatpush2.bf16.msra.mxu0 0
      %249 = vmatprep.subr.bf16.mxu0 0
      %250 = vmatpush2.bf16.msra.mxu0 0
      %251 = vmatprep.subr.bf16.mxu0 0
      %252 = vmatpush2.bf16.msra.mxu0 0
      %253 = vmatprep.mubr.bf16.mxu0 0
      %254 = vmatmul.mubr.bf16.gmra.mxu0 %v216
      %v255 = vpop.f32.mrf.mxu0
      %v256 = vadd.f32 %v209, %v255
      %v257 = vpop.f32.mrf.mxu0
      %v258 = vpop.f32.mrf.mxu0
      %v259 = vadd.f32 %v212, %v258
      %v260 = vpop.f32.mrf.mxu0
      %261 = vdwg.mxu0
      %v262 = vld [vmem:[%s153 + $0x2] sm:$0xff]
      %v263 = vld [vmem:[%s153 + $0xa] sm:$0xff]
      %s264 = scalar_lea.vmem %s1, 4
      %v265 = vld [vmem:[%s264] sm:$0x3]
      %v266 = vpack.c.bf16 %v263, %v262
      %v268 = vsel %vm163, %v266, 0
      %v271 = vand.u32 %v265, %v170
      %273 = vmatprep.subr.bf16.mxu0 0
      %274 = vmatpush1.bf16.msra.mxu0 0
      %275 = vmatprep.subr.bf16.mxu0 0
      %276 = vmatpush1.bf16.msra.mxu0 0
      %277 = vmatprep.subr.bf16.mxu0 0
      %278 = vmatpush1.bf16.msra.mxu0 0
      %279 = vmatprep.subr.bf16.mxu0 0
      %280 = vmatpush1.bf16.msra.mxu0 0
      %281 = vmatprep.subr.bf16.mxu0 0
      %282 = vmatpush1.bf16.msra.mxu0 0
      %283 = vmatprep.subr.bf16.mxu0 0
      %284 = vmatpush1.bf16.msra.mxu0 0
      %285 = vmatprep.subr.bf16.mxu0 0
      %286 = vmatpush1.bf16.msra.mxu0 0
      %287 = vmatprep.subr.bf16.mxu0 0
      %288 = vmatpush1.bf16.msra.mxu0 %v271
      %289 = vmatprep.subr.bf16.mxu0 0
      %290 = vmatpush2.bf16.msra.mxu0 0
      %291 = vmatprep.subr.bf16.mxu0 0
      %292 = vmatpush2.bf16.msra.mxu0 0
      %293 = vmatprep.subr.bf16.mxu0 0
      %294 = vmatpush2.bf16.msra.mxu0 0
      %295 = vmatprep.subr.bf16.mxu0 0
      %296 = vmatpush2.bf16.msra.mxu0 0
      %297 = vmatprep.subr.bf16.mxu0 0
      %298 = vmatpush2.bf16.msra.mxu0 0
      %299 = vmatprep.subr.bf16.mxu0 0
      %300 = vmatpush2.bf16.msra.mxu0 0
      %301 = vmatprep.subr.bf16.mxu0 0
      %302 = vmatpush2.bf16.msra.mxu0 0
      %303 = vmatprep.subr.bf16.mxu0 0
      %304 = vmatpush2.bf16.msra.mxu0 0
      %305 = vmatprep.mubr.bf16.mxu0 0
      %306 = vmatmul.mubr.bf16.gmra.mxu0 %v268
      %v307 = vpop.f32.mrf.mxu0
      %v308 = vadd.f32 0.0, %v307
      %v309 = vpop.f32.mrf.mxu0
      %v310 = vpop.f32.mrf.mxu0
      %v311 = vadd.f32 0.0, %v310
      %v312 = vpop.f32.mrf.mxu0
      %313 = vdwg.mxu0
      %v314 = vadd.f32 %v256, %v308
      %v315 = vadd.f32 %v259, %v311
      %s316 = sadd.s32 %s14, 1
      %s317 = smul.u32 %s316, 24
      %s318 = scalar_lea.vmem %s0, %s317
      %v319 = vld [vmem:[%s318] sm:$0xff]
      %v320 = vld [vmem:[%s318 + $0x8] sm:$0xff]
      %s321 = scalar_lea.vmem %s1, 6
      %v322 = vld [vmem:[%s321] sm:$0x3]
      %v323 = vpack.c.bf16 %v320, %v319
      %v325 = vsel %vm163, %v323, 0
      %v328 = vand.u32 %v322, %v170
      %330 = vmatprep.subr.bf16.mxu0 0
      %331 = vmatpush1.bf16.msra.mxu0 0
      %332 = vmatprep.subr.bf16.mxu0 0
      %333 = vmatpush1.bf16.msra.mxu0 0
      %334 = vmatprep.subr.bf16.mxu0 0
      %335 = vmatpush1.bf16.msra.mxu0 0
      %336 = vmatprep.subr.bf16.mxu0 0
      %337 = vmatpush1.bf16.msra.mxu0 0
      %338 = vmatprep.subr.bf16.mxu0 0
      %339 = vmatpush1.bf16.msra.mxu0 0
      %340 = vmatprep.subr.bf16.mxu0 0
      %341 = vmatpush1.bf16.msra.mxu0 0
      %342 = vmatprep.subr.bf16.mxu0 0
      %343 = vmatpush1.bf16.msra.mxu0 0
      %344 = vmatprep.subr.bf16.mxu0 0
      %345 = vmatpush1.bf16.msra.mxu0 %v328
      %346 = vmatprep.subr.bf16.mxu0 0
      %347 = vmatpush2.bf16.msra.mxu0 0
      %348 = vmatprep.subr.bf16.mxu0 0
      %349 = vmatpush2.bf16.msra.mxu0 0
      %350 = vmatprep.subr.bf16.mxu0 0
      %351 = vmatpush2.bf16.msra.mxu0 0
      %352 = vmatprep.subr.bf16.mxu0 0
      %353 = vmatpush2.bf16.msra.mxu0 0
      %354 = vmatprep.subr.bf16.mxu0 0
      %355 = vmatpush2.bf16.msra.mxu0 0
      %356 = vmatprep.subr.bf16.mxu0 0
      %357 = vmatpush2.bf16.msra.mxu0 0
      %358 = vmatprep.subr.bf16.mxu0 0
      %359 = vmatpush2.bf16.msra.mxu0 0
      %360 = vmatprep.subr.bf16.mxu0 0
      %361 = vmatpush2.bf16.msra.mxu0 0
      %362 = vmatprep.mubr.bf16.mxu0 0
      %363 = vmatmul.mubr.bf16.gmra.mxu0 %v325
      %v364 = vpop.f32.mrf.mxu0
      %v365 = vadd.f32 0.0, %v364
      %v366 = vpop.f32.mrf.mxu0
      %v367 = vpop.f32.mrf.mxu0
      %v368 = vadd.f32 0.0, %v367
      %v369 = vpop.f32.mrf.mxu0
      %370 = vdwg.mxu0
      %v371 = vadd.f32 %v314, %v365
      %v372 = vadd.f32 %v315, %v368
      %v373 = vld [vmem:[%s318 + $0x1] sm:$0xff]
      %v374 = vld [vmem:[%s318 + $0x9] sm:$0xff]
      %s375 = scalar_lea.vmem %s1, 8
      %v376 = vld [vmem:[%s375] sm:$0x3]
      %v377 = vpack.c.bf16 %v374, %v373
      %v379 = vsel %vm163, %v377, 0
      %v382 = vand.u32 %v376, %v170
      %384 = vmatprep.subr.bf16.mxu0 0
      %385 = vmatpush1.bf16.msra.mxu0 0
      %386 = vmatprep.subr.bf16.mxu0 0
      %387 = vmatpush1.bf16.msra.mxu0 0
      %388 = vmatprep.subr.bf16.mxu0 0
      %389 = vmatpush1.bf16.msra.mxu0 0
      %390 = vmatprep.subr.bf16.mxu0 0
      %391 = vmatpush1.bf16.msra.mxu0 0
      %392 = vmatprep.subr.bf16.mxu0 0
      %393 = vmatpush1.bf16.msra.mxu0 0
      %394 = vmatprep.subr.bf16.mxu0 0
      %395 = vmatpush1.bf16.msra.mxu0 0
      %396 = vmatprep.subr.bf16.mxu0 0
      %397 = vmatpush1.bf16.msra.mxu0 0
      %398 = vmatprep.subr.bf16.mxu0 0
      %399 = vmatpush1.bf16.msra.mxu0 %v382
      %400 = vmatprep.subr.bf16.mxu0 0
      %401 = vmatpush2.bf16.msra.mxu0 0
      %402 = vmatprep.subr.bf16.mxu0 0
      %403 = vmatpush2.bf16.msra.mxu0 0
      %404 = vmatprep.subr.bf16.mxu0 0
      %405 = vmatpush2.bf16.msra.mxu0 0
      %406 = vmatprep.subr.bf16.mxu0 0
      %407 = vmatpush2.bf16.msra.mxu0 0
      %408 = vmatprep.subr.bf16.mxu0 0
      %409 = vmatpush2.bf16.msra.mxu0 0
      %410 = vmatprep.subr.bf16.mxu0 0
      %411 = vmatpush2.bf16.msra.mxu0 0
      %412 = vmatprep.subr.bf16.mxu0 0
      %413 = vmatpush2.bf16.msra.mxu0 0
      %414 = vmatprep.subr.bf16.mxu0 0
      %415 = vmatpush2.bf16.msra.mxu0 0
      %416 = vmatprep.mubr.bf16.mxu0 0
      %417 = vmatmul.mubr.bf16.gmra.mxu0 %v379
      %v418 = vpop.f32.mrf.mxu0
      %v419 = vadd.f32 0.0, %v418
      %v420 = vpop.f32.mrf.mxu0
      %v421 = vpop.f32.mrf.mxu0
      %v422 = vadd.f32 0.0, %v421
      %v423 = vpop.f32.mrf.mxu0
      %424 = vdwg.mxu0
      %v425 = vadd.f32 %v371, %v419
      %v426 = vadd.f32 %v372, %v422
      %v427 = vld [vmem:[%s318 + $0x2] sm:$0xff]
      %v428 = vld [vmem:[%s318 + $0xa] sm:$0xff]
      %s429 = scalar_lea.vmem %s1, 10
      %v430 = vld [vmem:[%s429] sm:$0x3]
      %v431 = vpack.c.bf16 %v428, %v427
      %v433 = vsel %vm163, %v431, 0
      %v436 = vand.u32 %v430, %v170
      %438 = vmatprep.subr.bf16.mxu0 0
      %439 = vmatpush1.bf16.msra.mxu0 0
      %440 = vmatprep.subr.bf16.mxu0 0
      %441 = vmatpush1.bf16.msra.mxu0 0
      %442 = vmatprep.subr.bf16.mxu0 0
      %443 = vmatpush1.bf16.msra.mxu0 0
      %444 = vmatprep.subr.bf16.mxu0 0
      %445 = vmatpush1.bf16.msra.mxu0 0
      %446 = vmatprep.subr.bf16.mxu0 0
      %447 = vmatpush1.bf16.msra.mxu0 0
      %448 = vmatprep.subr.bf16.mxu0 0
      %449 = vmatpush1.bf16.msra.mxu0 0
      %450 = vmatprep.subr.bf16.mxu0 0
      %451 = vmatpush1.bf16.msra.mxu0 0
      %452 = vmatprep.subr.bf16.mxu0 0
      %453 = vmatpush1.bf16.msra.mxu0 %v436
      %454 = vmatprep.subr.bf16.mxu0 0
      %455 = vmatpush2.bf16.msra.mxu0 0
      %456 = vmatprep.subr.bf16.mxu0 0
      %457 = vmatpush2.bf16.msra.mxu0 0
      %458 = vmatprep.subr.bf16.mxu0 0
      %459 = vmatpush2.bf16.msra.mxu0 0
      %460 = vmatprep.subr.bf16.mxu0 0
      %461 = vmatpush2.bf16.msra.mxu0 0
      %462 = vmatprep.subr.bf16.mxu0 0
      %463 = vmatpush2.bf16.msra.mxu0 0
      %464 = vmatprep.subr.bf16.mxu0 0
      %465 = vmatpush2.bf16.msra.mxu0 0
      %466 = vmatprep.subr.bf16.mxu0 0
      %467 = vmatpush2.bf16.msra.mxu0 0
      %468 = vmatprep.subr.bf16.mxu0 0
      %469 = vmatpush2.bf16.msra.mxu0 0
      %470 = vmatprep.mubr.bf16.mxu0 0
      %471 = vmatmul.mubr.bf16.gmra.mxu0 %v433
      %v472 = vpop.f32.mrf.mxu0
      %v473 = vadd.f32 0.0, %v472
      %v474 = vpop.f32.mrf.mxu0
      %v475 = vpop.f32.mrf.mxu0
      %v476 = vadd.f32 0.0, %v475
      %v477 = vpop.f32.mrf.mxu0
      %478 = vdwg.mxu0
      %v479 = vadd.f32 %v425, %v473
      %v480 = vadd.f32 %v426, %v476
      %s481 = sadd.s32 %s14, 2
      %s482 = smul.u32 %s481, 24
      %s483 = scalar_lea.vmem %s0, %s482
      %v484 = vld [vmem:[%s483] sm:$0xff]
      %v485 = vld [vmem:[%s483 + $0x8] sm:$0xff]
      %s486 = scalar_lea.vmem %s1, 12
      %v487 = vld [vmem:[%s486] sm:$0x3]
      %v488 = vpack.c.bf16 %v485, %v484
      %v490 = vsel %vm163, %v488, 0
      %v493 = vand.u32 %v487, %v170
      %495 = vmatprep.subr.bf16.mxu0 0
      %496 = vmatpush1.bf16.msra.mxu0 0
      %497 = vmatprep.subr.bf16.mxu0 0
      %498 = vmatpush1.bf16.msra.mxu0 0
      %499 = vmatprep.subr.bf16.mxu0 0
      %500 = vmatpush1.bf16.msra.mxu0 0
      %501 = vmatprep.subr.bf16.mxu0 0
      %502 = vmatpush1.bf16.msra.mxu0 0
      %503 = vmatprep.subr.bf16.mxu0 0
      %504 = vmatpush1.bf16.msra.mxu0 0
      %505 = vmatprep.subr.bf16.mxu0 0
      %506 = vmatpush1.bf16.msra.mxu0 0
      %507 = vmatprep.subr.bf16.mxu0 0
      %508 = vmatpush1.bf16.msra.mxu0 0
      %509 = vmatprep.subr.bf16.mxu0 0
      %510 = vmatpush1.bf16.msra.mxu0 %v493
      %511 = vmatprep.subr.bf16.mxu0 0
      %512 = vmatpush2.bf16.msra.mxu0 0
      %513 = vmatprep.subr.bf16.mxu0 0
      %514 = vmatpush2.bf16.msra.mxu0 0
      %515 = vmatprep.subr.bf16.mxu0 0
      %516 = vmatpush2.bf16.msra.mxu0 0
      %517 = vmatprep.subr.bf16.mxu0 0
      %518 = vmatpush2.bf16.msra.mxu0 0
      %519 = vmatprep.subr.bf16.mxu0 0
      %520 = vmatpush2.bf16.msra.mxu0 0
      %521 = vmatprep.subr.bf16.mxu0 0
      %522 = vmatpush2.bf16.msra.mxu0 0
      %523 = vmatprep.subr.bf16.mxu0 0
      %524 = vmatpush2.bf16.msra.mxu0 0
      %525 = vmatprep.subr.bf16.mxu0 0
      %526 = vmatpush2.bf16.msra.mxu0 0
      %527 = vmatprep.mubr.bf16.mxu0 0
      %528 = vmatmul.mubr.bf16.gmra.mxu0 %v490
      %v529 = vpop.f32.mrf.mxu0
      %v530 = vadd.f32 0.0, %v529
      %v531 = vpop.f32.mrf.mxu0
      %v532 = vpop.f32.mrf.mxu0
      %v533 = vadd.f32 0.0, %v532
      %v534 = vpop.f32.mrf.mxu0
      %535 = vdwg.mxu0
      %v536 = vadd.f32 %v479, %v530
      %v537 = vadd.f32 %v480, %v533
      %v538 = vld [vmem:[%s483 + $0x1] sm:$0xff]
      %v539 = vld [vmem:[%s483 + $0x9] sm:$0xff]
      %s540 = scalar_lea.vmem %s1, 14
      %v541 = vld [vmem:[%s540] sm:$0x3]
      %v542 = vpack.c.bf16 %v539, %v538
      %v544 = vsel %vm163, %v542, 0
      %v547 = vand.u32 %v541, %v170
      %549 = vmatprep.subr.bf16.mxu0 0
      %550 = vmatpush1.bf16.msra.mxu0 0
      %551 = vmatprep.subr.bf16.mxu0 0
      %552 = vmatpush1.bf16.msra.mxu0 0
      %553 = vmatprep.subr.bf16.mxu0 0
      %554 = vmatpush1.bf16.msra.mxu0 0
      %555 = vmatprep.subr.bf16.mxu0 0
      %556 = vmatpush1.bf16.msra.mxu0 0
      %557 = vmatprep.subr.bf16.mxu0 0
      %558 = vmatpush1.bf16.msra.mxu0 0
      %559 = vmatprep.subr.bf16.mxu0 0
      %560 = vmatpush1.bf16.msra.mxu0 0
      %561 = vmatprep.subr.bf16.mxu0 0
      %562 = vmatpush1.bf16.msra.mxu0 0
      %563 = vmatprep.subr.bf16.mxu0 0
      %564 = vmatpush1.bf16.msra.mxu0 %v547
      %565 = vmatprep.subr.bf16.mxu0 0
      %566 = vmatpush2.bf16.msra.mxu0 0
      %567 = vmatprep.subr.bf16.mxu0 0
      %568 = vmatpush2.bf16.msra.mxu0 0
      %569 = vmatprep.subr.bf16.mxu0 0
      %570 = vmatpush2.bf16.msra.mxu0 0
      %571 = vmatprep.subr.bf16.mxu0 0
      %572 = vmatpush2.bf16.msra.mxu0 0
      %573 = vmatprep.subr.bf16.mxu0 0
      %574 = vmatpush2.bf16.msra.mxu0 0
      %575 = vmatprep.subr.bf16.mxu0 0
      %576 = vmatpush2.bf16.msra.mxu0 0
      %577 = vmatprep.subr.bf16.mxu0 0
      %578 = vmatpush2.bf16.msra.mxu0 0
      %579 = vmatprep.subr.bf16.mxu0 0
      %580 = vmatpush2.bf16.msra.mxu0 0
      %581 = vmatprep.mubr.bf16.mxu0 0
      %582 = vmatmul.mubr.bf16.gmra.mxu0 %v544
      %v583 = vpop.f32.mrf.mxu0
      %v584 = vadd.f32 0.0, %v583
      %v585 = vpop.f32.mrf.mxu0
      %v586 = vpop.f32.mrf.mxu0
      %v587 = vadd.f32 0.0, %v586
      %v588 = vpop.f32.mrf.mxu0
      %589 = vdwg.mxu0
      %v590 = vadd.f32 %v536, %v584
      %v591 = vadd.f32 %v537, %v587
      %v592 = vld [vmem:[%s483 + $0x2] sm:$0xff]
      %v593 = vld [vmem:[%s483 + $0xa] sm:$0xff]
      %s594 = scalar_lea.vmem %s1, 16
      %v595 = vld [vmem:[%s594] sm:$0x3]
      %v596 = vpack.c.bf16 %v593, %v592
      %v598 = vsel %vm163, %v596, 0
      %v601 = vand.u32 %v595, %v170
      %603 = vmatprep.subr.bf16.mxu0 0
      %604 = vmatpush1.bf16.msra.mxu0 0
      %605 = vmatprep.subr.bf16.mxu0 0
      %606 = vmatpush1.bf16.msra.mxu0 0
      %607 = vmatprep.subr.bf16.mxu0 0
      %608 = vmatpush1.bf16.msra.mxu0 0
      %609 = vmatprep.subr.bf16.mxu0 0
      %610 = vmatpush1.bf16.msra.mxu0 0
      %611 = vmatprep.subr.bf16.mxu0 0
      %612 = vmatpush1.bf16.msra.mxu0 0
      %613 = vmatprep.subr.bf16.mxu0 0
      %614 = vmatpush1.bf16.msra.mxu0 0
      %615 = vmatprep.subr.bf16.mxu0 0
      %616 = vmatpush1.bf16.msra.mxu0 0
      %617 = vmatprep.subr.bf16.mxu0 0
      %618 = vmatpush1.bf16.msra.mxu0 %v601
      %619 = vmatprep.subr.bf16.mxu0 0
      %620 = vmatpush2.bf16.msra.mxu0 0
      %621 = vmatprep.subr.bf16.mxu0 0
      %622 = vmatpush2.bf16.msra.mxu0 0
      %623 = vmatprep.subr.bf16.mxu0 0
      %624 = vmatpush2.bf16.msra.mxu0 0
      %625 = vmatprep.subr.bf16.mxu0 0
      %626 = vmatpush2.bf16.msra.mxu0 0
      %627 = vmatprep.subr.bf16.mxu0 0
      %628 = vmatpush2.bf16.msra.mxu0 0
      %629 = vmatprep.subr.bf16.mxu0 0
      %630 = vmatpush2.bf16.msra.mxu0 0
      %631 = vmatprep.subr.bf16.mxu0 0
      %632 = vmatpush2.bf16.msra.mxu0 0
      %633 = vmatprep.subr.bf16.mxu0 0
      %634 = vmatpush2.bf16.msra.mxu0 0
      %635 = vmatprep.mubr.bf16.mxu0 0
      %636 = vmatmul.mubr.bf16.gmra.mxu0 %v598
      %v637 = vpop.f32.mrf.mxu0
      %v638 = vadd.f32 0.0, %v637
      %v639 = vpop.f32.mrf.mxu0
      %v640 = vpop.f32.mrf.mxu0
      %v641 = vadd.f32 0.0, %v640
      %v642 = vpop.f32.mrf.mxu0
      %643 = vdwg.mxu0
      %v644 = vadd.f32 %v590, %v638
      %v645 = vadd.f32 %v591, %v641
      %v646 = vld [vmem:[%s2] sm:$0x1]
      %v648 = vlaneseq
      %v649 = vshrl.u32 %v648, 7
      %v650 = vsub.s32 0, %v649
      %v651 = vrot.slane %v646, %v650
      %v653 = vadd.f32 %v644, %v651
      %v654 = vadd.f32 %v645, %v651
      %v655 = vmax.f32 %v653, 0.0
      %v656 = vmax.f32 %v654, 0.0
      %vm657 = vcmask 130048
      %658 = vst.msk [vmem:[%s150] sm:$0xff] %vm657, %v655
      %659 = vst.msk [vmem:[%s150 + $0x8] sm:$0xff] %vm657, %v656
      %p660 = scmp.lt.s32.totalorder %s14, 15
      %s661 = scalar_select %p660, %s14, 15
      %s662 = smul.addr %s661, 2
      %s663 = smul.addr %s662, 8
      %s664 = scalar_lea.vmem %s3, %s663
      // Predicated region
      $region33: #{_device_forward.4} parent=31 // pred_check
        %p665 = pneg %p95
      $region34: #{_device_forward.4} parent=31 // pred_check_branch
        %667 = sbr.rel (%p665) target = $region36
      $region35: #{_device_forward.4} parent=31 // pred_region
        _
      $region36: #{_device_forward.4} parent=31 // pred_fallthru
        _
    $region32: #{_device_forward.4} parent=5 // pred_fallthru
      _
    %p668 = scmp.le.s32.totalorder 2, %s9
    // Predicated region
    $region37: #{_device_forward.4} parent=5 // pred_check
      %p669 = pneg %p668
    $region38: #{_device_forward.4} parent=5 // pred_check_branch
      %671 = sbr.rel (%p669) target = $region40
    $region39: #{_device_forward.4} parent=5 // pred_region
      %s672 = ssub.s32 %s9, 2
      // Predicated region
      $region41: #{_device_forward.4} parent=39 // pred_check
        %p673 = pneg %p101
      $region42: #{_device_forward.4} parent=39 // pred_check_branch
        %675 = sbr.rel (%p673) target = $region44
      $region43: #{_device_forward.4} parent=39 // pred_region
        %p676 = scmp.lt.s32.totalorder %s15, 15
        %s677 = scalar_select %p676, %s15, 15
        %s678 = smul.addr %s677, 2
        %s679 = smul.addr %s678, 8
        %s680 = scalar_lea.vmem %s3, %s679
      $region44: #{_device_forward.4} parent=39 // pred_fallthru
        _
    $region40: #{_device_forward.4} parent=5 // pred_fallthru
      _
  $region6: #{_device_forward.4} parent=0 // loop_footer
    %s13 = sadd.s32 1, %s9
  $region7: #{_device_forward.4} parent=0 // loop_footer_branch
    %8 = sbr.rel target = $region3
  $region8: #{_device_forward.4} parent=0 // loop_exit
    _

// kernel: _device_forward.5
$region0: #{_device_forward.5}
  #allocation0 [shape = 'u32[]', space=smem, size = 0x4, offset = 0x4, fixed_abs, tag = 'smem constant byte address 0x4 - core index']
  #allocation1 [shape = 'u32[144,128]{1,0:T(1,128)}', space=vmem, size = 0x12000, scoped, tag = 'internal scratch']
  %s0 = inlined_call_operand.vmem [shape: f32[10,10,16], index: 0, kind: input, shape index: {}]
  %s1 = inlined_call_operand.vmem [shape: bf16[9,16,32], index: 1, kind: input, shape index: {}]
  %s2 = inlined_call_operand.vmem [shape: f32[1,32], index: 2, kind: input, shape index: {}]
  %s3 = inlined_call_operand.vmem [shape: f32[8,8,32], index: 3, kind: output, shape index: {}]
  %s4 = sld [smem:[#allocation0]]
  $region45: #{_device_forward.5} parent=0
    _
  %s6 = ssub.s32 1, %s4
  %s7 = scalar_select 0, %s6, %s4
  loop: start=0, step=1, limit=10
  $region2: #{_device_forward.5} parent=0 // loop_pre_header
    _
  $region3: #{_device_forward.5} parent=0 // loop_header
    %s9 = sphi 0, %s13
    %p10 = scmp.ge.s32.totalorder %s9, 10
    %s17 = sphi 0, %s17
    %s19 = sphi 0, %s17
    %s20 = sphi 0, %s19
    %s34 = sphi 0, %s20
    %s38 = sphi 0, %s38
    %s40 = sphi 0, %s38
    %s41 = sphi 0, %s40
    %s55 = sphi 0, %s41
    %s59 = sphi 0, %s59
    %s61 = sphi 0, %s59
    %s62 = sphi 0, %s61
    %s76 = sphi 0, %s62
    %s82 = sphi 0, %s84
    %s85 = sphi 0, %s82
    %s86 = sphi 0, %s85
    %s102 = sphi 0, %s86
  $region4: #{_device_forward.5} parent=0 // loop_header_branch
    %12 = sbr.rel (%p10) target = $region8
  $region5: #{_device_forward.5} parent=0 // loop_body
    %s14 = ssub.s32 %s9, 1
    %s15 = ssub.s32 %s9, 2
    %s16 = sadd.s32 %s9, 1
    %s18 = sadd.s32 %s17, 1
    %p21 = scmp.eq.s32.totalorder %s9, 7
    %p22 = scmp.ne.s32.totalorder %s17, %s19
    %p23 = scmp.eq.s32.totalorder %s9, 0
    %p24 = por %p22, %p23
    %p25 = scmp.ne.s32.totalorder %s17, %s19
    %p26 = scmp.eq.s32.totalorder %s14, 7
    %p27 = por %p25, %p26
    %p28 = scmp.ne.s32.totalorder %s19, %s20
    %p29 = scmp.eq.s32.totalorder %s14, 0
    %p30 = por %p28, %p29
    %p31 = scmp.ne.s32.totalorder %s19, %s20
    %p32 = scmp.eq.s32.totalorder %s15, 7
    %p33 = por %p31, %p32
    %p35 = scmp.ne.s32.totalorder %s20, %s34
    %p36 = scmp.eq.s32.totalorder %s15, 0
    %p37 = por %p35, %p36
    %s39 = sadd.s32 %s38, 1
    %p42 = scmp.eq.s32.totalorder %s9, 7
    %p43 = scmp.ne.s32.totalorder %s38, %s40
    %p44 = scmp.eq.s32.totalorder %s9, 0
    %p45 = por %p43, %p44
    %p46 = scmp.ne.s32.totalorder %s38, %s40
    %p47 = scmp.eq.s32.totalorder %s14, 7
    %p48 = por %p46, %p47
    %p49 = scmp.ne.s32.totalorder %s40, %s41
    %p50 = scmp.eq.s32.totalorder %s14, 0
    %p51 = por %p49, %p50
    %p52 = scmp.ne.s32.totalorder %s40, %s41
    %p53 = scmp.eq.s32.totalorder %s15, 7
    %p54 = por %p52, %p53
    %p56 = scmp.ne.s32.totalorder %s41, %s55
    %p57 = scmp.eq.s32.totalorder %s15, 0
    %p58 = por %p56, %p57
    %s60 = sadd.s32 %s59, 1
    %p63 = scmp.eq.s32.totalorder %s9, 7
    %p64 = scmp.ne.s32.totalorder %s59, %s61
    %p65 = scmp.eq.s32.totalorder %s9, 0
    %p66 = por %p64, %p65
    %p67 = scmp.ne.s32.totalorder %s59, %s61
    %p68 = scmp.eq.s32.totalorder %s14, 7
    %p69 = por %p67, %p68
    %p70 = scmp.ne.s32.totalorder %s61, %s62
    %p71 = scmp.eq.s32.totalorder %s14, 0
    %p72 = por %p70, %p71
    %p73 = scmp.ne.s32.totalorder %s61, %s62
    %p74 = scmp.eq.s32.totalorder %s15, 7
    %p75 = por %p73, %p74
    %p77 = scmp.ne.s32.totalorder %s62, %s76
    %p78 = scmp.eq.s32.totalorder %s15, 0
    %p79 = por %p77, %p78
    %s80 = ssub.s32 %s9, %s16
    %p81 = scmp.eq.s32.totalorder %s80, 0
    %s83 = sadd.s32 %s82, 1
    %s84 = scalar_select %p81, %s82, %s83
    %p87 = pneg %p81
    %p88 = scmp.eq.s32.totalorder %s9, 7
    %p89 = por %p87, %p88
    %p90 = scmp.ne.s32.totalorder %s82, %s85
    %p91 = scmp.eq.s32.totalorder %s9, 0
    %p92 = por %p90, %p91
    %p93 = scmp.ne.s32.totalorder %s82, %s85
    %p94 = scmp.eq.s32.totalorder %s14, 7
    %p95 = por %p93, %p94
    %p96 = scmp.ne.s32.totalorder %s85, %s86
    %p97 = scmp.eq.s32.totalorder %s14, 0
    %p98 = por %p96, %p97
    %p99 = scmp.ne.s32.totalorder %s85, %s86
    %p100 = scmp.eq.s32.totalorder %s15, 7
    %p101 = por %p99, %p100
    %p103 = scmp.ne.s32.totalorder %s86, %s102
    %p104 = scmp.eq.s32.totalorder %s15, 0
    %p105 = por %p103, %p104
    %p106 = scmp.le.s32.totalorder 1, %s9
    %p107 = scmp.lt.s32.totalorder %s9, 9
    %p108 = pnand %p106, %p107
    %p109 = pneg %p108
    // Predicated region
    $region9: #{_device_forward.5} parent=5 // pred_check
      _
    $region10: #{_device_forward.5} parent=5 // pred_check_branch
      %111 = sbr.rel (%p108) target = $region12
    $region11: #{_device_forward.5} parent=5 // pred_region
      %s112 = ssub.s32 %s9, 1
      // Predicated region
      $region13: #{_device_forward.5} parent=11 // pred_check
        %p113 = pneg %p30
      $region14: #{_device_forward.5} parent=11 // pred_check_branch
        %115 = sbr.rel (%p113) target = $region16
      $region15: #{_device_forward.5} parent=11 // pred_region
        _
      $region16: #{_device_forward.5} parent=11 // pred_fallthru
        _
      // Predicated region
      $region17: #{_device_forward.5} parent=11 // pred_check
        %p116 = pneg %p51
      $region18: #{_device_forward.5} parent=11 // pred_check_branch
        %118 = sbr.rel (%p116) target = $region20
      $region19: #{_device_forward.5} parent=11 // pred_region
        _
      $region20: #{_device_forward.5} parent=11 // pred_fallthru
        _
      // Predicated region
      $region21: #{_device_forward.5} parent=11 // pred_check
        %p119 = pneg %p72
      $region22: #{_device_forward.5} parent=11 // pred_check_branch
        %121 = sbr.rel (%p119) target = $region24
      $region23: #{_device_forward.5} parent=11 // pred_region
        _
      $region24: #{_device_forward.5} parent=11 // pred_fallthru
        _
    $region12: #{_device_forward.5} parent=5 // pred_fallthru
      _
    %p122 = scmp.lt.s32.totalorder %s9, 8
    // Predicated region
    $region25: #{_device_forward.5} parent=5 // pred_check
      %p123 = pneg %p122
    $region26: #{_device_forward.5} parent=5 // pred_check_branch
      %125 = sbr.rel (%p123) target = $region28
    $region27: #{_device_forward.5} parent=5 // pred_region
      _
    $region28: #{_device_forward.5} parent=5 // pred_fallthru
      _
    %p126 = scmp.le.s32.totalorder 1, %s9
    %p127 = scmp.lt.s32.totalorder %s9, 9
    %p128 = pnand %p126, %p127
    %p129 = pneg %p128
    // Predicated region
    $region29: #{_device_forward.5} parent=5 // pred_check
      _
    $region30: #{_device_forward.5} parent=5 // pred_check_branch
      %131 = sbr.rel (%p128) target = $region32
    $region31: #{_device_forward.5} parent=5 // pred_region
      %s132 = ssub.s32 %s9, 1
      %p133 = pneg %p30
      %p134 = pneg %p27
      %p135 = pneg %p51
      %p136 = pneg %p48
      %p137 = pneg %p72
      %p138 = pneg %p69
      %p139 = pneg %p98
      %p140 = pneg %p95
      %p141 = scmp.lt.s32.totalorder %s14, 7
      %s142 = scalar_select %p141, %s14, 7
      %s143 = smul.addr %s142, 8
      %s144 = scalar_lea.vmem %s3, %s143
      %p145 = scmp.lt.s32.totalorder %s14, 7
      %s146 = scalar_select %p145, %s14, 7
      %s147 = smul.addr %s146, 8
      %s148 = scalar_lea.vmem %s3, %s147
      %s150 = smul.u32 %s14, 16
      %s151 = scalar_lea.vmem %s0, %s150
      %v152 = vld [vmem:[%s151] sm:$0xff]
      %v153 = vld [vmem:[%s1] sm:$0xf]
      %v154 = vld [vmem:[%s1 + $0x4] sm:$0xf]
      %v155 = vpack.c.bf16 %v152, %v152
      %v156 = vld [vmem:[%s151 + $0x1] sm:$0xff]
      %s157 = scalar_lea.vmem %s1, 8
      %v158 = vld [vmem:[%s157] sm:$0xf]
      %v159 = vld [vmem:[%s157 + $0x4] sm:$0xf]
      %v160 = vpack.c.bf16 %v156, %v156
      %v163 = vunpack.c.l.b16 %v158
      %v164 = vunpack.c.l.b16 %v159
      %v165 = vpack.c.b16 %v164, %v163
      %vm167 = vcmask 130048
      %v169 = vsel %vm167, %v160, 0
      %171 = vmatprep.subr.bf16.mxu0 0
      %172 = vmatpush1.bf16.msra.mxu0 0
      %173 = vmatprep.subr.bf16.mxu0 0
      %174 = vmatpush1.bf16.msra.mxu0 0
      %175 = vmatprep.subr.bf16.mxu0 0
      %176 = vmatpush1.bf16.msra.mxu0 0
      %177 = vmatprep.subr.bf16.mxu0 0
      %178 = vmatpush1.bf16.msra.mxu0 0
      %179 = vmatprep.subr.bf16.mxu0 0
      %180 = vmatpush1.bf16.msra.mxu0 0
      %181 = vmatprep.subr.bf16.mxu0 0
      %182 = vmatpush1.bf16.msra.mxu0 0
      %183 = vmatprep.subr.bf16.mxu0 0
      %184 = vmatpush1.bf16.msra.mxu0 0
      %185 = vmatprep.subr.bf16.mxu0 0
      %186 = vmatpush1.bf16.msra.mxu0 %v165
      %187 = vmatprep.subr.bf16.mxu0 0
      %188 = vmatpush2.bf16.msra.mxu0 0
      %189 = vmatprep.subr.bf16.mxu0 0
      %190 = vmatpush2.bf16.msra.mxu0 0
      %191 = vmatprep.subr.bf16.mxu0 0
      %192 = vmatpush2.bf16.msra.mxu0 0
      %193 = vmatprep.subr.bf16.mxu0 0
      %194 = vmatpush2.bf16.msra.mxu0 0
      %195 = vmatprep.subr.bf16.mxu0 0
      %196 = vmatpush2.bf16.msra.mxu0 0
      %197 = vmatprep.subr.bf16.mxu0 0
      %198 = vmatpush2.bf16.msra.mxu0 0
      %199 = vmatprep.subr.bf16.mxu0 0
      %200 = vmatpush2.bf16.msra.mxu0 0
      %201 = vmatprep.subr.bf16.mxu0 0
      %202 = vmatpush2.bf16.msra.mxu0 0
      %203 = vmatprep.mubr.bf16.mxu0 0
      %204 = vmatmul.mubr.bf16.gmra.mxu0 %v169
      %v205 = vpop.f32.mrf.mxu0
      %v206 = vadd.f32 0.0, %v205
      %v207 = vpop.f32.mrf.mxu0
      %v208 = vpop.f32.mrf.mxu0
      %v209 = vpop.f32.mrf.mxu0
      %210 = vdwg.mxu0
      %v213 = vunpack.c.l.b16 %v153
      %v214 = vunpack.c.l.b16 %v154
      %v215 = vpack.c.b16 %v214, %v213
      %v218 = vsel %vm167, %v155, 0
      %220 = vmatprep.subr.bf16.mxu0 0
      %221 = vmatpush1.bf16.msra.mxu0 0
      %222 = vmatprep.subr.bf16.mxu0 0
      %223 = vmatpush1.bf16.msra.mxu0 0
      %224 = vmatprep.subr.bf16.mxu0 0
      %225 = vmatpush1.bf16.msra.mxu0 0
      %226 = vmatprep.subr.bf16.mxu0 0
      %227 = vmatpush1.bf16.msra.mxu0 0
      %228 = vmatprep.subr.bf16.mxu0 0
      %229 = vmatpush1.bf16.msra.mxu0 0
      %230 = vmatprep.subr.bf16.mxu0 0
      %231 = vmatpush1.bf16.msra.mxu0 0
      %232 = vmatprep.subr.bf16.mxu0 0
      %233 = vmatpush1.bf16.msra.mxu0 0
      %234 = vmatprep.subr.bf16.mxu0 0
      %235 = vmatpush1.bf16.msra.mxu0 %v215
      %236 = vmatprep.subr.bf16.mxu0 0
      %237 = vmatpush2.bf16.msra.mxu0 0
      %238 = vmatprep.subr.bf16.mxu0 0
      %239 = vmatpush2.bf16.msra.mxu0 0
      %240 = vmatprep.subr.bf16.mxu0 0
      %241 = vmatpush2.bf16.msra.mxu0 0
      %242 = vmatprep.subr.bf16.mxu0 0
      %243 = vmatpush2.bf16.msra.mxu0 0
      %244 = vmatprep.subr.bf16.mxu0 0
      %245 = vmatpush2.bf16.msra.mxu0 0
      %246 = vmatprep.subr.bf16.mxu0 0
      %247 = vmatpush2.bf16.msra.mxu0 0
      %248 = vmatprep.subr.bf16.mxu0 0
      %249 = vmatpush2.bf16.msra.mxu0 0
      %250 = vmatprep.subr.bf16.mxu0 0
      %251 = vmatpush2.bf16.msra.mxu0 0
      %252 = vmatprep.mubr.bf16.mxu0 0
      %253 = vmatmul.mubr.bf16.gmra.mxu0 %v218
      %v254 = vpop.f32.mrf.mxu0
      %v255 = vadd.f32 %v206, %v254
      %v256 = vpop.f32.mrf.mxu0
      %v257 = vpop.f32.mrf.mxu0
      %v258 = vpop.f32.mrf.mxu0
      %259 = vdwg.mxu0
      %v260 = vld [vmem:[%s151 + $0x2] sm:$0xff]
      %s261 = scalar_lea.vmem %s1, 16
      %v262 = vld [vmem:[%s261] sm:$0xf]
      %v263 = vld [vmem:[%s261 + $0x4] sm:$0xf]
      %v264 = vpack.c.bf16 %v260, %v260
      %v267 = vunpack.c.l.b16 %v262
      %v268 = vunpack.c.l.b16 %v263
      %v269 = vpack.c.b16 %v268, %v267
      %v272 = vsel %vm167, %v264, 0
      %274 = vmatprep.subr.bf16.mxu0 0
      %275 = vmatpush1.bf16.msra.mxu0 0
      %276 = vmatprep.subr.bf16.mxu0 0
      %277 = vmatpush1.bf16.msra.mxu0 0
      %278 = vmatprep.subr.bf16.mxu0 0
      %279 = vmatpush1.bf16.msra.mxu0 0
      %280 = vmatprep.subr.bf16.mxu0 0
      %281 = vmatpush1.bf16.msra.mxu0 0
      %282 = vmatprep.subr.bf16.mxu0 0
      %283 = vmatpush1.bf16.msra.mxu0 0
      %284 = vmatprep.subr.bf16.mxu0 0
      %285 = vmatpush1.bf16.msra.mxu0 0
      %286 = vmatprep.subr.bf16.mxu0 0
      %287 = vmatpush1.bf16.msra.mxu0 0
      %288 = vmatprep.subr.bf16.mxu0 0
      %289 = vmatpush1.bf16.msra.mxu0 %v269
      %290 = vmatprep.subr.bf16.mxu0 0
      %291 = vmatpush2.bf16.msra.mxu0 0
      %292 = vmatprep.subr.bf16.mxu0 0
      %293 = vmatpush2.bf16.msra.mxu0 0
      %294 = vmatprep.subr.bf16.mxu0 0
      %295 = vmatpush2.bf16.msra.mxu0 0
      %296 = vmatprep.subr.bf16.mxu0 0
      %297 = vmatpush2.bf16.msra.mxu0 0
      %298 = vmatprep.subr.bf16.mxu0 0
      %299 = vmatpush2.bf16.msra.mxu0 0
      %300 = vmatprep.subr.bf16.mxu0 0
      %301 = vmatpush2.bf16.msra.mxu0 0
      %302 = vmatprep.subr.bf16.mxu0 0
      %303 = vmatpush2.bf16.msra.mxu0 0
      %304 = vmatprep.subr.bf16.mxu0 0
      %305 = vmatpush2.bf16.msra.mxu0 0
      %306 = vmatprep.mubr.bf16.mxu0 0
      %307 = vmatmul.mubr.bf16.gmra.mxu0 %v272
      %v308 = vpop.f32.mrf.mxu0
      %v309 = vadd.f32 0.0, %v308
      %v310 = vpop.f32.mrf.mxu0
      %v311 = vpop.f32.mrf.mxu0
      %v312 = vpop.f32.mrf.mxu0
      %313 = vdwg.mxu0
      %v314 = vadd.f32 %v255, %v309
      %s315 = sadd.s32 %s14, 1
      %s316 = smul.u32 %s315, 16
      %s317 = scalar_lea.vmem %s0, %s316
      %v318 = vld [vmem:[%s317] sm:$0xff]
      %s319 = scalar_lea.vmem %s1, 24
      %v320 = vld [vmem:[%s319] sm:$0xf]
      %v321 = vld [vmem:[%s319 + $0x4] sm:$0xf]
      %v322 = vpack.c.bf16 %v318, %v318
      %v325 = vunpack.c.l.b16 %v320
      %v326 = vunpack.c.l.b16 %v321
      %v327 = vpack.c.b16 %v326, %v325
      %v330 = vsel %vm167, %v322, 0
      %332 = vmatprep.subr.bf16.mxu0 0
      %333 = vmatpush1.bf16.msra.mxu0 0
      %334 = vmatprep.subr.bf16.mxu0 0
      %335 = vmatpush1.bf16.msra.mxu0 0
      %336 = vmatprep.subr.bf16.mxu0 0
      %337 = vmatpush1.bf16.msra.mxu0 0
      %338 = vmatprep.subr.bf16.mxu0 0
      %339 = vmatpush1.bf16.msra.mxu0 0
      %340 = vmatprep.subr.bf16.mxu0 0
      %341 = vmatpush1.bf16.msra.mxu0 0
      %342 = vmatprep.subr.bf16.mxu0 0
      %343 = vmatpush1.bf16.msra.mxu0 0
      %344 = vmatprep.subr.bf16.mxu0 0
      %345 = vmatpush1.bf16.msra.mxu0 0
      %346 = vmatprep.subr.bf16.mxu0 0
      %347 = vmatpush1.bf16.msra.mxu0 %v327
      %348 = vmatprep.subr.bf16.mxu0 0
      %349 = vmatpush2.bf16.msra.mxu0 0
      %350 = vmatprep.subr.bf16.mxu0 0
      %351 = vmatpush2.bf16.msra.mxu0 0
      %352 = vmatprep.subr.bf16.mxu0 0
      %353 = vmatpush2.bf16.msra.mxu0 0
      %354 = vmatprep.subr.bf16.mxu0 0
      %355 = vmatpush2.bf16.msra.mxu0 0
      %356 = vmatprep.subr.bf16.mxu0 0
      %357 = vmatpush2.bf16.msra.mxu0 0
      %358 = vmatprep.subr.bf16.mxu0 0
      %359 = vmatpush2.bf16.msra.mxu0 0
      %360 = vmatprep.subr.bf16.mxu0 0
      %361 = vmatpush2.bf16.msra.mxu0 0
      %362 = vmatprep.subr.bf16.mxu0 0
      %363 = vmatpush2.bf16.msra.mxu0 0
      %364 = vmatprep.mubr.bf16.mxu0 0
      %365 = vmatmul.mubr.bf16.gmra.mxu0 %v330
      %v366 = vpop.f32.mrf.mxu0
      %v367 = vadd.f32 0.0, %v366
      %v368 = vpop.f32.mrf.mxu0
      %v369 = vpop.f32.mrf.mxu0
      %v370 = vpop.f32.mrf.mxu0
      %371 = vdwg.mxu0
      %v372 = vadd.f32 %v314, %v367
      %v373 = vld [vmem:[%s317 + $0x1] sm:$0xff]
      %s374 = scalar_lea.vmem %s1, 32
      %v375 = vld [vmem:[%s374] sm:$0xf]
      %v376 = vld [vmem:[%s374 + $0x4] sm:$0xf]
      %v377 = vpack.c.bf16 %v373, %v373
      %v380 = vunpack.c.l.b16 %v375
      %v381 = vunpack.c.l.b16 %v376
      %v382 = vpack.c.b16 %v381, %v380
      %v385 = vsel %vm167, %v377, 0
      %387 = vmatprep.subr.bf16.mxu0 0
      %388 = vmatpush1.bf16.msra.mxu0 0
      %389 = vmatprep.subr.bf16.mxu0 0
      %390 = vmatpush1.bf16.msra.mxu0 0
      %391 = vmatprep.subr.bf16.mxu0 0
      %392 = vmatpush1.bf16.msra.mxu0 0
      %393 = vmatprep.subr.bf16.mxu0 0
      %394 = vmatpush1.bf16.msra.mxu0 0
      %395 = vmatprep.subr.bf16.mxu0 0
      %396 = vmatpush1.bf16.msra.mxu0 0
      %397 = vmatprep.subr.bf16.mxu0 0
      %398 = vmatpush1.bf16.msra.mxu0 0
      %399 = vmatprep.subr.bf16.mxu0 0
      %400 = vmatpush1.bf16.msra.mxu0 0
      %401 = vmatprep.subr.bf16.mxu0 0
      %402 = vmatpush1.bf16.msra.mxu0 %v382
      %403 = vmatprep.subr.bf16.mxu0 0
      %404 = vmatpush2.bf16.msra.mxu0 0
      %405 = vmatprep.subr.bf16.mxu0 0
      %406 = vmatpush2.bf16.msra.mxu0 0
      %407 = vmatprep.subr.bf16.mxu0 0
      %408 = vmatpush2.bf16.msra.mxu0 0
      %409 = vmatprep.subr.bf16.mxu0 0
      %410 = vmatpush2.bf16.msra.mxu0 0
      %411 = vmatprep.subr.bf16.mxu0 0
      %412 = vmatpush2.bf16.msra.mxu0 0
      %413 = vmatprep.subr.bf16.mxu0 0
      %414 = vmatpush2.bf16.msra.mxu0 0
      %415 = vmatprep.subr.bf16.mxu0 0
      %416 = vmatpush2.bf16.msra.mxu0 0
      %417 = vmatprep.subr.bf16.mxu0 0
      %418 = vmatpush2.bf16.msra.mxu0 0
      %419 = vmatprep.mubr.bf16.mxu0 0
      %420 = vmatmul.mubr.bf16.gmra.mxu0 %v385
      %v421 = vpop.f32.mrf.mxu0
      %v422 = vadd.f32 0.0, %v421
      %v423 = vpop.f32.mrf.mxu0
      %v424 = vpop.f32.mrf.mxu0
      %v425 = vpop.f32.mrf.mxu0
      %426 = vdwg.mxu0
      %v427 = vadd.f32 %v372, %v422
      %v428 = vld [vmem:[%s317 + $0x2] sm:$0xff]
      %s429 = scalar_lea.vmem %s1, 40
      %v430 = vld [vmem:[%s429] sm:$0xf]
      %v431 = vld [vmem:[%s429 + $0x4] sm:$0xf]
      %v432 = vpack.c.bf16 %v428, %v428
      %v435 = vunpack.c.l.b16 %v430
      %v436 = vunpack.c.l.b16 %v431
      %v437 = vpack.c.b16 %v436, %v435
      %v440 = vsel %vm167, %v432, 0
      %442 = vmatprep.subr.bf16.mxu0 0
      %443 = vmatpush1.bf16.msra.mxu0 0
      %444 = vmatprep.subr.bf16.mxu0 0
      %445 = vmatpush1.bf16.msra.mxu0 0
      %446 = vmatprep.subr.bf16.mxu0 0
      %447 = vmatpush1.bf16.msra.mxu0 0
      %448 = vmatprep.subr.bf16.mxu0 0
      %449 = vmatpush1.bf16.msra.mxu0 0
      %450 = vmatprep.subr.bf16.mxu0 0
      %451 = vmatpush1.bf16.msra.mxu0 0
      %452 = vmatprep.subr.bf16.mxu0 0
      %453 = vmatpush1.bf16.msra.mxu0 0
      %454 = vmatprep.subr.bf16.mxu0 0
      %455 = vmatpush1.bf16.msra.mxu0 0
      %456 = vmatprep.subr.bf16.mxu0 0
      %457 = vmatpush1.bf16.msra.mxu0 %v437
      %458 = vmatprep.subr.bf16.mxu0 0
      %459 = vmatpush2.bf16.msra.mxu0 0
      %460 = vmatprep.subr.bf16.mxu0 0
      %461 = vmatpush2.bf16.msra.mxu0 0
      %462 = vmatprep.subr.bf16.mxu0 0
      %463 = vmatpush2.bf16.msra.mxu0 0
      %464 = vmatprep.subr.bf16.mxu0 0
      %465 = vmatpush2.bf16.msra.mxu0 0
      %466 = vmatprep.subr.bf16.mxu0 0
      %467 = vmatpush2.bf16.msra.mxu0 0
      %468 = vmatprep.subr.bf16.mxu0 0
      %469 = vmatpush2.bf16.msra.mxu0 0
      %470 = vmatprep.subr.bf16.mxu0 0
      %471 = vmatpush2.bf16.msra.mxu0 0
      %472 = vmatprep.subr.bf16.mxu0 0
      %473 = vmatpush2.bf16.msra.mxu0 0
      %474 = vmatprep.mubr.bf16.mxu0 0
      %475 = vmatmul.mubr.bf16.gmra.mxu0 %v440
      %v476 = vpop.f32.mrf.mxu0
      %v477 = vadd.f32 0.0, %v476
      %v478 = vpop.f32.mrf.mxu0
      %v479 = vpop.f32.mrf.mxu0
      %v480 = vpop.f32.mrf.mxu0
      %481 = vdwg.mxu0
      %v482 = vadd.f32 %v427, %v477
      %s483 = sadd.s32 %s14, 2
      %s484 = smul.u32 %s483, 16
      %s485 = scalar_lea.vmem %s0, %s484
      %v486 = vld [vmem:[%s485] sm:$0xff]
      %s487 = scalar_lea.vmem %s1, 48
      %v488 = vld [vmem:[%s487] sm:$0xf]
      %v489 = vld [vmem:[%s487 + $0x4] sm:$0xf]
      %v490 = vpack.c.bf16 %v486, %v486
      %v493 = vunpack.c.l.b16 %v488
      %v494 = vunpack.c.l.b16 %v489
      %v495 = vpack.c.b16 %v494, %v493
      %v498 = vsel %vm167, %v490, 0
      %500 = vmatprep.subr.bf16.mxu0 0
      %501 = vmatpush1.bf16.msra.mxu0 0
      %502 = vmatprep.subr.bf16.mxu0 0
      %503 = vmatpush1.bf16.msra.mxu0 0
      %504 = vmatprep.subr.bf16.mxu0 0
      %505 = vmatpush1.bf16.msra.mxu0 0
      %506 = vmatprep.subr.bf16.mxu0 0
      %507 = vmatpush1.bf16.msra.mxu0 0
      %508 = vmatprep.subr.bf16.mxu0 0
      %509 = vmatpush1.bf16.msra.mxu0 0
      %510 = vmatprep.subr.bf16.mxu0 0
      %511 = vmatpush1.bf16.msra.mxu0 0
      %512 = vmatprep.subr.bf16.mxu0 0
      %513 = vmatpush1.bf16.msra.mxu0 0
      %514 = vmatprep.subr.bf16.mxu0 0
      %515 = vmatpush1.bf16.msra.mxu0 %v495
      %516 = vmatprep.subr.bf16.mxu0 0
      %517 = vmatpush2.bf16.msra.mxu0 0
      %518 = vmatprep.subr.bf16.mxu0 0
      %519 = vmatpush2.bf16.msra.mxu0 0
      %520 = vmatprep.subr.bf16.mxu0 0
      %521 = vmatpush2.bf16.msra.mxu0 0
      %522 = vmatprep.subr.bf16.mxu0 0
      %523 = vmatpush2.bf16.msra.mxu0 0
      %524 = vmatprep.subr.bf16.mxu0 0
      %525 = vmatpush2.bf16.msra.mxu0 0
      %526 = vmatprep.subr.bf16.mxu0 0
      %527 = vmatpush2.bf16.msra.mxu0 0
      %528 = vmatprep.subr.bf16.mxu0 0
      %529 = vmatpush2.bf16.msra.mxu0 0
      %530 = vmatprep.subr.bf16.mxu0 0
      %531 = vmatpush2.bf16.msra.mxu0 0
      %532 = vmatprep.mubr.bf16.mxu0 0
      %533 = vmatmul.mubr.bf16.gmra.mxu0 %v498
      %v534 = vpop.f32.mrf.mxu0
      %v535 = vadd.f32 0.0, %v534
      %v536 = vpop.f32.mrf.mxu0
      %v537 = vpop.f32.mrf.mxu0
      %v538 = vpop.f32.mrf.mxu0
      %539 = vdwg.mxu0
      %v540 = vadd.f32 %v482, %v535
      %v541 = vld [vmem:[%s485 + $0x1] sm:$0xff]
      %s542 = scalar_lea.vmem %s1, 56
      %v543 = vld [vmem:[%s542] sm:$0xf]
      %v544 = vld [vmem:[%s542 + $0x4] sm:$0xf]
      %v545 = vpack.c.bf16 %v541, %v541
      %v548 = vunpack.c.l.b16 %v543
      %v549 = vunpack.c.l.b16 %v544
      %v550 = vpack.c.b16 %v549, %v548
      %v553 = vsel %vm167, %v545, 0
      %555 = vmatprep.subr.bf16.mxu0 0
      %556 = vmatpush1.bf16.msra.mxu0 0
      %557 = vmatprep.subr.bf16.mxu0 0
      %558 = vmatpush1.bf16.msra.mxu0 0
      %559 = vmatprep.subr.bf16.mxu0 0
      %560 = vmatpush1.bf16.msra.mxu0 0
      %561 = vmatprep.subr.bf16.mxu0 0
      %562 = vmatpush1.bf16.msra.mxu0 0
      %563 = vmatprep.subr.bf16.mxu0 0
      %564 = vmatpush1.bf16.msra.mxu0 0
      %565 = vmatprep.subr.bf16.mxu0 0
      %566 = vmatpush1.bf16.msra.mxu0 0
      %567 = vmatprep.subr.bf16.mxu0 0
      %568 = vmatpush1.bf16.msra.mxu0 0
      %569 = vmatprep.subr.bf16.mxu0 0
      %570 = vmatpush1.bf16.msra.mxu0 %v550
      %571 = vmatprep.subr.bf16.mxu0 0
      %572 = vmatpush2.bf16.msra.mxu0 0
      %573 = vmatprep.subr.bf16.mxu0 0
      %574 = vmatpush2.bf16.msra.mxu0 0
      %575 = vmatprep.subr.bf16.mxu0 0
      %576 = vmatpush2.bf16.msra.mxu0 0
      %577 = vmatprep.subr.bf16.mxu0 0
      %578 = vmatpush2.bf16.msra.mxu0 0
      %579 = vmatprep.subr.bf16.mxu0 0
      %580 = vmatpush2.bf16.msra.mxu0 0
      %581 = vmatprep.subr.bf16.mxu0 0
      %582 = vmatpush2.bf16.msra.mxu0 0
      %583 = vmatprep.subr.bf16.mxu0 0
      %584 = vmatpush2.bf16.msra.mxu0 0
      %585 = vmatprep.subr.bf16.mxu0 0
      %586 = vmatpush2.bf16.msra.mxu0 0
      %587 = vmatprep.mubr.bf16.mxu0 0
      %588 = vmatmul.mubr.bf16.gmra.mxu0 %v553
      %v589 = vpop.f32.mrf.mxu0
      %v590 = vadd.f32 0.0, %v589
      %v591 = vpop.f32.mrf.mxu0
      %v592 = vpop.f32.mrf.mxu0
      %v593 = vpop.f32.mrf.mxu0
      %594 = vdwg.mxu0
      %v595 = vadd.f32 %v540, %v590
      %v596 = vld [vmem:[%s485 + $0x2] sm:$0xff]
      %s597 = scalar_lea.vmem %s1, 64
      %v598 = vld [vmem:[%s597] sm:$0xf]
      %v599 = vld [vmem:[%s597 + $0x4] sm:$0xf]
      %v600 = vpack.c.bf16 %v596, %v596
      %v603 = vunpack.c.l.b16 %v598
      %v604 = vunpack.c.l.b16 %v599
      %v605 = vpack.c.b16 %v604, %v603
      %v608 = vsel %vm167, %v600, 0
      %610 = vmatprep.subr.bf16.mxu0 0
      %611 = vmatpush1.bf16.msra.mxu0 0
      %612 = vmatprep.subr.bf16.mxu0 0
      %613 = vmatpush1.bf16.msra.mxu0 0
      %614 = vmatprep.subr.bf16.mxu0 0
      %615 = vmatpush1.bf16.msra.mxu0 0
      %616 = vmatprep.subr.bf16.mxu0 0
      %617 = vmatpush1.bf16.msra.mxu0 0
      %618 = vmatprep.subr.bf16.mxu0 0
      %619 = vmatpush1.bf16.msra.mxu0 0
      %620 = vmatprep.subr.bf16.mxu0 0
      %621 = vmatpush1.bf16.msra.mxu0 0
      %622 = vmatprep.subr.bf16.mxu0 0
      %623 = vmatpush1.bf16.msra.mxu0 0
      %624 = vmatprep.subr.bf16.mxu0 0
      %625 = vmatpush1.bf16.msra.mxu0 %v605
      %626 = vmatprep.subr.bf16.mxu0 0
      %627 = vmatpush2.bf16.msra.mxu0 0
      %628 = vmatprep.subr.bf16.mxu0 0
      %629 = vmatpush2.bf16.msra.mxu0 0
      %630 = vmatprep.subr.bf16.mxu0 0
      %631 = vmatpush2.bf16.msra.mxu0 0
      %632 = vmatprep.subr.bf16.mxu0 0
      %633 = vmatpush2.bf16.msra.mxu0 0
      %634 = vmatprep.subr.bf16.mxu0 0
      %635 = vmatpush2.bf16.msra.mxu0 0
      %636 = vmatprep.subr.bf16.mxu0 0
      %637 = vmatpush2.bf16.msra.mxu0 0
      %638 = vmatprep.subr.bf16.mxu0 0
      %639 = vmatpush2.bf16.msra.mxu0 0
      %640 = vmatprep.subr.bf16.mxu0 0
      %641 = vmatpush2.bf16.msra.mxu0 0
      %642 = vmatprep.mubr.bf16.mxu0 0
      %643 = vmatmul.mubr.bf16.gmra.mxu0 %v608
      %v644 = vpop.f32.mrf.mxu0
      %v645 = vadd.f32 0.0, %v644
      %v646 = vpop.f32.mrf.mxu0
      %v647 = vpop.f32.mrf.mxu0
      %v648 = vpop.f32.mrf.mxu0
      %649 = vdwg.mxu0
      %v650 = vadd.f32 %v595, %v645
      %v651 = vld [vmem:[%s2] sm:$0x1]
      %v653 = vlaneseq
      %v654 = vshrl.u32 %v653, 7
      %v655 = vsub.s32 0, %v654
      %v656 = vrot.slane %v651, %v655
      %v658 = vadd.f32 %v650, %v656
      %v659 = vmax.f32 %v658, 0.0
      %vm660 = vcmask 261120
      %661 = vst.msk [vmem:[%s148] sm:$0xff] %vm660, %v659
      %p662 = scmp.lt.s32.totalorder %s14, 7
      %s663 = scalar_select %p662, %s14, 7
      %s664 = smul.addr %s663, 8
      %s665 = scalar_lea.vmem %s3, %s664
      // Predicated region
      $region33: #{_device_forward.5} parent=31 // pred_check
        %p666 = pneg %p95
      $region34: #{_device_forward.5} parent=31 // pred_check_branch
        %668 = sbr.rel (%p666) target = $region36
      $region35: #{_device_forward.5} parent=31 // pred_region
        _
      $region36: #{_device_forward.5} parent=31 // pred_fallthru
        _
    $region32: #{_device_forward.5} parent=5 // pred_fallthru
      _
    %p669 = scmp.le.s32.totalorder 2, %s9
    // Predicated region
    $region37: #{_device_forward.5} parent=5 // pred_check
      %p670 = pneg %p669
    $region38: #{_device_forward.5} parent=5 // pred_check_branch
      %672 = sbr.rel (%p670) target = $region40
    $region39: #{_device_forward.5} parent=5 // pred_region
      %s673 = ssub.s32 %s9, 2
      // Predicated region
      $region41: #{_device_forward.5} parent=39 // pred_check
        %p674 = pneg %p101
      $region42: #{_device_forward.5} parent=39 // pred_check_branch
        %676 = sbr.rel (%p674) target = $region44
      $region43: #{_device_forward.5} parent=39 // pred_region
        %p677 = scmp.lt.s32.totalorder %s15, 7
        %s678 = scalar_select %p677, %s15, 7
        %s679 = smul.addr %s678, 8
        %s680 = scalar_lea.vmem %s3, %s679
      $region44: #{_device_forward.5} parent=39 // pred_fallthru
        _
    $region40: #{_device_forward.5} parent=5 // pred_fallthru
      _
  $region6: #{_device_forward.5} parent=0 // loop_footer
    %s13 = sadd.s32 1, %s9
  $region7: #{_device_forward.5} parent=0 // loop_footer_branch
    %8 = sbr.rel target = $region3
  $region8: #{_device_forward.5} parent=0 // loop_exit
    _

// kernel: _device_forward.6
$region0: #{_device_forward.6}
  #allocation0 [shape = 'u32[]', space=smem, size = 0x4, offset = 0x4, fixed_abs, tag = 'smem constant byte address 0x4 - core index']
  #allocation1 [shape = 'u32[144,128]{1,0:T(1,128)}', space=vmem, size = 0x12000, scoped, tag = 'internal scratch']
  #allocation2 [shape = 's32[1]{0}', space=sflag, size = 0x4, scoped, tag = 'scoped memory for _device_forward.6']
  #allocation3 [shape = 'u8[2048]{0}', space=smem, size = 0x800, scoped, tag = 'prefetched SMEM operand 0']
  %s0 = inlined_call_operand.vmem [shape: s32[448], index: 0, kind: input, shape index: {}]
  %s1 = inlined_call_operand.vmem [shape: f32[8,8,32], index: 1, kind: input, shape index: {}]
  %s2 = inlined_call_operand.vmem [shape: f32[7,16,32], index: 2, kind: output, shape index: {}]
  %s3 = sld [smem:[#allocation0]]
  $region37: #{_device_forward.6} parent=0
    _
  %s5 = ssub.s32 1, %s3
  %s6 = scalar_select 0, %s5, %s3
  %s7 = sshll.u32 %s0, 4
  %s8 = int_to_ptr.vmem [resolvable:$true] %s7
  %10 = dma.vmem_to_smem %s8, 64, [#allocation3], [#allocation2]
  %11 = dma.done [#allocation2], 64
  %12 = sfence
  loop: start=0, step=1, limit=9
  $region2: #{_device_forward.6} parent=0 // loop_pre_header
    _
  $region3: #{_device_forward.6} parent=0 // loop_header
    %s14 = sphi 0, %s18
    %p15 = scmp.ge.s32.totalorder %s14, 9
    %s22 = sphi 0, %s22
    %s24 = sphi 0, %s22
    %s25 = sphi 0, %s24
    %s39 = sphi 0, %s25
    %s45 = sphi 0, %s47
    %s48 = sphi 0, %s45
    %s49 = sphi 0, %s48
    %s65 = sphi 0, %s49
  $region4: #{_device_forward.6} parent=0 // loop_header_branch
    %17 = sbr.rel (%p15) target = $region8
  $region5: #{_device_forward.6} parent=0 // loop_body
    %s19 = ssub.s32 %s14, 1
    %s20 = ssub.s32 %s14, 2
    %s21 = sadd.s32 %s14, 1
    %s23 = sadd.s32 %s22, 1
    %p26 = scmp.eq.s32.totalorder %s14, 6
    %p27 = scmp.ne.s32.totalorder %s22, %s24
    %p28 = scmp.eq.s32.totalorder %s14, 0
    %p29 = por %p27, %p28
    %p30 = scmp.ne.s32.totalorder %s22, %s24
    %p31 = scmp.eq.s32.totalorder %s19, 6
    %p32 = por %p30, %p31
    %p33 = scmp.ne.s32.totalorder %s24, %s25
    %p34 = scmp.eq.s32.totalorder %s19, 0
    %p35 = por %p33, %p34
    %p36 = scmp.ne.s32.totalorder %s24, %s25
    %p37 = scmp.eq.s32.totalorder %s20, 6
    %p38 = por %p36, %p37
    %p40 = scmp.ne.s32.totalorder %s25, %s39
    %p41 = scmp.eq.s32.totalorder %s20, 0
    %p42 = por %p40, %p41
    %s43 = ssub.s32 %s14, %s21
    %p44 = scmp.eq.s32.totalorder %s43, 0
    %s46 = sadd.s32 %s45, 1
    %s47 = scalar_select %p44, %s45, %s46
    %p50 = pneg %p44
    %p51 = scmp.eq.s32.totalorder %s14, 6
    %p52 = por %p50, %p51
    %p53 = scmp.ne.s32.totalorder %s45, %s48
    %p54 = scmp.eq.s32.totalorder %s14, 0
    %p55 = por %p53, %p54
    %p56 = scmp.ne.s32.totalorder %s45, %s48
    %p57 = scmp.eq.s32.totalorder %s19, 6
    %p58 = por %p56, %p57
    %p59 = scmp.ne.s32.totalorder %s48, %s49
    %p60 = scmp.eq.s32.totalorder %s19, 0
    %p61 = por %p59, %p60
    %p62 = scmp.ne.s32.totalorder %s48, %s49
    %p63 = scmp.eq.s32.totalorder %s20, 6
    %p64 = por %p62, %p63
    %p66 = scmp.ne.s32.totalorder %s49, %s65
    %p67 = scmp.eq.s32.totalorder %s20, 0
    %p68 = por %p66, %p67
    %p69 = scmp.le.s32.totalorder 1, %s14
    %p70 = scmp.lt.s32.totalorder %s14, 8
    %p71 = pnand %p69, %p70
    %p72 = pneg %p71
    // Predicated region
    $region9: #{_device_forward.6} parent=5 // pred_check
      _
    $region10: #{_device_forward.6} parent=5 // pred_check_branch
      %74 = sbr.rel (%p71) target = $region12
    $region11: #{_device_forward.6} parent=5 // pred_region
      %s75 = ssub.s32 %s14, 1
      // Predicated region
      $region13: #{_device_forward.6} parent=11 // pred_check
        %p76 = pneg %p35
      $region14: #{_device_forward.6} parent=11 // pred_check_branch
        %78 = sbr.rel (%p76) target = $region16
      $region15: #{_device_forward.6} parent=11 // pred_region
        _
      $region16: #{_device_forward.6} parent=11 // pred_fallthru
        _
    $region12: #{_device_forward.6} parent=5 // pred_fallthru
      _
    %p79 = scmp.lt.s32.totalorder %s14, 7
    // Predicated region
    $region17: #{_device_forward.6} parent=5 // pred_check
      %p80 = pneg %p79
    $region18: #{_device_forward.6} parent=5 // pred_check_branch
      %82 = sbr.rel (%p80) target = $region20
    $region19: #{_device_forward.6} parent=5 // pred_region
      _
    $region20: #{_device_forward.6} parent=5 // pred_fallthru
      _
    %p83 = scmp.le.s32.totalorder 1, %s14
    %p84 = scmp.lt.s32.totalorder %s14, 8
    %p85 = pnand %p83, %p84
    %p86 = pneg %p85
    // Predicated region
    $region21: #{_device_forward.6} parent=5 // pred_check
      _
    $region22: #{_device_forward.6} parent=5 // pred_check_branch
      %88 = sbr.rel (%p85) target = $region24
    $region23: #{_device_forward.6} parent=5 // pred_region
      %s89 = ssub.s32 %s14, 1
      %p90 = pneg %p35
      %p91 = pneg %p32
      %p92 = pneg %p61
      %p93 = pneg %p58
      %p94 = scmp.lt.s32.totalorder %s19, 6
      %s95 = scalar_select %p94, %s19, 6
      %s96 = smul.addr %s95, 2
      %s97 = smul.addr %s96, 8
      %s98 = scalar_lea.vmem %s2, %s97
      %p99 = scmp.lt.s32.totalorder %s19, 6
      %s100 = scalar_select %p99, %s19, 6
      %s101 = smul.addr %s100, 2
      %s102 = smul.addr %s101, 8
      %s103 = scalar_lea.vmem %s2, %s102
      %v104 = vld [vmem:[%s1] sm:$0xff]
      %v105 = vld [vmem:[%s1 + $0x8] sm:$0xff]
      %v106 = vld [vmem:[%s1 + $0x10] sm:$0xff]
      %v107 = vld [vmem:[%s1 + $0x18] sm:$0xff]
      %v108 = vld [vmem:[%s1 + $0x20] sm:$0xff]
      %v109 = vld [vmem:[%s1 + $0x28] sm:$0xff]
      %v110 = vld [vmem:[%s1 + $0x30] sm:$0xff]
      %v111 = vld [vmem:[%s1 + $0x38] sm:$0xff]
      %v112 = vlaneseq
      %v113 = vshrl.u32 %v112, 7
      %s114 = smul.u32 %s19, 64
      %s115 = sld [smem:[#allocation3 + %s114]]
      %s116 = sadd.s32 %s114, 1
      %s117 = sld [smem:[#allocation3 + %s116]]
      %s118 = sadd.s32 %s114, 2
      %s119 = sld [smem:[#allocation3 + %s118]]
      %s120 = sadd.s32 %s114, 3
      %s121 = sld [smem:[#allocation3 + %s120]]
      %v122 = vstv %s115
      %vm123 = vcmp.le.s32.totalorder %v122, 0
      %vm124 = vcmp.le.s32.totalorder %v122, 1
      %vm125 = vcmp.le.s32.totalorder %v122, 2
      %vm126 = vcmp.le.s32.totalorder %v122, 3
      %vm127 = vcmp.le.s32.totalorder %v122, 4
      %vm128 = vcmp.le.s32.totalorder %v122, 5
      %vm129 = vcmp.le.s32.totalorder %v122, 6
      %vm130 = vcmp.le.s32.totalorder %v122, 7
      %v131 = vstv %s117
      %vm132 = vcmp.gt.s32.totalorder %v131, 0
      %vm133 = vcmp.gt.s32.totalorder %v131, 1
      %vm134 = vcmp.gt.s32.totalorder %v131, 2
      %vm135 = vcmp.gt.s32.totalorder %v131, 3
      %vm136 = vcmp.gt.s32.totalorder %v131, 4
      %vm137 = vcmp.gt.s32.totalorder %v131, 5
      %vm138 = vcmp.gt.s32.totalorder %v131, 6
      %vm139 = vcmp.gt.s32.totalorder %v131, 7
      %vm140 = vmand %vm123, %vm132
      %vm141 = vmand %vm124, %vm133
      %vm142 = vmand %vm125, %vm134
      %vm143 = vmand %vm126, %vm135
      %vm144 = vmand %vm127, %vm136
      %vm145 = vmand %vm128, %vm137
      %vm146 = vmand %vm129, %vm138
      %vm147 = vmand %vm130, %vm139
      %v148 = vstv %s119
      %vm149 = vcmp.ge.s32.totalorder %v113, %v148
      %vm150 = vmand %vm140, %vm149
      %vm151 = vmand %vm141, %vm149
      %vm152 = vmand %vm142, %vm149
      %vm153 = vmand %vm143, %vm149
      %vm154 = vmand %vm144, %vm149
      %vm155 = vmand %vm145, %vm149
      %vm156 = vmand %vm146, %vm149
      %vm157 = vmand %vm147, %vm149
      %v158 = vstv %s121
      %vm159 = vcmp.lt.s32.totalorder %v113, %v158
      %vm160 = vmand %vm150, %vm159
      %vm161 = vmand %vm151, %vm159
      %vm162 = vmand %vm152, %vm159
      %vm163 = vmand %vm153, %vm159
      %vm164 = vmand %vm154, %vm159
      %vm165 = vmand %vm155, %vm159
      %vm166 = vmand %vm156, %vm159
      %vm167 = vmand %vm157, %vm159
      %v168 = vsel %vm160, %v104, -1e+30
      %v169 = vsel %vm161, %v105, -1e+30
      %v170 = vsel %vm162, %v106, -1e+30
      %v171 = vsel %vm163, %v107, -1e+30
      %v172 = vsel %vm164, %v108, -1e+30
      %v173 = vsel %vm165, %v109, -1e+30
      %v174 = vsel %vm166, %v110, -1e+30
      %v175 = vsel %vm167, %v111, -1e+30
      %vm176 = vcmask 261120
      %v177 = vsel %vm176, %v168, -inf
      %v178 = vsel %vm176, %v169, -inf
      %v179 = vsel %vm176, %v170, -inf
      %v180 = vsel %vm176, %v171, -inf
      %v181 = vsel %vm176, %v172, -inf
      %v182 = vmax.f32 %v177, %v181
      %v183 = vsel %vm176, %v173, -inf
      %v184 = vmax.f32 %v178, %v183
      %v185 = vsel %vm176, %v174, -inf
      %v186 = vmax.f32 %v179, %v185
      %v187 = vsel %vm176, %v175, -inf
      %v188 = vmax.f32 %v180, %v187
      %v189 = vmax.f32 %v182, %v184
      %v190 = vmax.f32 %v186, %v188
      %v191 = vmax.f32 %v189, %v190
      %v192 = vsel %vm176, %v191, -inf
      %v193 = vrot.slane %v192, 4
      %v194 = vmax.f32 %v192, %v193
      %v195 = vrot.slane %v194, 2
      %v196 = vmax.f32 %v194, %v195
      %v197 = vrot.slane %v196, 1
      %v198 = vmax.f32 %v196, %v197
      %p199 = scmp.gt.s32.totalorder %s117, %s115
      %p200 = scmp.gt.s32.totalorder %s121, %s119
      %p201 = pnand %p199, %p200
      %p202 = pneg %p201
      %s203 = scalar_select %p202, 1, 0
      %s204 = scvt.s32.f32 %s203
      %v205 = vstv %s204
      %v206 = vmul.f32 %v198, %v205
      %s207 = sadd.s32 %s114, 4
      %s208 = sld [smem:[#allocation3 + %s207]]
      %s209 = sadd.s32 %s114, 5
      %s210 = sld [smem:[#allocation3 + %s209]]
      %s211 = sadd.s32 %s114, 6
      %s212 = sld [smem:[#allocation3 + %s211]]
      %s213 = sadd.s32 %s114, 7
      %s214 = sld [smem:[#allocation3 + %s213]]
      %v215 = vstv %s208
      %vm216 = vcmp.le.s32.totalorder %v215, 0
      %vm217 = vcmp.le.s32.totalorder %v215, 1
      %vm218 = vcmp.le.s32.totalorder %v215, 2
      %vm219 = vcmp.le.s32.totalorder %v215, 3
      %vm220 = vcmp.le.s32.totalorder %v215, 4
      %vm221 = vcmp.le.s32.totalorder %v215, 5
      %vm222 = vcmp.le.s32.totalorder %v215, 6
      %vm223 = vcmp.le.s32.totalorder %v215, 7
      %v224 = vstv %s210
      %vm225 = vcmp.gt.s32.totalorder %v224, 0
      %vm226 = vcmp.gt.s32.totalorder %v224, 1
      %vm227 = vcmp.gt.s32.totalorder %v224, 2
      %vm228 = vcmp.gt.s32.totalorder %v224, 3
      %vm229 = vcmp.gt.s32.totalorder %v224, 4
      %vm230 = vcmp.gt.s32.totalorder %v224, 5
      %vm231 = vcmp.gt.s32.totalorder %v224, 6
      %vm232 = vcmp.gt.s32.totalorder %v224, 7
      %vm233 = vmand %vm216, %vm225
      %vm234 = vmand %vm217, %vm226
      %vm235 = vmand %vm218, %vm227
      %vm236 = vmand %vm219, %vm228
      %vm237 = vmand %vm220, %vm229
      %vm238 = vmand %vm221, %vm230
      %vm239 = vmand %vm222, %vm231
      %vm240 = vmand %vm223, %vm232
      %v241 = vstv %s212
      %vm242 = vcmp.ge.s32.totalorder %v113, %v241
      %vm243 = vmand %vm233, %vm242
      %vm244 = vmand %vm234, %vm242
      %vm245 = vmand %vm235, %vm242
      %vm246 = vmand %vm236, %vm242
      %vm247 = vmand %vm237, %vm242
      %vm248 = vmand %vm238, %vm242
      %vm249 = vmand %vm239, %vm242
      %vm250 = vmand %vm240, %vm242
      %v251 = vstv %s214
      %vm252 = vcmp.lt.s32.totalorder %v113, %v251
      %vm253 = vmand %vm243, %vm252
      %vm254 = vmand %vm244, %vm252
      %vm255 = vmand %vm245, %vm252
      %vm256 = vmand %vm246, %vm252
      %vm257 = vmand %vm247, %vm252
      %vm258 = vmand %vm248, %vm252
      %vm259 = vmand %vm249, %vm252
      %vm260 = vmand %vm250, %vm252
      %v261 = vsel %vm253, %v104, -1e+30
      %v262 = vsel %vm254, %v105, -1e+30
      %v263 = vsel %vm255, %v106, -1e+30
      %v264 = vsel %vm256, %v107, -1e+30
      %v265 = vsel %vm257, %v108, -1e+30
      %v266 = vsel %vm258, %v109, -1e+30
      %v267 = vsel %vm259, %v110, -1e+30
      %v268 = vsel %vm260, %v111, -1e+30
      %v269 = vsel %vm176, %v261, -inf
      %v270 = vsel %vm176, %v262, -inf
      %v271 = vsel %vm176, %v263, -inf
      %v272 = vsel %vm176, %v264, -inf
      %v273 = vsel %vm176, %v265, -inf
      %v274 = vmax.f32 %v269, %v273
      %v275 = vsel %vm176, %v266, -inf
      %v276 = vmax.f32 %v270, %v275
      %v277 = vsel %vm176, %v267, -inf
      %v278 = vmax.f32 %v271, %v277
      %v279 = vsel %vm176, %v268, -inf
      %v280 = vmax.f32 %v272, %v279
      %v281 = vmax.f32 %v274, %v276
      %v282 = vmax.f32 %v278, %v280
      %v283 = vmax.f32 %v281, %v282
      %v284 = vsel %vm176, %v283, -inf
      %v285 = vrot.slane %v284, 4
      %v286 = vmax.f32 %v284, %v285
      %v287 = vrot.slane %v286, 2
      %v288 = vmax.f32 %v286, %v287
      %v289 = vrot.slane %v288, 1
      %v290 = vmax.f32 %v288, %v289
      %p291 = scmp.gt.s32.totalorder %s210, %s208
      %p292 = scmp.gt.s32.totalorder %s214, %s212
      %p293 = pnand %p291, %p292
      %p294 = pneg %p293
      %s295 = scalar_select %p294, 1, 0
      %s296 = scvt.s32.f32 %s295
      %v297 = vstv %s296
      %v298 = vmul.f32 %v290, %v297
      %s299 = sadd.s32 %s114, 8
      %s300 = sld [smem:[#allocation3 + %s299]]
      %s301 = sadd.s32 %s114, 9
      %s302 = sld [smem:[#allocation3 + %s301]]
      %s303 = sadd.s32 %s114, 10
      %s304 = sld [smem:[#allocation3 + %s303]]
      %s305 = sadd.s32 %s114, 11
      %s306 = sld [smem:[#allocation3 + %s305]]
      %v307 = vstv %s300
      %vm308 = vcmp.le.s32.totalorder %v307, 0
      %vm309 = vcmp.le.s32.totalorder %v307, 1
      %vm310 = vcmp.le.s32.totalorder %v307, 2
      %vm311 = vcmp.le.s32.totalorder %v307, 3
      %vm312 = vcmp.le.s32.totalorder %v307, 4
      %vm313 = vcmp.le.s32.totalorder %v307, 5
      %vm314 = vcmp.le.s32.totalorder %v307, 6
      %vm315 = vcmp.le.s32.totalorder %v307, 7
      %v316 = vstv %s302
      %vm317 = vcmp.gt.s32.totalorder %v316, 0
      %vm318 = vcmp.gt.s32.totalorder %v316, 1
      %vm319 = vcmp.gt.s32.totalorder %v316, 2
      %vm320 = vcmp.gt.s32.totalorder %v316, 3
      %vm321 = vcmp.gt.s32.totalorder %v316, 4
      %vm322 = vcmp.gt.s32.totalorder %v316, 5
      %vm323 = vcmp.gt.s32.totalorder %v316, 6
      %vm324 = vcmp.gt.s32.totalorder %v316, 7
      %vm325 = vmand %vm308, %vm317
      %vm326 = vmand %vm309, %vm318
      %vm327 = vmand %vm310, %vm319
      %vm328 = vmand %vm311, %vm320
      %vm329 = vmand %vm312, %vm321
      %vm330 = vmand %vm313, %vm322
      %vm331 = vmand %vm314, %vm323
      %vm332 = vmand %vm315, %vm324
      %v333 = vstv %s304
      %vm334 = vcmp.ge.s32.totalorder %v113, %v333
      %vm335 = vmand %vm325, %vm334
      %vm336 = vmand %vm326, %vm334
      %vm337 = vmand %vm327, %vm334
      %vm338 = vmand %vm328, %vm334
      %vm339 = vmand %vm329, %vm334
      %vm340 = vmand %vm330, %vm334
      %vm341 = vmand %vm331, %vm334
      %vm342 = vmand %vm332, %vm334
      %v343 = vstv %s306
      %vm344 = vcmp.lt.s32.totalorder %v113, %v343
      %vm345 = vmand %vm335, %vm344
      %vm346 = vmand %vm336, %vm344
      %vm347 = vmand %vm337, %vm344
      %vm348 = vmand %vm338, %vm344
      %vm349 = vmand %vm339, %vm344
      %vm350 = vmand %vm340, %vm344
      %vm351 = vmand %vm341, %vm344
      %vm352 = vmand %vm342, %vm344
      %v353 = vsel %vm345, %v104, -1e+30
      %v354 = vsel %vm346, %v105, -1e+30
      %v355 = vsel %vm347, %v106, -1e+30
      %v356 = vsel %vm348, %v107, -1e+30
      %v357 = vsel %vm349, %v108, -1e+30
      %v358 = vsel %vm350, %v109, -1e+30
      %v359 = vsel %vm351, %v110, -1e+30
      %v360 = vsel %vm352, %v111, -1e+30
      %v361 = vsel %vm176, %v353, -inf
      %v362 = vsel %vm176, %v354, -inf
      %v363 = vsel %vm176, %v355, -inf
      %v364 = vsel %vm176, %v356, -inf
      %v365 = vsel %vm176, %v357, -inf
      %v366 = vmax.f32 %v361, %v365
      %v367 = vsel %vm176, %v358, -inf
      %v368 = vmax.f32 %v362, %v367
      %v369 = vsel %vm176, %v359, -inf
      %v370 = vmax.f32 %v363, %v369
      %v371 = vsel %vm176, %v360, -inf
      %v372 = vmax.f32 %v364, %v371
      %v373 = vmax.f32 %v366, %v368
      %v374 = vmax.f32 %v370, %v372
      %v375 = vmax.f32 %v373, %v374
      %v376 = vsel %vm176, %v375, -inf
      %v377 = vrot.slane %v376, 4
      %v378 = vmax.f32 %v376, %v377
      %v379 = vrot.slane %v378, 2
      %v380 = vmax.f32 %v378, %v379
      %v381 = vrot.slane %v380, 1
      %v382 = vmax.f32 %v380, %v381
      %p383 = scmp.gt.s32.totalorder %s302, %s300
      %p384 = scmp.gt.s32.totalorder %s306, %s304
      %p385 = pnand %p383, %p384
      %p386 = pneg %p385
      %s387 = scalar_select %p386, 1, 0
      %s388 = scvt.s32.f32 %s387
      %v389 = vstv %s388
      %v390 = vmul.f32 %v382, %v389
      %s391 = sadd.s32 %s114, 12
      %s392 = sld [smem:[#allocation3 + %s391]]
      %s393 = sadd.s32 %s114, 13
      %s394 = sld [smem:[#allocation3 + %s393]]
      %s395 = sadd.s32 %s114, 14
      %s396 = sld [smem:[#allocation3 + %s395]]
      %s397 = sadd.s32 %s114, 15
      %s398 = sld [smem:[#allocation3 + %s397]]
      %v399 = vstv %s392
      %vm400 = vcmp.le.s32.totalorder %v399, 0
      %vm401 = vcmp.le.s32.totalorder %v399, 1
      %vm402 = vcmp.le.s32.totalorder %v399, 2
      %vm403 = vcmp.le.s32.totalorder %v399, 3
      %vm404 = vcmp.le.s32.totalorder %v399, 4
      %vm405 = vcmp.le.s32.totalorder %v399, 5
      %vm406 = vcmp.le.s32.totalorder %v399, 6
      %vm407 = vcmp.le.s32.totalorder %v399, 7
      %v408 = vstv %s394
      %vm409 = vcmp.gt.s32.totalorder %v408, 0
      %vm410 = vcmp.gt.s32.totalorder %v408, 1
      %vm411 = vcmp.gt.s32.totalorder %v408, 2
      %vm412 = vcmp.gt.s32.totalorder %v408, 3
      %vm413 = vcmp.gt.s32.totalorder %v408, 4
      %vm414 = vcmp.gt.s32.totalorder %v408, 5
      %vm415 = vcmp.gt.s32.totalorder %v408, 6
      %vm416 = vcmp.gt.s32.totalorder %v408, 7
      %vm417 = vmand %vm400, %vm409
      %vm418 = vmand %vm401, %vm410
      %vm419 = vmand %vm402, %vm411
      %vm420 = vmand %vm403, %vm412
      %vm421 = vmand %vm404, %vm413
      %vm422 = vmand %vm405, %vm414
      %vm423 = vmand %vm406, %vm415
      %vm424 = vmand %vm407, %vm416
      %v425 = vstv %s396
      %vm426 = vcmp.ge.s32.totalorder %v113, %v425
      %vm427 = vmand %vm417, %vm426
      %vm428 = vmand %vm418, %vm426
      %vm429 = vmand %vm419, %vm426
      %vm430 = vmand %vm420, %vm426
      %vm431 = vmand %vm421, %vm426
      %vm432 = vmand %vm422, %vm426
      %vm433 = vmand %vm423, %vm426
      %vm434 = vmand %vm424, %vm426
      %v435 = vstv %s398
      %vm436 = vcmp.lt.s32.totalorder %v113, %v435
      %vm437 = vmand %vm427, %vm436
      %vm438 = vmand %vm428, %vm436
      %vm439 = vmand %vm429, %vm436
      %vm440 = vmand %vm430, %vm436
      %vm441 = vmand %vm431, %vm436
      %vm442 = vmand %vm432, %vm436
      %vm443 = vmand %vm433, %vm436
      %vm444 = vmand %vm434, %vm436
      %v445 = vsel %vm437, %v104, -1e+30
      %v446 = vsel %vm438, %v105, -1e+30
      %v447 = vsel %vm439, %v106, -1e+30
      %v448 = vsel %vm440, %v107, -1e+30
      %v449 = vsel %vm441, %v108, -1e+30
      %v450 = vsel %vm442, %v109, -1e+30
      %v451 = vsel %vm443, %v110, -1e+30
      %v452 = vsel %vm444, %v111, -1e+30
      %v453 = vsel %vm176, %v445, -inf
      %v454 = vsel %vm176, %v446, -inf
      %v455 = vsel %vm176, %v447, -inf
      %v456 = vsel %vm176, %v448, -inf
      %v457 = vsel %vm176, %v449, -inf
      %v458 = vmax.f32 %v453, %v457
      %v459 = vsel %vm176, %v450, -inf
      %v460 = vmax.f32 %v454, %v459
      %v461 = vsel %vm176, %v451, -inf
      %v462 = vmax.f32 %v455, %v461
      %v463 = vsel %vm176, %v452, -inf
      %v464 = vmax.f32 %v456, %v463
      %v465 = vmax.f32 %v458, %v460
      %v466 = vmax.f32 %v462, %v464
      %v467 = vmax.f32 %v465, %v466
      %v468 = vsel %vm176, %v467, -inf
      %v469 = vrot.slane %v468, 4
      %v470 = vmax.f32 %v468, %v469
      %v471 = vrot.slane %v470, 2
      %v472 = vmax.f32 %v470, %v471
      %v473 = vrot.slane %v472, 1
      %v474 = vmax.f32 %v472, %v473
      %p475 = scmp.gt.s32.totalorder %s394, %s392
      %p476 = scmp.gt.s32.totalorder %s398, %s396
      %p477 = pnand %p475, %p476
      %p478 = pneg %p477
      %s479 = scalar_select %p478, 1, 0
      %s480 = scvt.s32.f32 %s479
      %v481 = vstv %s480
      %v482 = vmul.f32 %v474, %v481
      %s483 = sadd.s32 %s114, 16
      %s484 = sld [smem:[#allocation3 + %s483]]
      %s485 = sadd.s32 %s114, 17
      %s486 = sld [smem:[#allocation3 + %s485]]
      %s487 = sadd.s32 %s114, 18
      %s488 = sld [smem:[#allocation3 + %s487]]
      %s489 = sadd.s32 %s114, 19
      %s490 = sld [smem:[#allocation3 + %s489]]
      %v491 = vstv %s484
      %vm492 = vcmp.le.s32.totalorder %v491, 0
      %vm493 = vcmp.le.s32.totalorder %v491, 1
      %vm494 = vcmp.le.s32.totalorder %v491, 2
      %vm495 = vcmp.le.s32.totalorder %v491, 3
      %vm496 = vcmp.le.s32.totalorder %v491, 4
      %vm497 = vcmp.le.s32.totalorder %v491, 5
      %vm498 = vcmp.le.s32.totalorder %v491, 6
      %vm499 = vcmp.le.s32.totalorder %v491, 7
      %v500 = vstv %s486
      %vm501 = vcmp.gt.s32.totalorder %v500, 0
      %vm502 = vcmp.gt.s32.totalorder %v500, 1
      %vm503 = vcmp.gt.s32.totalorder %v500, 2
      %vm504 = vcmp.gt.s32.totalorder %v500, 3
      %vm505 = vcmp.gt.s32.totalorder %v500, 4
      %vm506 = vcmp.gt.s32.totalorder %v500, 5
      %vm507 = vcmp.gt.s32.totalorder %v500, 6
      %vm508 = vcmp.gt.s32.totalorder %v500, 7
      %vm509 = vmand %vm492, %vm501
      %vm510 = vmand %vm493, %vm502
      %vm511 = vmand %vm494, %vm503
      %vm512 = vmand %vm495, %vm504
      %vm513 = vmand %vm496, %vm505
      %vm514 = vmand %vm497, %vm506
      %vm515 = vmand %vm498, %vm507
      %vm516 = vmand %vm499, %vm508
      %v517 = vstv %s488
      %vm518 = vcmp.ge.s32.totalorder %v113, %v517
      %vm519 = vmand %vm509, %vm518
      %vm520 = vmand %vm510, %vm518
      %vm521 = vmand %vm511, %vm518
      %vm522 = vmand %vm512, %vm518
      %vm523 = vmand %vm513, %vm518
      %vm524 = vmand %vm514, %vm518
      %vm525 = vmand %vm515, %vm518
      %vm526 = vmand %vm516, %vm518
      %v527 = vstv %s490
      %vm528 = vcmp.lt.s32.totalorder %v113, %v527
      %vm529 = vmand %vm519, %vm528
      %vm530 = vmand %vm520, %vm528
      %vm531 = vmand %vm521, %vm528
      %vm532 = vmand %vm522, %vm528
      %vm533 = vmand %vm523, %vm528
      %vm534 = vmand %vm524, %vm528
      %vm535 = vmand %vm525, %vm528
      %vm536 = vmand %vm526, %vm528
      %v537 = vsel %vm529, %v104, -1e+30
      %v538 = vsel %vm530, %v105, -1e+30
      %v539 = vsel %vm531, %v106, -1e+30
      %v540 = vsel %vm532, %v107, -1e+30
      %v541 = vsel %vm533, %v108, -1e+30
      %v542 = vsel %vm534, %v109, -1e+30
      %v543 = vsel %vm535, %v110, -1e+30
      %v544 = vsel %vm536, %v111, -1e+30
      %v545 = vsel %vm176, %v537, -inf
      %v546 = vsel %vm176, %v538, -inf
      %v547 = vsel %vm176, %v539, -inf
      %v548 = vsel %vm176, %v540, -inf
      %v549 = vsel %vm176, %v541, -inf
      %v550 = vmax.f32 %v545, %v549
      %v551 = vsel %vm176, %v542, -inf
      %v552 = vmax.f32 %v546, %v551
      %v553 = vsel %vm176, %v543, -inf
      %v554 = vmax.f32 %v547, %v553
      %v555 = vsel %vm176, %v544, -inf
      %v556 = vmax.f32 %v548, %v555
      %v557 = vmax.f32 %v550, %v552
      %v558 = vmax.f32 %v554, %v556
      %v559 = vmax.f32 %v557, %v558
      %v560 = vsel %vm176, %v559, -inf
      %v561 = vrot.slane %v560, 4
      %v562 = vmax.f32 %v560, %v561
      %v563 = vrot.slane %v562, 2
      %v564 = vmax.f32 %v562, %v563
      %v565 = vrot.slane %v564, 1
      %v566 = vmax.f32 %v564, %v565
      %p567 = scmp.gt.s32.totalorder %s486, %s484
      %p568 = scmp.gt.s32.totalorder %s490, %s488
      %p569 = pnand %p567, %p568
      %p570 = pneg %p569
      %s571 = scalar_select %p570, 1, 0
      %s572 = scvt.s32.f32 %s571
      %v573 = vstv %s572
      %v574 = vmul.f32 %v566, %v573
      %s575 = sadd.s32 %s114, 20
      %s576 = sld [smem:[#allocation3 + %s575]]
      %s577 = sadd.s32 %s114, 21
      %s578 = sld [smem:[#allocation3 + %s577]]
      %s579 = sadd.s32 %s114, 22
      %s580 = sld [smem:[#allocation3 + %s579]]
      %s581 = sadd.s32 %s114, 23
      %s582 = sld [smem:[#allocation3 + %s581]]
      %v583 = vstv %s576
      %vm584 = vcmp.le.s32.totalorder %v583, 0
      %vm585 = vcmp.le.s32.totalorder %v583, 1
      %vm586 = vcmp.le.s32.totalorder %v583, 2
      %vm587 = vcmp.le.s32.totalorder %v583, 3
      %vm588 = vcmp.le.s32.totalorder %v583, 4
      %vm589 = vcmp.le.s32.totalorder %v583, 5
      %vm590 = vcmp.le.s32.totalorder %v583, 6
      %vm591 = vcmp.le.s32.totalorder %v583, 7
      %v592 = vstv %s578
      %vm593 = vcmp.gt.s32.totalorder %v592, 0
      %vm594 = vcmp.gt.s32.totalorder %v592, 1
      %vm595 = vcmp.gt.s32.totalorder %v592, 2
      %vm596 = vcmp.gt.s32.totalorder %v592, 3
      %vm597 = vcmp.gt.s32.totalorder %v592, 4
      %vm598 = vcmp.gt.s32.totalorder %v592, 5
      %vm599 = vcmp.gt.s32.totalorder %v592, 6
      %vm600 = vcmp.gt.s32.totalorder %v592, 7
      %vm601 = vmand %vm584, %vm593
      %vm602 = vmand %vm585, %vm594
      %vm603 = vmand %vm586, %vm595
      %vm604 = vmand %vm587, %vm596
      %vm605 = vmand %vm588, %vm597
      %vm606 = vmand %vm589, %vm598
      %vm607 = vmand %vm590, %vm599
      %vm608 = vmand %vm591, %vm600
      %v609 = vstv %s580
      %vm610 = vcmp.ge.s32.totalorder %v113, %v609
      %vm611 = vmand %vm601, %vm610
      %vm612 = vmand %vm602, %vm610
      %vm613 = vmand %vm603, %vm610
      %vm614 = vmand %vm604, %vm610
      %vm615 = vmand %vm605, %vm610
      %vm616 = vmand %vm606, %vm610
      %vm617 = vmand %vm607, %vm610
      %vm618 = vmand %vm608, %vm610
      %v619 = vstv %s582
      %vm620 = vcmp.lt.s32.totalorder %v113, %v619
      %vm621 = vmand %vm611, %vm620
      %vm622 = vmand %vm612, %vm620
      %vm623 = vmand %vm613, %vm620
      %vm624 = vmand %vm614, %vm620
      %vm625 = vmand %vm615, %vm620
      %vm626 = vmand %vm616, %vm620
      %vm627 = vmand %vm617, %vm620
      %vm628 = vmand %vm618, %vm620
      %v629 = vsel %vm621, %v104, -1e+30
      %v630 = vsel %vm622, %v105, -1e+30
      %v631 = vsel %vm623, %v106, -1e+30
      %v632 = vsel %vm624, %v107, -1e+30
      %v633 = vsel %vm625, %v108, -1e+30
      %v634 = vsel %vm626, %v109, -1e+30
      %v635 = vsel %vm627, %v110, -1e+30
      %v636 = vsel %vm628, %v111, -1e+30
      %v637 = vsel %vm176, %v629, -inf
      %v638 = vsel %vm176, %v630, -inf
      %v639 = vsel %vm176, %v631, -inf
      %v640 = vsel %vm176, %v632, -inf
      %v641 = vsel %vm176, %v633, -inf
      %v642 = vmax.f32 %v637, %v641
      %v643 = vsel %vm176, %v634, -inf
      %v644 = vmax.f32 %v638, %v643
      %v645 = vsel %vm176, %v635, -inf
      %v646 = vmax.f32 %v639, %v645
      %v647 = vsel %vm176, %v636, -inf
      %v648 = vmax.f32 %v640, %v647
      %v649 = vmax.f32 %v642, %v644
      %v650 = vmax.f32 %v646, %v648
      %v651 = vmax.f32 %v649, %v650
      %v652 = vsel %vm176, %v651, -inf
      %v653 = vrot.slane %v652, 4
      %v654 = vmax.f32 %v652, %v653
      %v655 = vrot.slane %v654, 2
      %v656 = vmax.f32 %v654, %v655
      %v657 = vrot.slane %v656, 1
      %v658 = vmax.f32 %v656, %v657
      %p659 = scmp.gt.s32.totalorder %s578, %s576
      %p660 = scmp.gt.s32.totalorder %s582, %s580
      %p661 = pnand %p659, %p660
      %p662 = pneg %p661
      %s663 = scalar_select %p662, 1, 0
      %s664 = scvt.s32.f32 %s663
      %v665 = vstv %s664
      %v666 = vmul.f32 %v658, %v665
      %s667 = sadd.s32 %s114, 24
      %s668 = sld [smem:[#allocation3 + %s667]]
      %s669 = sadd.s32 %s114, 25
      %s670 = sld [smem:[#allocation3 + %s669]]
      %s671 = sadd.s32 %s114, 26
      %s672 = sld [smem:[#allocation3 + %s671]]
      %s673 = sadd.s32 %s114, 27
      %s674 = sld [smem:[#allocation3 + %s673]]
      %v675 = vstv %s668
      %vm676 = vcmp.le.s32.totalorder %v675, 0
      %vm677 = vcmp.le.s32.totalorder %v675, 1
      %vm678 = vcmp.le.s32.totalorder %v675, 2
      %vm679 = vcmp.le.s32.totalorder %v675, 3
      %vm680 = vcmp.le.s32.totalorder %v675, 4
      %vm681 = vcmp.le.s32.totalorder %v675, 5
      %vm682 = vcmp.le.s32.totalorder %v675, 6
      %vm683 = vcmp.le.s32.totalorder %v675, 7
      %v684 = vstv %s670
      %vm685 = vcmp.gt.s32.totalorder %v684, 0
      %vm686 = vcmp.gt.s32.totalorder %v684, 1
      %vm687 = vcmp.gt.s32.totalorder %v684, 2
      %vm688 = vcmp.gt.s32.totalorder %v684, 3
      %vm689 = vcmp.gt.s32.totalorder %v684, 4
      %vm690 = vcmp.gt.s32.totalorder %v684, 5
      %vm691 = vcmp.gt.s32.totalorder %v684, 6
      %vm692 = vcmp.gt.s32.totalorder %v684, 7
      %vm693 = vmand %vm676, %vm685
      %vm694 = vmand %vm677, %vm686
      %vm695 = vmand %vm678, %vm687
      %vm696 = vmand %vm679, %vm688
      %vm697 = vmand %vm680, %vm689
      %vm698 = vmand %vm681, %vm690
      %vm699 = vmand %vm682, %vm691
      %vm700 = vmand %vm683, %vm692
      %v701 = vstv %s672
      %vm702 = vcmp.ge.s32.totalorder %v113, %v701
      %vm703 = vmand %vm693, %vm702
      %vm704 = vmand %vm694, %vm702
      %vm705 = vmand %vm695, %vm702
      %vm706 = vmand %vm696, %vm702
      %vm707 = vmand %vm697, %vm702
      %vm708 = vmand %vm698, %vm702
      %vm709 = vmand %vm699, %vm702
      %vm710 = vmand %vm700, %vm702
      %v711 = vstv %s674
      %vm712 = vcmp.lt.s32.totalorder %v113, %v711
      %vm713 = vmand %vm703, %vm712
      %vm714 = vmand %vm704, %vm712
      %vm715 = vmand %vm705, %vm712
      %vm716 = vmand %vm706, %vm712
      %vm717 = vmand %vm707, %vm712
      %vm718 = vmand %vm708, %vm712
      %vm719 = vmand %vm709, %vm712
      %vm720 = vmand %vm710, %vm712
      %v721 = vsel %vm713, %v104, -1e+30
      %v722 = vsel %vm714, %v105, -1e+30
      %v723 = vsel %vm715, %v106, -1e+30
      %v724 = vsel %vm716, %v107, -1e+30
      %v725 = vsel %vm717, %v108, -1e+30
      %v726 = vsel %vm718, %v109, -1e+30
      %v727 = vsel %vm719, %v110, -1e+30
      %v728 = vsel %vm720, %v111, -1e+30
      %v729 = vsel %vm176, %v721, -inf
      %v730 = vsel %vm176, %v722, -inf
      %v731 = vsel %vm176, %v723, -inf
      %v732 = vsel %vm176, %v724, -inf
      %v733 = vsel %vm176, %v725, -inf
      %v734 = vmax.f32 %v729, %v733
      %v735 = vsel %vm176, %v726, -inf
      %v736 = vmax.f32 %v730, %v735
      %v737 = vsel %vm176, %v727, -inf
      %v738 = vmax.f32 %v731, %v737
      %v739 = vsel %vm176, %v728, -inf
      %v740 = vmax.f32 %v732, %v739
      %v741 = vmax.f32 %v734, %v736
      %v742 = vmax.f32 %v738, %v740
      %v743 = vmax.f32 %v741, %v742
      %v744 = vsel %vm176, %v743, -inf
      %v745 = vrot.slane %v744, 4
      %v746 = vmax.f32 %v744, %v745
      %v747 = vrot.slane %v746, 2
      %v748 = vmax.f32 %v746, %v747
      %v749 = vrot.slane %v748, 1
      %v750 = vmax.f32 %v748, %v749
      %p751 = scmp.gt.s32.totalorder %s670, %s668
      %p752 = scmp.gt.s32.totalorder %s674, %s672
      %p753 = pnand %p751, %p752
      %p754 = pneg %p753
      %s755 = scalar_select %p754, 1, 0
      %s756 = scvt.s32.f32 %s755
      %v757 = vstv %s756
      %v758 = vmul.f32 %v750, %v757
      %s759 = sadd.s32 %s114, 28
      %s760 = sld [smem:[#allocation3 + %s759]]
      %s761 = sadd.s32 %s114, 29
      %s762 = sld [smem:[#allocation3 + %s761]]
      %s763 = sadd.s32 %s114, 30
      %s764 = sld [smem:[#allocation3 + %s763]]
      %s765 = sadd.s32 %s114, 31
      %s766 = sld [smem:[#allocation3 + %s765]]
      %v767 = vstv %s760
      %vm768 = vcmp.le.s32.totalorder %v767, 0
      %vm769 = vcmp.le.s32.totalorder %v767, 1
      %vm770 = vcmp.le.s32.totalorder %v767, 2
      %vm771 = vcmp.le.s32.totalorder %v767, 3
      %vm772 = vcmp.le.s32.totalorder %v767, 4
      %vm773 = vcmp.le.s32.totalorder %v767, 5
      %vm774 = vcmp.le.s32.totalorder %v767, 6
      %vm775 = vcmp.le.s32.totalorder %v767, 7
      %v776 = vstv %s762
      %vm777 = vcmp.gt.s32.totalorder %v776, 0
      %vm778 = vcmp.gt.s32.totalorder %v776, 1
      %vm779 = vcmp.gt.s32.totalorder %v776, 2
      %vm780 = vcmp.gt.s32.totalorder %v776, 3
      %vm781 = vcmp.gt.s32.totalorder %v776, 4
      %vm782 = vcmp.gt.s32.totalorder %v776, 5
      %vm783 = vcmp.gt.s32.totalorder %v776, 6
      %vm784 = vcmp.gt.s32.totalorder %v776, 7
      %vm785 = vmand %vm768, %vm777
      %vm786 = vmand %vm769, %vm778
      %vm787 = vmand %vm770, %vm779
      %vm788 = vmand %vm771, %vm780
      %vm789 = vmand %vm772, %vm781
      %vm790 = vmand %vm773, %vm782
      %vm791 = vmand %vm774, %vm783
      %vm792 = vmand %vm775, %vm784
      %v793 = vstv %s764
      %vm794 = vcmp.ge.s32.totalorder %v113, %v793
      %vm795 = vmand %vm785, %vm794
      %vm796 = vmand %vm786, %vm794
      %vm797 = vmand %vm787, %vm794
      %vm798 = vmand %vm788, %vm794
      %vm799 = vmand %vm789, %vm794
      %vm800 = vmand %vm790, %vm794
      %vm801 = vmand %vm791, %vm794
      %vm802 = vmand %vm792, %vm794
      %v803 = vstv %s766
      %vm804 = vcmp.lt.s32.totalorder %v113, %v803
      %vm805 = vmand %vm795, %vm804
      %vm806 = vmand %vm796, %vm804
      %vm807 = vmand %vm797, %vm804
      %vm808 = vmand %vm798, %vm804
      %vm809 = vmand %vm799, %vm804
      %vm810 = vmand %vm800, %vm804
      %vm811 = vmand %vm801, %vm804
      %vm812 = vmand %vm802, %vm804
      %v813 = vsel %vm805, %v104, -1e+30
      %v814 = vsel %vm806, %v105, -1e+30
      %v815 = vsel %vm807, %v106, -1e+30
      %v816 = vsel %vm808, %v107, -1e+30
      %v817 = vsel %vm809, %v108, -1e+30
      %v818 = vsel %vm810, %v109, -1e+30
      %v819 = vsel %vm811, %v110, -1e+30
      %v820 = vsel %vm812, %v111, -1e+30
      %v821 = vsel %vm176, %v813, -inf
      %v822 = vsel %vm176, %v814, -inf
      %v823 = vsel %vm176, %v815, -inf
      %v824 = vsel %vm176, %v816, -inf
      %v825 = vsel %vm176, %v817, -inf
      %v826 = vmax.f32 %v821, %v825
      %v827 = vsel %vm176, %v818, -inf
      %v828 = vmax.f32 %v822, %v827
      %v829 = vsel %vm176, %v819, -inf
      %v830 = vmax.f32 %v823, %v829
      %v831 = vsel %vm176, %v820, -inf
      %v832 = vmax.f32 %v824, %v831
      %v833 = vmax.f32 %v826, %v828
      %v834 = vmax.f32 %v830, %v832
      %v835 = vmax.f32 %v833, %v834
      %v836 = vsel %vm176, %v835, -inf
      %v837 = vrot.slane %v836, 4
      %v838 = vmax.f32 %v836, %v837
      %v839 = vrot.slane %v838, 2
      %v840 = vmax.f32 %v838, %v839
      %v841 = vrot.slane %v840, 1
      %v842 = vmax.f32 %v840, %v841
      %p843 = scmp.gt.s32.totalorder %s762, %s760
      %p844 = scmp.gt.s32.totalorder %s766, %s764
      %p845 = pnand %p843, %p844
      %p846 = pneg %p845
      %s847 = scalar_select %p846, 1, 0
      %s848 = scvt.s32.f32 %s847
      %v849 = vstv %s848
      %v850 = vmul.f32 %v842, %v849
      %s851 = sadd.s32 %s114, 32
      %s852 = sld [smem:[#allocation3 + %s851]]
      %s853 = sadd.s32 %s114, 33
      %s854 = sld [smem:[#allocation3 + %s853]]
      %s855 = sadd.s32 %s114, 34
      %s856 = sld [smem:[#allocation3 + %s855]]
      %s857 = sadd.s32 %s114, 35
      %s858 = sld [smem:[#allocation3 + %s857]]
      %v859 = vstv %s852
      %vm860 = vcmp.le.s32.totalorder %v859, 0
      %vm861 = vcmp.le.s32.totalorder %v859, 1
      %vm862 = vcmp.le.s32.totalorder %v859, 2
      %vm863 = vcmp.le.s32.totalorder %v859, 3
      %vm864 = vcmp.le.s32.totalorder %v859, 4
      %vm865 = vcmp.le.s32.totalorder %v859, 5
      %vm866 = vcmp.le.s32.totalorder %v859, 6
      %vm867 = vcmp.le.s32.totalorder %v859, 7
      %v868 = vstv %s854
      %vm869 = vcmp.gt.s32.totalorder %v868, 0
      %vm870 = vcmp.gt.s32.totalorder %v868, 1
      %vm871 = vcmp.gt.s32.totalorder %v868, 2
      %vm872 = vcmp.gt.s32.totalorder %v868, 3
      %vm873 = vcmp.gt.s32.totalorder %v868, 4
      %vm874 = vcmp.gt.s32.totalorder %v868, 5
      %vm875 = vcmp.gt.s32.totalorder %v868, 6
      %vm876 = vcmp.gt.s32.totalorder %v868, 7
      %vm877 = vmand %vm860, %vm869
      %vm878 = vmand %vm861, %vm870
      %vm879 = vmand %vm862, %vm871
      %vm880 = vmand %vm863, %vm872
      %vm881 = vmand %vm864, %vm873
      %vm882 = vmand %vm865, %vm874
      %vm883 = vmand %vm866, %vm875
      %vm884 = vmand %vm867, %vm876
      %v885 = vstv %s856
      %vm886 = vcmp.ge.s32.totalorder %v113, %v885
      %vm887 = vmand %vm877, %vm886
      %vm888 = vmand %vm878, %vm886
      %vm889 = vmand %vm879, %vm886
      %vm890 = vmand %vm880, %vm886
      %vm891 = vmand %vm881, %vm886
      %vm892 = vmand %vm882, %vm886
      %vm893 = vmand %vm883, %vm886
      %vm894 = vmand %vm884, %vm886
      %v895 = vstv %s858
      %vm896 = vcmp.lt.s32.totalorder %v113, %v895
      %vm897 = vmand %vm887, %vm896
      %vm898 = vmand %vm888, %vm896
      %vm899 = vmand %vm889, %vm896
      %vm900 = vmand %vm890, %vm896
      %vm901 = vmand %vm891, %vm896
      %vm902 = vmand %vm892, %vm896
      %vm903 = vmand %vm893, %vm896
      %vm904 = vmand %vm894, %vm896
      %v905 = vsel %vm897, %v104, -1e+30
      %v906 = vsel %vm898, %v105, -1e+30
      %v907 = vsel %vm899, %v106, -1e+30
      %v908 = vsel %vm900, %v107, -1e+30
      %v909 = vsel %vm901, %v108, -1e+30
      %v910 = vsel %vm902, %v109, -1e+30
      %v911 = vsel %vm903, %v110, -1e+30
      %v912 = vsel %vm904, %v111, -1e+30
      %v913 = vsel %vm176, %v905, -inf
      %v914 = vsel %vm176, %v906, -inf
      %v915 = vsel %vm176, %v907, -inf
      %v916 = vsel %vm176, %v908, -inf
      %v917 = vsel %vm176, %v909, -inf
      %v918 = vmax.f32 %v913, %v917
      %v919 = vsel %vm176, %v910, -inf
      %v920 = vmax.f32 %v914, %v919
      %v921 = vsel %vm176, %v911, -inf
      %v922 = vmax.f32 %v915, %v921
      %v923 = vsel %vm176, %v912, -inf
      %v924 = vmax.f32 %v916, %v923
      %v925 = vmax.f32 %v918, %v920
      %v926 = vmax.f32 %v922, %v924
      %v927 = vmax.f32 %v925, %v926
      %v928 = vsel %vm176, %v927, -inf
      %v929 = vrot.slane %v928, 4
      %v930 = vmax.f32 %v928, %v929
      %v931 = vrot.slane %v930, 2
      %v932 = vmax.f32 %v930, %v931
      %v933 = vrot.slane %v932, 1
      %v934 = vmax.f32 %v932, %v933
      %p935 = scmp.gt.s32.totalorder %s854, %s852
      %p936 = scmp.gt.s32.totalorder %s858, %s856
      %p937 = pnand %p935, %p936
      %p938 = pneg %p937
      %s939 = scalar_select %p938, 1, 0
      %s940 = scvt.s32.f32 %s939
      %v941 = vstv %s940
      %v942 = vmul.f32 %v934, %v941
      %s943 = sadd.s32 %s114, 36
      %s944 = sld [smem:[#allocation3 + %s943]]
      %s945 = sadd.s32 %s114, 37
      %s946 = sld [smem:[#allocation3 + %s945]]
      %s947 = sadd.s32 %s114, 38
      %s948 = sld [smem:[#allocation3 + %s947]]
      %s949 = sadd.s32 %s114, 39
      %s950 = sld [smem:[#allocation3 + %s949]]
      %v951 = vstv %s944
      %vm952 = vcmp.le.s32.totalorder %v951, 0
      %vm953 = vcmp.le.s32.totalorder %v951, 1
      %vm954 = vcmp.le.s32.totalorder %v951, 2
      %vm955 = vcmp.le.s32.totalorder %v951, 3
      %vm956 = vcmp.le.s32.totalorder %v951, 4
      %vm957 = vcmp.le.s32.totalorder %v951, 5
      %vm958 = vcmp.le.s32.totalorder %v951, 6
      %vm959 = vcmp.le.s32.totalorder %v951, 7
      %v960 = vstv %s946
      %vm961 = vcmp.gt.s32.totalorder %v960, 0
      %vm962 = vcmp.gt.s32.totalorder %v960, 1
      %vm963 = vcmp.gt.s32.totalorder %v960, 2
      %vm964 = vcmp.gt.s32.totalorder %v960, 3
      %vm965 = vcmp.gt.s32.totalorder %v960, 4
      %vm966 = vcmp.gt.s32.totalorder %v960, 5
      %vm967 = vcmp.gt.s32.totalorder %v960, 6
      %vm968 = vcmp.gt.s32.totalorder %v960, 7
      %vm969 = vmand %vm952, %vm961
      %vm970 = vmand %vm953, %vm962
      %vm971 = vmand %vm954, %vm963
      %vm972 = vmand %vm955, %vm964
      %vm973 = vmand %vm956, %vm965
      %vm974 = vmand %vm957, %vm966
      %vm975 = vmand %vm958, %vm967
      %vm976 = vmand %vm959, %vm968
      %v977 = vstv %s948
      %vm978 = vcmp.ge.s32.totalorder %v113, %v977
      %vm979 = vmand %vm969, %vm978
      %vm980 = vmand %vm970, %vm978
      %vm981 = vmand %vm971, %vm978
      %vm982 = vmand %vm972, %vm978
      %vm983 = vmand %vm973, %vm978
      %vm984 = vmand %vm974, %vm978
      %vm985 = vmand %vm975, %vm978
      %vm986 = vmand %vm976, %vm978
      %v987 = vstv %s950
      %vm988 = vcmp.lt.s32.totalorder %v113, %v987
      %vm989 = vmand %vm979, %vm988
      %vm990 = vmand %vm980, %vm988
      %vm991 = vmand %vm981, %vm988
      %vm992 = vmand %vm982, %vm988
      %vm993 = vmand %vm983, %vm988
      %vm994 = vmand %vm984, %vm988
      %vm995 = vmand %vm985, %vm988
      %vm996 = vmand %vm986, %vm988
      %v997 = vsel %vm989, %v104, -1e+30
      %v998 = vsel %vm990, %v105, -1e+30
      %v999 = vsel %vm991, %v106, -1e+30
      %v1000 = vsel %vm992, %v107, -1e+30
      %v1001 = vsel %vm993, %v108, -1e+30
      %v1002 = vsel %vm994, %v109, -1e+30
      %v1003 = vsel %vm995, %v110, -1e+30
      %v1004 = vsel %vm996, %v111, -1e+30
      %v1005 = vsel %vm176, %v997, -inf
      %v1006 = vsel %vm176, %v998, -inf
      %v1007 = vsel %vm176, %v999, -inf
      %v1008 = vsel %vm176, %v1000, -inf
      %v1009 = vsel %vm176, %v1001, -inf
      %v1010 = vmax.f32 %v1005, %v1009
      %v1011 = vsel %vm176, %v1002, -inf
      %v1012 = vmax.f32 %v1006, %v1011
      %v1013 = vsel %vm176, %v1003, -inf
      %v1014 = vmax.f32 %v1007, %v1013
      %v1015 = vsel %vm176, %v1004, -inf
      %v1016 = vmax.f32 %v1008, %v1015
      %v1017 = vmax.f32 %v1010, %v1012
      %v1018 = vmax.f32 %v1014, %v1016
      %v1019 = vmax.f32 %v1017, %v1018
      %v1020 = vsel %vm176, %v1019, -inf
      %v1021 = vrot.slane %v1020, 4
      %v1022 = vmax.f32 %v1020, %v1021
      %v1023 = vrot.slane %v1022, 2
      %v1024 = vmax.f32 %v1022, %v1023
      %v1025 = vrot.slane %v1024, 1
      %v1026 = vmax.f32 %v1024, %v1025
      %p1027 = scmp.gt.s32.totalorder %s946, %s944
      %p1028 = scmp.gt.s32.totalorder %s950, %s948
      %p1029 = pnand %p1027, %p1028
      %p1030 = pneg %p1029
      %s1031 = scalar_select %p1030, 1, 0
      %s1032 = scvt.s32.f32 %s1031
      %v1033 = vstv %s1032
      %v1034 = vmul.f32 %v1026, %v1033
      %s1035 = sadd.s32 %s114, 40
      %s1036 = sld [smem:[#allocation3 + %s1035]]
      %s1037 = sadd.s32 %s114, 41
      %s1038 = sld [smem:[#allocation3 + %s1037]]
      %s1039 = sadd.s32 %s114, 42
      %s1040 = sld [smem:[#allocation3 + %s1039]]
      %s1041 = sadd.s32 %s114, 43
      %s1042 = sld [smem:[#allocation3 + %s1041]]
      %v1043 = vstv %s1036
      %vm1044 = vcmp.le.s32.totalorder %v1043, 0
      %vm1045 = vcmp.le.s32.totalorder %v1043, 1
      %vm1046 = vcmp.le.s32.totalorder %v1043, 2
      %vm1047 = vcmp.le.s32.totalorder %v1043, 3
      %vm1048 = vcmp.le.s32.totalorder %v1043, 4
      %vm1049 = vcmp.le.s32.totalorder %v1043, 5
      %vm1050 = vcmp.le.s32.totalorder %v1043, 6
      %vm1051 = vcmp.le.s32.totalorder %v1043, 7
      %v1052 = vstv %s1038
      %vm1053 = vcmp.gt.s32.totalorder %v1052, 0
      %vm1054 = vcmp.gt.s32.totalorder %v1052, 1
      %vm1055 = vcmp.gt.s32.totalorder %v1052, 2
      %vm1056 = vcmp.gt.s32.totalorder %v1052, 3
      %vm1057 = vcmp.gt.s32.totalorder %v1052, 4
      %vm1058 = vcmp.gt.s32.totalorder %v1052, 5
      %vm1059 = vcmp.gt.s32.totalorder %v1052, 6
      %vm1060 = vcmp.gt.s32.totalorder %v1052, 7
      %vm1061 = vmand %vm1044, %vm1053
      %vm1062 = vmand %vm1045, %vm1054
      %vm1063 = vmand %vm1046, %vm1055
      %vm1064 = vmand %vm1047, %vm1056
      %vm1065 = vmand %vm1048, %vm1057
      %vm1066 = vmand %vm1049, %vm1058
      %vm1067 = vmand %vm1050, %vm1059
      %vm1068 = vmand %vm1051, %vm1060
      %v1069 = vstv %s1040
      %vm1070 = vcmp.ge.s32.totalorder %v113, %v1069
      %vm1071 = vmand %vm1061, %vm1070
      %vm1072 = vmand %vm1062, %vm1070
      %vm1073 = vmand %vm1063, %vm1070
      %vm1074 = vmand %vm1064, %vm1070
      %vm1075 = vmand %vm1065, %vm1070
      %vm1076 = vmand %vm1066, %vm1070
      %vm1077 = vmand %vm1067, %vm1070
      %vm1078 = vmand %vm1068, %vm1070
      %v1079 = vstv %s1042
      %vm1080 = vcmp.lt.s32.totalorder %v113, %v1079
      %vm1081 = vmand %vm1071, %vm1080
      %vm1082 = vmand %vm1072, %vm1080
      %vm1083 = vmand %vm1073, %vm1080
      %vm1084 = vmand %vm1074, %vm1080
      %vm1085 = vmand %vm1075, %vm1080
      %vm1086 = vmand %vm1076, %vm1080
      %vm1087 = vmand %vm1077, %vm1080
      %vm1088 = vmand %vm1078, %vm1080
      %v1089 = vsel %vm1081, %v104, -1e+30
      %v1090 = vsel %vm1082, %v105, -1e+30
      %v1091 = vsel %vm1083, %v106, -1e+30
      %v1092 = vsel %vm1084, %v107, -1e+30
      %v1093 = vsel %vm1085, %v108, -1e+30
      %v1094 = vsel %vm1086, %v109, -1e+30
      %v1095 = vsel %vm1087, %v110, -1e+30
      %v1096 = vsel %vm1088, %v111, -1e+30
      %v1097 = vsel %vm176, %v1089, -inf
      %v1098 = vsel %vm176, %v1090, -inf
      %v1099 = vsel %vm176, %v1091, -inf
      %v1100 = vsel %vm176, %v1092, -inf
      %v1101 = vsel %vm176, %v1093, -inf
      %v1102 = vmax.f32 %v1097, %v1101
      %v1103 = vsel %vm176, %v1094, -inf
      %v1104 = vmax.f32 %v1098, %v1103
      %v1105 = vsel %vm176, %v1095, -inf
      %v1106 = vmax.f32 %v1099, %v1105
      %v1107 = vsel %vm176, %v1096, -inf
      %v1108 = vmax.f32 %v1100, %v1107
      %v1109 = vmax.f32 %v1102, %v1104
      %v1110 = vmax.f32 %v1106, %v1108
      %v1111 = vmax.f32 %v1109, %v1110
      %v1112 = vsel %vm176, %v1111, -inf
      %v1113 = vrot.slane %v1112, 4
      %v1114 = vmax.f32 %v1112, %v1113
      %v1115 = vrot.slane %v1114, 2
      %v1116 = vmax.f32 %v1114, %v1115
      %v1117 = vrot.slane %v1116, 1
      %v1118 = vmax.f32 %v1116, %v1117
      %p1119 = scmp.gt.s32.totalorder %s1038, %s1036
      %p1120 = scmp.gt.s32.totalorder %s1042, %s1040
      %p1121 = pnand %p1119, %p1120
      %p1122 = pneg %p1121
      %s1123 = scalar_select %p1122, 1, 0
      %s1124 = scvt.s32.f32 %s1123
      %v1125 = vstv %s1124
      %v1126 = vmul.f32 %v1118, %v1125
      %s1127 = sadd.s32 %s114, 44
      %s1128 = sld [smem:[#allocation3 + %s1127]]
      %s1129 = sadd.s32 %s114, 45
      %s1130 = sld [smem:[#allocation3 + %s1129]]
      %s1131 = sadd.s32 %s114, 46
      %s1132 = sld [smem:[#allocation3 + %s1131]]
      %s1133 = sadd.s32 %s114, 47
      %s1134 = sld [smem:[#allocation3 + %s1133]]
      %v1135 = vstv %s1128
      %vm1136 = vcmp.le.s32.totalorder %v1135, 0
      %vm1137 = vcmp.le.s32.totalorder %v1135, 1
      %vm1138 = vcmp.le.s32.totalorder %v1135, 2
      %vm1139 = vcmp.le.s32.totalorder %v1135, 3
      %vm1140 = vcmp.le.s32.totalorder %v1135, 4
      %vm1141 = vcmp.le.s32.totalorder %v1135, 5
      %vm1142 = vcmp.le.s32.totalorder %v1135, 6
      %vm1143 = vcmp.le.s32.totalorder %v1135, 7
      %v1144 = vstv %s1130
      %vm1145 = vcmp.gt.s32.totalorder %v1144, 0
      %vm1146 = vcmp.gt.s32.totalorder %v1144, 1
      %vm1147 = vcmp.gt.s32.totalorder %v1144, 2
      %vm1148 = vcmp.gt.s32.totalorder %v1144, 3
      %vm1149 = vcmp.gt.s32.totalorder %v1144, 4
      %vm1150 = vcmp.gt.s32.totalorder %v1144, 5
      %vm1151 = vcmp.gt.s32.totalorder %v1144, 6
      %vm1152 = vcmp.gt.s32.totalorder %v1144, 7
      %vm1153 = vmand %vm1136, %vm1145
      %vm1154 = vmand %vm1137, %vm1146
      %vm1155 = vmand %vm1138, %vm1147
      %vm1156 = vmand %vm1139, %vm1148
      %vm1157 = vmand %vm1140, %vm1149
      %vm1158 = vmand %vm1141, %vm1150
      %vm1159 = vmand %vm1142, %vm1151
      %vm1160 = vmand %vm1143, %vm1152
      %v1161 = vstv %s1132
      %vm1162 = vcmp.ge.s32.totalorder %v113, %v1161
      %vm1163 = vmand %vm1153, %vm1162
      %vm1164 = vmand %vm1154, %vm1162
      %vm1165 = vmand %vm1155, %vm1162
      %vm1166 = vmand %vm1156, %vm1162
      %vm1167 = vmand %vm1157, %vm1162
      %vm1168 = vmand %vm1158, %vm1162
      %vm1169 = vmand %vm1159, %vm1162
      %vm1170 = vmand %vm1160, %vm1162
      %v1171 = vstv %s1134
      %vm1172 = vcmp.lt.s32.totalorder %v113, %v1171
      %vm1173 = vmand %vm1163, %vm1172
      %vm1174 = vmand %vm1164, %vm1172
      %vm1175 = vmand %vm1165, %vm1172
      %vm1176 = vmand %vm1166, %vm1172
      %vm1177 = vmand %vm1167, %vm1172
      %vm1178 = vmand %vm1168, %vm1172
      %vm1179 = vmand %vm1169, %vm1172
      %vm1180 = vmand %vm1170, %vm1172
      %v1181 = vsel %vm1173, %v104, -1e+30
      %v1182 = vsel %vm1174, %v105, -1e+30
      %v1183 = vsel %vm1175, %v106, -1e+30
      %v1184 = vsel %vm1176, %v107, -1e+30
      %v1185 = vsel %vm1177, %v108, -1e+30
      %v1186 = vsel %vm1178, %v109, -1e+30
      %v1187 = vsel %vm1179, %v110, -1e+30
      %v1188 = vsel %vm1180, %v111, -1e+30
      %v1189 = vsel %vm176, %v1181, -inf
      %v1190 = vsel %vm176, %v1182, -inf
      %v1191 = vsel %vm176, %v1183, -inf
      %v1192 = vsel %vm176, %v1184, -inf
      %v1193 = vsel %vm176, %v1185, -inf
      %v1194 = vmax.f32 %v1189, %v1193
      %v1195 = vsel %vm176, %v1186, -inf
      %v1196 = vmax.f32 %v1190, %v1195
      %v1197 = vsel %vm176, %v1187, -inf
      %v1198 = vmax.f32 %v1191, %v1197
      %v1199 = vsel %vm176, %v1188, -inf
      %v1200 = vmax.f32 %v1192, %v1199
      %v1201 = vmax.f32 %v1194, %v1196
      %v1202 = vmax.f32 %v1198, %v1200
      %v1203 = vmax.f32 %v1201, %v1202
      %v1204 = vsel %vm176, %v1203, -inf
      %v1205 = vrot.slane %v1204, 4
      %v1206 = vmax.f32 %v1204, %v1205
      %v1207 = vrot.slane %v1206, 2
      %v1208 = vmax.f32 %v1206, %v1207
      %v1209 = vrot.slane %v1208, 1
      %v1210 = vmax.f32 %v1208, %v1209
      %p1211 = scmp.gt.s32.totalorder %s1130, %s1128
      %p1212 = scmp.gt.s32.totalorder %s1134, %s1132
      %p1213 = pnand %p1211, %p1212
      %p1214 = pneg %p1213
      %s1215 = scalar_select %p1214, 1, 0
      %s1216 = scvt.s32.f32 %s1215
      %v1217 = vstv %s1216
      %v1218 = vmul.f32 %v1210, %v1217
      %s1219 = sadd.s32 %s114, 48
      %s1220 = sld [smem:[#allocation3 + %s1219]]
      %s1221 = sadd.s32 %s114, 49
      %s1222 = sld [smem:[#allocation3 + %s1221]]
      %s1223 = sadd.s32 %s114, 50
      %s1224 = sld [smem:[#allocation3 + %s1223]]
      %s1225 = sadd.s32 %s114, 51
      %s1226 = sld [smem:[#allocation3 + %s1225]]
      %v1227 = vstv %s1220
      %vm1228 = vcmp.le.s32.totalorder %v1227, 0
      %vm1229 = vcmp.le.s32.totalorder %v1227, 1
      %vm1230 = vcmp.le.s32.totalorder %v1227, 2
      %vm1231 = vcmp.le.s32.totalorder %v1227, 3
      %vm1232 = vcmp.le.s32.totalorder %v1227, 4
      %vm1233 = vcmp.le.s32.totalorder %v1227, 5
      %vm1234 = vcmp.le.s32.totalorder %v1227, 6
      %vm1235 = vcmp.le.s32.totalorder %v1227, 7
      %v1236 = vstv %s1222
      %vm1237 = vcmp.gt.s32.totalorder %v1236, 0
      %vm1238 = vcmp.gt.s32.totalorder %v1236, 1
      %vm1239 = vcmp.gt.s32.totalorder %v1236, 2
      %vm1240 = vcmp.gt.s32.totalorder %v1236, 3
      %vm1241 = vcmp.gt.s32.totalorder %v1236, 4
      %vm1242 = vcmp.gt.s32.totalorder %v1236, 5
      %vm1243 = vcmp.gt.s32.totalorder %v1236, 6
      %vm1244 = vcmp.gt.s32.totalorder %v1236, 7
      %vm1245 = vmand %vm1228, %vm1237
      %vm1246 = vmand %vm1229, %vm1238
      %vm1247 = vmand %vm1230, %vm1239
      %vm1248 = vmand %vm1231, %vm1240
      %vm1249 = vmand %vm1232, %vm1241
      %vm1250 = vmand %vm1233, %vm1242
      %vm1251 = vmand %vm1234, %vm1243
      %vm1252 = vmand %vm1235, %vm1244
      %v1253 = vstv %s1224
      %vm1254 = vcmp.ge.s32.totalorder %v113, %v1253
      %vm1255 = vmand %vm1245, %vm1254
      %vm1256 = vmand %vm1246, %vm1254
      %vm1257 = vmand %vm1247, %vm1254
      %vm1258 = vmand %vm1248, %vm1254
      %vm1259 = vmand %vm1249, %vm1254
      %vm1260 = vmand %vm1250, %vm1254
      %vm1261 = vmand %vm1251, %vm1254
      %vm1262 = vmand %vm1252, %vm1254
      %v1263 = vstv %s1226
      %vm1264 = vcmp.lt.s32.totalorder %v113, %v1263
      %vm1265 = vmand %vm1255, %vm1264
      %vm1266 = vmand %vm1256, %vm1264
      %vm1267 = vmand %vm1257, %vm1264
      %vm1268 = vmand %vm1258, %vm1264
      %vm1269 = vmand %vm1259, %vm1264
      %vm1270 = vmand %vm1260, %vm1264
      %vm1271 = vmand %vm1261, %vm1264
      %vm1272 = vmand %vm1262, %vm1264
      %v1273 = vsel %vm1265, %v104, -1e+30
      %v1274 = vsel %vm1266, %v105, -1e+30
      %v1275 = vsel %vm1267, %v106, -1e+30
      %v1276 = vsel %vm1268, %v107, -1e+30
      %v1277 = vsel %vm1269, %v108, -1e+30
      %v1278 = vsel %vm1270, %v109, -1e+30
      %v1279 = vsel %vm1271, %v110, -1e+30
      %v1280 = vsel %vm1272, %v111, -1e+30
      %v1281 = vsel %vm176, %v1273, -inf
      %v1282 = vsel %vm176, %v1274, -inf
      %v1283 = vsel %vm176, %v1275, -inf
      %v1284 = vsel %vm176, %v1276, -inf
      %v1285 = vsel %vm176, %v1277, -inf
      %v1286 = vmax.f32 %v1281, %v1285
      %v1287 = vsel %vm176, %v1278, -inf
      %v1288 = vmax.f32 %v1282, %v1287
      %v1289 = vsel %vm176, %v1279, -inf
      %v1290 = vmax.f32 %v1283, %v1289
      %v1291 = vsel %vm176, %v1280, -inf
      %v1292 = vmax.f32 %v1284, %v1291
      %v1293 = vmax.f32 %v1286, %v1288
      %v1294 = vmax.f32 %v1290, %v1292
      %v1295 = vmax.f32 %v1293, %v1294
      %v1296 = vsel %vm176, %v1295, -inf
      %v1297 = vrot.slane %v1296, 4
      %v1298 = vmax.f32 %v1296, %v1297
      %v1299 = vrot.slane %v1298, 2
      %v1300 = vmax.f32 %v1298, %v1299
      %v1301 = vrot.slane %v1300, 1
      %v1302 = vmax.f32 %v1300, %v1301
      %p1303 = scmp.gt.s32.totalorder %s1222, %s1220
      %p1304 = scmp.gt.s32.totalorder %s1226, %s1224
      %p1305 = pnand %p1303, %p1304
      %p1306 = pneg %p1305
      %s1307 = scalar_select %p1306, 1, 0
      %s1308 = scvt.s32.f32 %s1307
      %v1309 = vstv %s1308
      %v1310 = vmul.f32 %v1302, %v1309
      %s1311 = sadd.s32 %s114, 52
      %s1312 = sld [smem:[#allocation3 + %s1311]]
      %s1313 = sadd.s32 %s114, 53
      %s1314 = sld [smem:[#allocation3 + %s1313]]
      %s1315 = sadd.s32 %s114, 54
      %s1316 = sld [smem:[#allocation3 + %s1315]]
      %s1317 = sadd.s32 %s114, 55
      %s1318 = sld [smem:[#allocation3 + %s1317]]
      %v1319 = vstv %s1312
      %vm1320 = vcmp.le.s32.totalorder %v1319, 0
      %vm1321 = vcmp.le.s32.totalorder %v1319, 1
      %vm1322 = vcmp.le.s32.totalorder %v1319, 2
      %vm1323 = vcmp.le.s32.totalorder %v1319, 3
      %vm1324 = vcmp.le.s32.totalorder %v1319, 4
      %vm1325 = vcmp.le.s32.totalorder %v1319, 5
      %vm1326 = vcmp.le.s32.totalorder %v1319, 6
      %vm1327 = vcmp.le.s32.totalorder %v1319, 7
      %v1328 = vstv %s1314
      %vm1329 = vcmp.gt.s32.totalorder %v1328, 0
      %vm1330 = vcmp.gt.s32.totalorder %v1328, 1
      %vm1331 = vcmp.gt.s32.totalorder %v1328, 2
      %vm1332 = vcmp.gt.s32.totalorder %v1328, 3
      %vm1333 = vcmp.gt.s32.totalorder %v1328, 4
      %vm1334 = vcmp.gt.s32.totalorder %v1328, 5
      %vm1335 = vcmp.gt.s32.totalorder %v1328, 6
      %vm1336 = vcmp.gt.s32.totalorder %v1328, 7
      %vm1337 = vmand %vm1320, %vm1329
      %vm1338 = vmand %vm1321, %vm1330
      %vm1339 = vmand %vm1322, %vm1331
      %vm1340 = vmand %vm1323, %vm1332
      %vm1341 = vmand %vm1324, %vm1333
      %vm1342 = vmand %vm1325, %vm1334
      %vm1343 = vmand %vm1326, %vm1335
      %vm1344 = vmand %vm1327, %vm1336
      %v1345 = vstv %s1316
      %vm1346 = vcmp.ge.s32.totalorder %v113, %v1345
      %vm1347 = vmand %vm1337, %vm1346
      %vm1348 = vmand %vm1338, %vm1346
      %vm1349 = vmand %vm1339, %vm1346
      %vm1350 = vmand %vm1340, %vm1346
      %vm1351 = vmand %vm1341, %vm1346
      %vm1352 = vmand %vm1342, %vm1346
      %vm1353 = vmand %vm1343, %vm1346
      %vm1354 = vmand %vm1344, %vm1346
      %v1355 = vstv %s1318
      %vm1356 = vcmp.lt.s32.totalorder %v113, %v1355
      %vm1357 = vmand %vm1347, %vm1356
      %vm1358 = vmand %vm1348, %vm1356
      %vm1359 = vmand %vm1349, %vm1356
      %vm1360 = vmand %vm1350, %vm1356
      %vm1361 = vmand %vm1351, %vm1356
      %vm1362 = vmand %vm1352, %vm1356
      %vm1363 = vmand %vm1353, %vm1356
      %vm1364 = vmand %vm1354, %vm1356
      %v1365 = vsel %vm1357, %v104, -1e+30
      %v1366 = vsel %vm1358, %v105, -1e+30
      %v1367 = vsel %vm1359, %v106, -1e+30
      %v1368 = vsel %vm1360, %v107, -1e+30
      %v1369 = vsel %vm1361, %v108, -1e+30
      %v1370 = vsel %vm1362, %v109, -1e+30
      %v1371 = vsel %vm1363, %v110, -1e+30
      %v1372 = vsel %vm1364, %v111, -1e+30
      %v1373 = vsel %vm176, %v1365, -inf
      %v1374 = vsel %vm176, %v1366, -inf
      %v1375 = vsel %vm176, %v1367, -inf
      %v1376 = vsel %vm176, %v1368, -inf
      %v1377 = vsel %vm176, %v1369, -inf
      %v1378 = vmax.f32 %v1373, %v1377
      %v1379 = vsel %vm176, %v1370, -inf
      %v1380 = vmax.f32 %v1374, %v1379
      %v1381 = vsel %vm176, %v1371, -inf
      %v1382 = vmax.f32 %v1375, %v1381
      %v1383 = vsel %vm176, %v1372, -inf
      %v1384 = vmax.f32 %v1376, %v1383
      %v1385 = vmax.f32 %v1378, %v1380
      %v1386 = vmax.f32 %v1382, %v1384
      %v1387 = vmax.f32 %v1385, %v1386
      %v1388 = vsel %vm176, %v1387, -inf
      %v1389 = vrot.slane %v1388, 4
      %v1390 = vmax.f32 %v1388, %v1389
      %v1391 = vrot.slane %v1390, 2
      %v1392 = vmax.f32 %v1390, %v1391
      %v1393 = vrot.slane %v1392, 1
      %v1394 = vmax.f32 %v1392, %v1393
      %p1395 = scmp.gt.s32.totalorder %s1314, %s1312
      %p1396 = scmp.gt.s32.totalorder %s1318, %s1316
      %p1397 = pnand %p1395, %p1396
      %p1398 = pneg %p1397
      %s1399 = scalar_select %p1398, 1, 0
      %s1400 = scvt.s32.f32 %s1399
      %v1401 = vstv %s1400
      %v1402 = vmul.f32 %v1394, %v1401
      %s1403 = sadd.s32 %s114, 56
      %s1404 = sld [smem:[#allocation3 + %s1403]]
      %s1405 = sadd.s32 %s114, 57
      %s1406 = sld [smem:[#allocation3 + %s1405]]
      %s1407 = sadd.s32 %s114, 58
      %s1408 = sld [smem:[#allocation3 + %s1407]]
      %s1409 = sadd.s32 %s114, 59
      %s1410 = sld [smem:[#allocation3 + %s1409]]
      %v1411 = vstv %s1404
      %vm1412 = vcmp.le.s32.totalorder %v1411, 0
      %vm1413 = vcmp.le.s32.totalorder %v1411, 1
      %vm1414 = vcmp.le.s32.totalorder %v1411, 2
      %vm1415 = vcmp.le.s32.totalorder %v1411, 3
      %vm1416 = vcmp.le.s32.totalorder %v1411, 4
      %vm1417 = vcmp.le.s32.totalorder %v1411, 5
      %vm1418 = vcmp.le.s32.totalorder %v1411, 6
      %vm1419 = vcmp.le.s32.totalorder %v1411, 7
      %v1420 = vstv %s1406
      %vm1421 = vcmp.gt.s32.totalorder %v1420, 0
      %vm1422 = vcmp.gt.s32.totalorder %v1420, 1
      %vm1423 = vcmp.gt.s32.totalorder %v1420, 2
      %vm1424 = vcmp.gt.s32.totalorder %v1420, 3
      %vm1425 = vcmp.gt.s32.totalorder %v1420, 4
      %vm1426 = vcmp.gt.s32.totalorder %v1420, 5
      %vm1427 = vcmp.gt.s32.totalorder %v1420, 6
      %vm1428 = vcmp.gt.s32.totalorder %v1420, 7
      %vm1429 = vmand %vm1412, %vm1421
      %vm1430 = vmand %vm1413, %vm1422
      %vm1431 = vmand %vm1414, %vm1423
      %vm1432 = vmand %vm1415, %vm1424
      %vm1433 = vmand %vm1416, %vm1425
      %vm1434 = vmand %vm1417, %vm1426
      %vm1435 = vmand %vm1418, %vm1427
      %vm1436 = vmand %vm1419, %vm1428
      %v1437 = vstv %s1408
      %vm1438 = vcmp.ge.s32.totalorder %v113, %v1437
      %vm1439 = vmand %vm1429, %vm1438
      %vm1440 = vmand %vm1430, %vm1438
      %vm1441 = vmand %vm1431, %vm1438
      %vm1442 = vmand %vm1432, %vm1438
      %vm1443 = vmand %vm1433, %vm1438
      %vm1444 = vmand %vm1434, %vm1438
      %vm1445 = vmand %vm1435, %vm1438
      %vm1446 = vmand %vm1436, %vm1438
      %v1447 = vstv %s1410
      %vm1448 = vcmp.lt.s32.totalorder %v113, %v1447
      %vm1449 = vmand %vm1439, %vm1448
      %vm1450 = vmand %vm1440, %vm1448
      %vm1451 = vmand %vm1441, %vm1448
      %vm1452 = vmand %vm1442, %vm1448
      %vm1453 = vmand %vm1443, %vm1448
      %vm1454 = vmand %vm1444, %vm1448
      %vm1455 = vmand %vm1445, %vm1448
      %vm1456 = vmand %vm1446, %vm1448
      %v1457 = vsel %vm1449, %v104, -1e+30
      %v1458 = vsel %vm1450, %v105, -1e+30
      %v1459 = vsel %vm1451, %v106, -1e+30
      %v1460 = vsel %vm1452, %v107, -1e+30
      %v1461 = vsel %vm1453, %v108, -1e+30
      %v1462 = vsel %vm1454, %v109, -1e+30
      %v1463 = vsel %vm1455, %v110, -1e+30
      %v1464 = vsel %vm1456, %v111, -1e+30
      %v1465 = vsel %vm176, %v1457, -inf
      %v1466 = vsel %vm176, %v1458, -inf
      %v1467 = vsel %vm176, %v1459, -inf
      %v1468 = vsel %vm176, %v1460, -inf
      %v1469 = vsel %vm176, %v1461, -inf
      %v1470 = vmax.f32 %v1465, %v1469
      %v1471 = vsel %vm176, %v1462, -inf
      %v1472 = vmax.f32 %v1466, %v1471
      %v1473 = vsel %vm176, %v1463, -inf
      %v1474 = vmax.f32 %v1467, %v1473
      %v1475 = vsel %vm176, %v1464, -inf
      %v1476 = vmax.f32 %v1468, %v1475
      %v1477 = vmax.f32 %v1470, %v1472
      %v1478 = vmax.f32 %v1474, %v1476
      %v1479 = vmax.f32 %v1477, %v1478
      %v1480 = vsel %vm176, %v1479, -inf
      %v1481 = vrot.slane %v1480, 4
      %v1482 = vmax.f32 %v1480, %v1481
      %v1483 = vrot.slane %v1482, 2
      %v1484 = vmax.f32 %v1482, %v1483
      %v1485 = vrot.slane %v1484, 1
      %v1486 = vmax.f32 %v1484, %v1485
      %p1487 = scmp.gt.s32.totalorder %s1406, %s1404
      %p1488 = scmp.gt.s32.totalorder %s1410, %s1408
      %p1489 = pnand %p1487, %p1488
      %p1490 = pneg %p1489
      %s1491 = scalar_select %p1490, 1, 0
      %s1492 = scvt.s32.f32 %s1491
      %v1493 = vstv %s1492
      %v1494 = vmul.f32 %v1486, %v1493
      %s1495 = sadd.s32 %s114, 60
      %s1496 = sld [smem:[#allocation3 + %s1495]]
      %s1497 = sadd.s32 %s114, 61
      %s1498 = sld [smem:[#allocation3 + %s1497]]
      %s1499 = sadd.s32 %s114, 62
      %s1500 = sld [smem:[#allocation3 + %s1499]]
      %s1501 = sadd.s32 %s114, 63
      %s1502 = sld [smem:[#allocation3 + %s1501]]
      %v1503 = vstv %s1496
      %vm1504 = vcmp.le.s32.totalorder %v1503, 0
      %vm1505 = vcmp.le.s32.totalorder %v1503, 1
      %vm1506 = vcmp.le.s32.totalorder %v1503, 2
      %vm1507 = vcmp.le.s32.totalorder %v1503, 3
      %vm1508 = vcmp.le.s32.totalorder %v1503, 4
      %vm1509 = vcmp.le.s32.totalorder %v1503, 5
      %vm1510 = vcmp.le.s32.totalorder %v1503, 6
      %vm1511 = vcmp.le.s32.totalorder %v1503, 7
      %v1512 = vstv %s1498
      %vm1513 = vcmp.gt.s32.totalorder %v1512, 0
      %vm1514 = vcmp.gt.s32.totalorder %v1512, 1
      %vm1515 = vcmp.gt.s32.totalorder %v1512, 2
      %vm1516 = vcmp.gt.s32.totalorder %v1512, 3
      %vm1517 = vcmp.gt.s32.totalorder %v1512, 4
      %vm1518 = vcmp.gt.s32.totalorder %v1512, 5
      %vm1519 = vcmp.gt.s32.totalorder %v1512, 6
      %vm1520 = vcmp.gt.s32.totalorder %v1512, 7
      %vm1521 = vmand %vm1504, %vm1513
      %vm1522 = vmand %vm1505, %vm1514
      %vm1523 = vmand %vm1506, %vm1515
      %vm1524 = vmand %vm1507, %vm1516
      %vm1525 = vmand %vm1508, %vm1517
      %vm1526 = vmand %vm1509, %vm1518
      %vm1527 = vmand %vm1510, %vm1519
      %vm1528 = vmand %vm1511, %vm1520
      %v1529 = vstv %s1500
      %vm1530 = vcmp.ge.s32.totalorder %v113, %v1529
      %vm1531 = vmand %vm1521, %vm1530
      %vm1532 = vmand %vm1522, %vm1530
      %vm1533 = vmand %vm1523, %vm1530
      %vm1534 = vmand %vm1524, %vm1530
      %vm1535 = vmand %vm1525, %vm1530
      %vm1536 = vmand %vm1526, %vm1530
      %vm1537 = vmand %vm1527, %vm1530
      %vm1538 = vmand %vm1528, %vm1530
      %v1539 = vstv %s1502
      %vm1540 = vcmp.lt.s32.totalorder %v113, %v1539
      %vm1541 = vmand %vm1531, %vm1540
      %vm1542 = vmand %vm1532, %vm1540
      %vm1543 = vmand %vm1533, %vm1540
      %vm1544 = vmand %vm1534, %vm1540
      %vm1545 = vmand %vm1535, %vm1540
      %vm1546 = vmand %vm1536, %vm1540
      %vm1547 = vmand %vm1537, %vm1540
      %vm1548 = vmand %vm1538, %vm1540
      %v1549 = vsel %vm1541, %v104, -1e+30
      %v1550 = vsel %vm1542, %v105, -1e+30
      %v1551 = vsel %vm1543, %v106, -1e+30
      %v1552 = vsel %vm1544, %v107, -1e+30
      %v1553 = vsel %vm1545, %v108, -1e+30
      %v1554 = vsel %vm1546, %v109, -1e+30
      %v1555 = vsel %vm1547, %v110, -1e+30
      %v1556 = vsel %vm1548, %v111, -1e+30
      %v1557 = vsel %vm176, %v1549, -inf
      %v1558 = vsel %vm176, %v1550, -inf
      %v1559 = vsel %vm176, %v1551, -inf
      %v1560 = vsel %vm176, %v1552, -inf
      %v1561 = vsel %vm176, %v1553, -inf
      %v1562 = vmax.f32 %v1557, %v1561
      %v1563 = vsel %vm176, %v1554, -inf
      %v1564 = vmax.f32 %v1558, %v1563
      %v1565 = vsel %vm176, %v1555, -inf
      %v1566 = vmax.f32 %v1559, %v1565
      %v1567 = vsel %vm176, %v1556, -inf
      %v1568 = vmax.f32 %v1560, %v1567
      %v1569 = vmax.f32 %v1562, %v1564
      %v1570 = vmax.f32 %v1566, %v1568
      %v1571 = vmax.f32 %v1569, %v1570
      %v1572 = vsel %vm176, %v1571, -inf
      %v1573 = vrot.slane %v1572, 4
      %v1574 = vmax.f32 %v1572, %v1573
      %v1575 = vrot.slane %v1574, 2
      %v1576 = vmax.f32 %v1574, %v1575
      %v1577 = vrot.slane %v1576, 1
      %v1578 = vmax.f32 %v1576, %v1577
      %p1579 = scmp.gt.s32.totalorder %s1498, %s1496
      %p1580 = scmp.gt.s32.totalorder %s1502, %s1500
      %p1581 = pnand %p1579, %p1580
      %p1582 = pneg %p1581
      %s1583 = scalar_select %p1582, 1, 0
      %s1584 = scvt.s32.f32 %s1583
      %v1585 = vstv %s1584
      %v1586 = vmul.f32 %v1578, %v1585
      %vm1587 = vcmask 1040384
      %v1588 = vsel %vm1587, %v206, %v298
      %vm1589 = vcmask 1041408
      %v1590 = vsel %vm1589, %v1588, %v390
      %vm1591 = vcmask 1042432
      %v1592 = vsel %vm1591, %v1590, %v482
      %vm1593 = vcmask 1043456
      %v1594 = vsel %vm1593, %v1592, %v574
      %vm1595 = vcmask 1044480
      %v1596 = vsel %vm1595, %v1594, %v666
      %vm1597 = vcmask 1045504
      %v1598 = vsel %vm1597, %v1596, %v758
      %vm1599 = vcmask 1046528
      %v1600 = vsel %vm1599, %v1598, %v850
      %v1601 = vsel %vm1587, %v942, %v1034
      %v1602 = vsel %vm1589, %v1601, %v1126
      %v1603 = vsel %vm1591, %v1602, %v1218
      %v1604 = vsel %vm1593, %v1603, %v1310
      %v1605 = vsel %vm1595, %v1604, %v1402
      %v1606 = vsel %vm1597, %v1605, %v1494
      %v1607 = vsel %vm1599, %v1606, %v1586
      %1608 = vst.msk [vmem:[%s103] sm:$0xff] %vm176, %v1600
      %1609 = vst.msk [vmem:[%s103 + $0x8] sm:$0xff] %vm176, %v1607
      %p1610 = scmp.lt.s32.totalorder %s19, 6
      %s1611 = scalar_select %p1610, %s19, 6
      %s1612 = smul.addr %s1611, 2
      %s1613 = smul.addr %s1612, 8
      %s1614 = scalar_lea.vmem %s2, %s1613
      // Predicated region
      $region25: #{_device_forward.6} parent=23 // pred_check
        %p1615 = pneg %p58
      $region26: #{_device_forward.6} parent=23 // pred_check_branch
        %1617 = sbr.rel (%p1615) target = $region28
      $region27: #{_device_forward.6} parent=23 // pred_region
        _
      $region28: #{_device_forward.6} parent=23 // pred_fallthru
        _
    $region24: #{_device_forward.6} parent=5 // pred_fallthru
      _
    %p1618 = scmp.le.s32.totalorder 2, %s14
    // Predicated region
    $region29: #{_device_forward.6} parent=5 // pred_check
      %p1619 = pneg %p1618
    $region30: #{_device_forward.6} parent=5 // pred_check_branch
      %1621 = sbr.rel (%p1619) target = $region32
    $region31: #{_device_forward.6} parent=5 // pred_region
      %s1622 = ssub.s32 %s14, 2
      // Predicated region
      $region33: #{_device_forward.6} parent=31 // pred_check
        %p1623 = pneg %p64
      $region34: #{_device_forward.6} parent=31 // pred_check_branch
        %1625 = sbr.rel (%p1623) target = $region36
      $region35: #{_device_forward.6} parent=31 // pred_region
        %p1626 = scmp.lt.s32.totalorder %s20, 6
        %s1627 = scalar_select %p1626, %s20, 6
        %s1628 = smul.addr %s1627, 2
        %s1629 = smul.addr %s1628, 8
        %s1630 = scalar_lea.vmem %s2, %s1629
      $region36: #{_device_forward.6} parent=31 // pred_fallthru
        _
    $region32: #{_device_forward.6} parent=5 // pred_fallthru
      _
  $region6: #{_device_forward.6} parent=0 // loop_footer
    %s18 = sadd.s32 1, %s14
  $region7: #{_device_forward.6} parent=0 // loop_footer_branch
    %13 = sbr.rel target = $region3
  $region8: #{_device_forward.6} parent=0 // loop_exit
    _

// kernel: _device_forward.7
$region0: #{_device_forward.7}
  #allocation0 [shape = 'u32[]', space=smem, size = 0x4, offset = 0x4, fixed_abs, tag = 'smem constant byte address 0x4 - core index']
  #allocation1 [shape = 'u32[144,128]{1,0:T(1,128)}', space=vmem, size = 0x12000, scoped, tag = 'internal scratch']
  %s0 = inlined_call_operand.vmem [shape: f32[7,512], index: 0, kind: input, shape index: {}]
  %s1 = inlined_call_operand.vmem [shape: bf16[512,64], index: 1, kind: input, shape index: {}]
  %s2 = inlined_call_operand.vmem [shape: f32[1,64], index: 2, kind: input, shape index: {}]
  %s3 = inlined_call_operand.vmem [shape: bf16[64,64], index: 3, kind: input, shape index: {}]
  %s4 = inlined_call_operand.vmem [shape: f32[1,64], index: 4, kind: input, shape index: {}]
  %s5 = inlined_call_operand.vmem [shape: bf16[64,640], index: 5, kind: input, shape index: {}]
  %s6 = inlined_call_operand.vmem [shape: f32[1,640], index: 6, kind: input, shape index: {}]
  %s7 = inlined_call_operand.hbm [shape: f32[7,128], index: 7, kind: output, shape index: {0}]
  %s8 = inlined_call_operand.hbm [shape: f32[1,128], index: 8, kind: output, shape index: {1}]
  %s9 = inlined_call_operand.hbm [shape: f32[3,7,128], index: 9, kind: output, shape index: {2}]
  %s10 = inlined_call_operand.vmem [shape: f32[7,128], index: 10, kind: output, shape index: {3}]
  %11 = xla_tuple %s7, %s8, %s9, %s10
  %s12 = sld [smem:[#allocation0]]
  $region62: #{_device_forward.7} parent=0
    _
  %s14 = ssub.s32 1, %s12
  %s15 = scalar_select 0, %s14, %s12
  $region1: #{_device_forward.7} parent=0
    #allocation2 [shape = 'u8[4096]{0}', space=vmem, size = 0x1000, scoped, tag = 'output window, operand 0, single buffered']
    #allocation3 [shape = 's32[1]{0}', space=sflag, size = 0x4, scoped, tag = 'scoped memory for _device_forward.7']
    #allocation4 [shape = 'u8[512]{0}', space=vmem, size = 0x400, scoped, tag = 'output window, operand 1, single buffered']
    #allocation5 [shape = 's32[1]{0}', space=sflag, size = 0x4, scoped, tag = 'scoped memory for _device_forward.7']
    #allocation6 [shape = 'u8[12288]{0}', space=vmem, size = 0x3000, scoped, tag = 'output window, operand 2, single buffered']
    %16 = vsyncpa [#allocation3], 0
    %17 = vsyncpa [#allocation5], 0
    // Predicated region
    $region2: #{_device_forward.7} parent=1 // pred_check
      _
    $region3: #{_device_forward.7} parent=1 // pred_check_branch
      %19 = sbr.rel (0) target = $region5
    $region4: #{_device_forward.7} parent=1 // pred_region
      _
    $region5: #{_device_forward.7} parent=1 // pred_fallthru
      _
    // Predicated region
    $region6: #{_device_forward.7} parent=1 // pred_check
      _
    $region7: #{_device_forward.7} parent=1 // pred_check_branch
      %21 = sbr.rel (0) target = $region9
    $region8: #{_device_forward.7} parent=1 // pred_region
      _
    $region9: #{_device_forward.7} parent=1 // pred_fallthru
      _
    // Predicated region
    $region10: #{_device_forward.7} parent=1 // pred_check
      _
    $region11: #{_device_forward.7} parent=1 // pred_check_branch
      %23 = sbr.rel (0) target = $region13
    $region12: #{_device_forward.7} parent=1 // pred_region
      _
    $region13: #{_device_forward.7} parent=1 // pred_fallthru
      _
    // Predicated region
    $region14: #{_device_forward.7} parent=1 // pred_check
      _
    $region15: #{_device_forward.7} parent=1 // pred_check_branch
      %25 = sbr.rel (0) target = $region17
    $region16: #{_device_forward.7} parent=1 // pred_region
      _
    $region17: #{_device_forward.7} parent=1 // pred_fallthru
      _
    // Predicated region
    $region18: #{_device_forward.7} parent=1 // pred_check
      _
    $region19: #{_device_forward.7} parent=1 // pred_check_branch
      %27 = sbr.rel (0) target = $region21
    $region20: #{_device_forward.7} parent=1 // pred_region
      _
    $region21: #{_device_forward.7} parent=1 // pred_fallthru
      _
    // Predicated region
    $region22: #{_device_forward.7} parent=1 // pred_check
      _
    $region23: #{_device_forward.7} parent=1 // pred_check_branch
      %29 = sbr.rel (0) target = $region25
    $region24: #{_device_forward.7} parent=1 // pred_region
      _
    $region25: #{_device_forward.7} parent=1 // pred_fallthru
      _
    // Predicated region
    $region26: #{_device_forward.7} parent=1 // pred_check
      _
    $region27: #{_device_forward.7} parent=1 // pred_check_branch
      %31 = sbr.rel (0) target = $region29
    $region28: #{_device_forward.7} parent=1 // pred_region
      _
    $region29: #{_device_forward.7} parent=1 // pred_fallthru
      _
    %v33 = vld [vmem:[%s0] sm:$0x7f]
    %v34 = vld [vmem:[%s0 + $0x8] sm:$0x7f]
    %v35 = vld [vmem:[%s0 + $0x10] sm:$0x7f]
    %v36 = vld [vmem:[%s0 + $0x18] sm:$0x7f]
    %v37 = vpack.c.bf16 %v33, %v33
    %v38 = vpack.c.bf16 %v34, %v34
    %v39 = vpack.c.bf16 %v35, %v35
    %v40 = vpack.c.bf16 %v36, %v36
    %v41 = vld [vmem:[%s1] sm:$0xf]
    %v42 = vld [vmem:[%s1 + $0x4] sm:$0xf]
    %v43 = vld [vmem:[%s1 + $0x8] sm:$0xf]
    %v44 = vld [vmem:[%s1 + $0xc] sm:$0xf]
    %v45 = vld [vmem:[%s1 + $0x10] sm:$0xf]
    %v46 = vld [vmem:[%s1 + $0x14] sm:$0xf]
    %v47 = vld [vmem:[%s1 + $0x18] sm:$0xf]
    %v48 = vld [vmem:[%s1 + $0x1c] sm:$0xf]
    %v49 = vld [vmem:[%s1 + $0x20] sm:$0xf]
    %v50 = vld [vmem:[%s1 + $0x24] sm:$0xf]
    %v51 = vld [vmem:[%s1 + $0x28] sm:$0xf]
    %v52 = vld [vmem:[%s1 + $0x2c] sm:$0xf]
    %v53 = vld [vmem:[%s1 + $0x30] sm:$0xf]
    %v54 = vld [vmem:[%s1 + $0x34] sm:$0xf]
    %v55 = vld [vmem:[%s1 + $0x38] sm:$0xf]
    %v56 = vld [vmem:[%s1 + $0x3c] sm:$0xf]
    %v57 = vld [vmem:[%s1 + $0x40] sm:$0xf]
    %v58 = vld [vmem:[%s1 + $0x44] sm:$0xf]
    %v59 = vld [vmem:[%s1 + $0x48] sm:$0xf]
    %v60 = vld [vmem:[%s1 + $0x4c] sm:$0xf]
    %v61 = vld [vmem:[%s1 + $0x50] sm:$0xf]
    %v62 = vld [vmem:[%s1 + $0x54] sm:$0xf]
    %v63 = vld [vmem:[%s1 + $0x58] sm:$0xf]
    %v64 = vld [vmem:[%s1 + $0x5c] sm:$0xf]
    %v65 = vld [vmem:[%s1 + $0x60] sm:$0xf]
    %v66 = vld [vmem:[%s1 + $0x64] sm:$0xf]
    %v67 = vld [vmem:[%s1 + $0x68] sm:$0xf]
    %v68 = vld [vmem:[%s1 + $0x6c] sm:$0xf]
    %v69 = vld [vmem:[%s1 + $0x70] sm:$0xf]
    %v70 = vld [vmem:[%s1 + $0x74] sm:$0xf]
    %v71 = vld [vmem:[%s1 + $0x78] sm:$0xf]
    %v72 = vld [vmem:[%s1 + $0x7c] sm:$0xf]
    %v73 = vld [vmem:[%s1 + $0x80] sm:$0xf]
    %v74 = vld [vmem:[%s1 + $0x84] sm:$0xf]
    %v75 = vld [vmem:[%s1 + $0x88] sm:$0xf]
    %v76 = vld [vmem:[%s1 + $0x8c] sm:$0xf]
    %v77 = vld [vmem:[%s1 + $0x90] sm:$0xf]
    %v78 = vld [vmem:[%s1 + $0x94] sm:$0xf]
    %v79 = vld [vmem:[%s1 + $0x98] sm:$0xf]
    %v80 = vld [vmem:[%s1 + $0x9c] sm:$0xf]
    %v81 = vld [vmem:[%s1 + $0xa0] sm:$0xf]
    %v82 = vld [vmem:[%s1 + $0xa4] sm:$0xf]
    %v83 = vld [vmem:[%s1 + $0xa8] sm:$0xf]
    %v84 = vld [vmem:[%s1 + $0xac] sm:$0xf]
    %v85 = vld [vmem:[%s1 + $0xb0] sm:$0xf]
    %v86 = vld [vmem:[%s1 + $0xb4] sm:$0xf]
    %v87 = vld [vmem:[%s1 + $0xb8] sm:$0xf]
    %v88 = vld [vmem:[%s1 + $0xbc] sm:$0xf]
    %v89 = vld [vmem:[%s1 + $0xc0] sm:$0xf]
    %v90 = vld [vmem:[%s1 + $0xc4] sm:$0xf]
    %v91 = vld [vmem:[%s1 + $0xc8] sm:$0xf]
    %v92 = vld [vmem:[%s1 + $0xcc] sm:$0xf]
    %v93 = vld [vmem:[%s1 + $0xd0] sm:$0xf]
    %v94 = vld [vmem:[%s1 + $0xd4] sm:$0xf]
    %v95 = vld [vmem:[%s1 + $0xd8] sm:$0xf]
    %v96 = vld [vmem:[%s1 + $0xdc] sm:$0xf]
    %v97 = vld [vmem:[%s1 + $0xe0] sm:$0xf]
    %v98 = vld [vmem:[%s1 + $0xe4] sm:$0xf]
    %v99 = vld [vmem:[%s1 + $0xe8] sm:$0xf]
    %v100 = vld [vmem:[%s1 + $0xec] sm:$0xf]
    %v101 = vld [vmem:[%s1 + $0xf0] sm:$0xf]
    %v102 = vld [vmem:[%s1 + $0xf4] sm:$0xf]
    %v103 = vld [vmem:[%s1 + $0xf8] sm:$0xf]
    %v104 = vld [vmem:[%s1 + $0xfc] sm:$0xf]
    %v105 = vld [vmem:[%s2] sm:$0x1]
    %v107 = vlaneseq
    %v108 = vshrl.u32 %v107, 7
    %v109 = vsub.s32 0, %v108
    %v110 = vrot.slane %v105, %v109
    %v176 = vunpack.c.l.b16 %v41
    %v177 = vunpack.c.l.b16 %v42
    %v178 = vunpack.c.l.b16 %v43
    %v179 = vunpack.c.l.b16 %v44
    %v180 = vunpack.c.l.b16 %v45
    %v181 = vunpack.c.l.b16 %v46
    %v182 = vunpack.c.l.b16 %v47
    %v183 = vunpack.c.l.b16 %v48
    %v184 = vunpack.c.l.b16 %v49
    %v185 = vunpack.c.l.b16 %v50
    %v186 = vunpack.c.l.b16 %v51
    %v187 = vunpack.c.l.b16 %v52
    %v188 = vunpack.c.l.b16 %v53
    %v189 = vunpack.c.l.b16 %v54
    %v190 = vunpack.c.l.b16 %v55
    %v191 = vunpack.c.l.b16 %v56
    %v192 = vunpack.c.l.b16 %v57
    %v193 = vunpack.c.l.b16 %v58
    %v194 = vunpack.c.l.b16 %v59
    %v195 = vunpack.c.l.b16 %v60
    %v196 = vunpack.c.l.b16 %v61
    %v197 = vunpack.c.l.b16 %v62
    %v198 = vunpack.c.l.b16 %v63
    %v199 = vunpack.c.l.b16 %v64
    %v200 = vunpack.c.l.b16 %v65
    %v201 = vunpack.c.l.b16 %v66
    %v202 = vunpack.c.l.b16 %v67
    %v203 = vunpack.c.l.b16 %v68
    %v204 = vunpack.c.l.b16 %v69
    %v205 = vunpack.c.l.b16 %v70
    %v206 = vunpack.c.l.b16 %v71
    %v207 = vunpack.c.l.b16 %v72
    %v208 = vunpack.c.l.b16 %v73
    %v209 = vunpack.c.l.b16 %v74
    %v210 = vunpack.c.l.b16 %v75
    %v211 = vunpack.c.l.b16 %v76
    %v212 = vunpack.c.l.b16 %v77
    %v213 = vunpack.c.l.b16 %v78
    %v214 = vunpack.c.l.b16 %v79
    %v215 = vunpack.c.l.b16 %v80
    %v216 = vunpack.c.l.b16 %v81
    %v217 = vunpack.c.l.b16 %v82
    %v218 = vunpack.c.l.b16 %v83
    %v219 = vunpack.c.l.b16 %v84
    %v220 = vunpack.c.l.b16 %v85
    %v221 = vunpack.c.l.b16 %v86
    %v222 = vunpack.c.l.b16 %v87
    %v223 = vunpack.c.l.b16 %v88
    %v224 = vunpack.c.l.b16 %v89
    %v225 = vunpack.c.l.b16 %v90
    %v226 = vunpack.c.l.b16 %v91
    %v227 = vunpack.c.l.b16 %v92
    %v228 = vunpack.c.l.b16 %v93
    %v229 = vunpack.c.l.b16 %v94
    %v230 = vunpack.c.l.b16 %v95
    %v231 = vunpack.c.l.b16 %v96
    %v232 = vunpack.c.l.b16 %v97
    %v233 = vunpack.c.l.b16 %v98
    %v234 = vunpack.c.l.b16 %v99
    %v235 = vunpack.c.l.b16 %v100
    %v236 = vunpack.c.l.b16 %v101
    %v237 = vunpack.c.l.b16 %v102
    %v238 = vunpack.c.l.b16 %v103
    %v239 = vunpack.c.l.b16 %v104
    %v240 = vpack.c.b16 %v177, %v176
    %v241 = vpack.c.b16 %v179, %v178
    %v242 = vpack.c.b16 %v181, %v180
    %v243 = vpack.c.b16 %v183, %v182
    %v244 = vpack.c.b16 %v185, %v184
    %v245 = vpack.c.b16 %v187, %v186
    %v246 = vpack.c.b16 %v189, %v188
    %v247 = vpack.c.b16 %v191, %v190
    %v248 = vpack.c.b16 %v193, %v192
    %v249 = vpack.c.b16 %v195, %v194
    %v250 = vpack.c.b16 %v197, %v196
    %v251 = vpack.c.b16 %v199, %v198
    %v252 = vpack.c.b16 %v201, %v200
    %v253 = vpack.c.b16 %v203, %v202
    %v254 = vpack.c.b16 %v205, %v204
    %v255 = vpack.c.b16 %v207, %v206
    %v256 = vpack.c.b16 %v209, %v208
    %v257 = vpack.c.b16 %v211, %v210
    %v258 = vpack.c.b16 %v213, %v212
    %v259 = vpack.c.b16 %v215, %v214
    %v260 = vpack.c.b16 %v217, %v216
    %v261 = vpack.c.b16 %v219, %v218
    %v262 = vpack.c.b16 %v221, %v220
    %v263 = vpack.c.b16 %v223, %v222
    %v264 = vpack.c.b16 %v225, %v224
    %v265 = vpack.c.b16 %v227, %v226
    %v266 = vpack.c.b16 %v229, %v228
    %v267 = vpack.c.b16 %v231, %v230
    %v268 = vpack.c.b16 %v233, %v232
    %v269 = vpack.c.b16 %v235, %v234
    %v270 = vpack.c.b16 %v237, %v236
    %v271 = vpack.c.b16 %v239, %v238
    %304 = vmatprep.subr.bf16.mxu0 0
    %305 = vmatpush1.bf16.msra.mxu0 %v247
    %306 = vmatprep.subr.bf16.mxu0 0
    %307 = vmatpush1.bf16.msra.mxu0 %v246
    %308 = vmatprep.subr.bf16.mxu0 0
    %309 = vmatpush1.bf16.msra.mxu0 %v245
    %310 = vmatprep.subr.bf16.mxu0 0
    %311 = vmatpush1.bf16.msra.mxu0 %v244
    %312 = vmatprep.subr.bf16.mxu0 0
    %313 = vmatpush1.bf16.msra.mxu0 %v243
    %314 = vmatprep.subr.bf16.mxu0 0
    %315 = vmatpush1.bf16.msra.mxu0 %v242
    %316 = vmatprep.subr.bf16.mxu0 0
    %317 = vmatpush1.bf16.msra.mxu0 %v241
    %318 = vmatprep.subr.bf16.mxu0 0
    %319 = vmatpush1.bf16.msra.mxu0 %v240
    %320 = vmatprep.subr.bf16.mxu0 0
    %321 = vmatpush2.bf16.msra.mxu0 %v255
    %322 = vmatprep.subr.bf16.mxu0 0
    %323 = vmatpush2.bf16.msra.mxu0 %v254
    %324 = vmatprep.subr.bf16.mxu0 0
    %325 = vmatpush2.bf16.msra.mxu0 %v253
    %326 = vmatprep.subr.bf16.mxu0 0
    %327 = vmatpush2.bf16.msra.mxu0 %v252
    %328 = vmatprep.subr.bf16.mxu0 0
    %329 = vmatpush2.bf16.msra.mxu0 %v251
    %330 = vmatprep.subr.bf16.mxu0 0
    %331 = vmatpush2.bf16.msra.mxu0 %v250
    %332 = vmatprep.subr.bf16.mxu0 0
    %333 = vmatpush2.bf16.msra.mxu0 %v249
    %334 = vmatprep.subr.bf16.mxu0 0
    %335 = vmatpush2.bf16.msra.mxu0 %v248
    %336 = vmatprep.mubr.bf16.mxu0 %v38
    %337 = vmatmul.mubr.bf16.gmra.mxu0 %v37
    %v338 = vpop.f32.mrf.mxu0
    %v339 = vadd.f32 %v110, %v338
    %v340 = vpop.f32.mrf.mxu0
    %v341 = vpop.f32.mrf.mxu0
    %v342 = vpop.f32.mrf.mxu0
    %343 = vdwg.mxu0
    %344 = vmatprep.subr.bf16.mxu0 0
    %345 = vmatpush1.bf16.msra.mxu0 %v263
    %346 = vmatprep.subr.bf16.mxu0 0
    %347 = vmatpush1.bf16.msra.mxu0 %v262
    %348 = vmatprep.subr.bf16.mxu0 0
    %349 = vmatpush1.bf16.msra.mxu0 %v261
    %350 = vmatprep.subr.bf16.mxu0 0
    %351 = vmatpush1.bf16.msra.mxu0 %v260
    %352 = vmatprep.subr.bf16.mxu0 0
    %353 = vmatpush1.bf16.msra.mxu0 %v259
    %354 = vmatprep.subr.bf16.mxu0 0
    %355 = vmatpush1.bf16.msra.mxu0 %v258
    %356 = vmatprep.subr.bf16.mxu0 0
    %357 = vmatpush1.bf16.msra.mxu0 %v257
    %358 = vmatprep.subr.bf16.mxu0 0
    %359 = vmatpush1.bf16.msra.mxu0 %v256
    %360 = vmatprep.subr.bf16.mxu0 0
    %361 = vmatpush2.bf16.msra.mxu0 %v271
    %362 = vmatprep.subr.bf16.mxu0 0
    %363 = vmatpush2.bf16.msra.mxu0 %v270
    %364 = vmatprep.subr.bf16.mxu0 0
    %365 = vmatpush2.bf16.msra.mxu0 %v269
    %366 = vmatprep.subr.bf16.mxu0 0
    %367 = vmatpush2.bf16.msra.mxu0 %v268
    %368 = vmatprep.subr.bf16.mxu0 0
    %369 = vmatpush2.bf16.msra.mxu0 %v267
    %370 = vmatprep.subr.bf16.mxu0 0
    %371 = vmatpush2.bf16.msra.mxu0 %v266
    %372 = vmatprep.subr.bf16.mxu0 0
    %373 = vmatpush2.bf16.msra.mxu0 %v265
    %374 = vmatprep.subr.bf16.mxu0 0
    %375 = vmatpush2.bf16.msra.mxu0 %v264
    %376 = vmatprep.mubr.bf16.mxu0 %v40
    %377 = vmatmul.mubr.bf16.gmra.mxu0 %v39
    %v378 = vpop.f32.mrf.mxu0
    %v379 = vadd.f32 %v339, %v378
    %v380 = vpop.f32.mrf.mxu0
    %v381 = vpop.f32.mrf.mxu0
    %v382 = vpop.f32.mrf.mxu0
    %383 = vdwg.mxu0
    %v384 = vmax.f32 %v379, 0.0
    %v385 = vpack.c.bf16 %v384, %v384
    %v386 = vld [vmem:[%s3] sm:$0xf]
    %v387 = vld [vmem:[%s3 + $0x4] sm:$0xf]
    %v388 = vld [vmem:[%s3 + $0x8] sm:$0xf]
    %v389 = vld [vmem:[%s3 + $0xc] sm:$0xf]
    %v390 = vld [vmem:[%s3 + $0x10] sm:$0xf]
    %v391 = vld [vmem:[%s3 + $0x14] sm:$0xf]
    %v392 = vld [vmem:[%s3 + $0x18] sm:$0xf]
    %v393 = vld [vmem:[%s3 + $0x1c] sm:$0xf]
    %v394 = vld [vmem:[%s4] sm:$0x1]
    %v396 = vlaneseq
    %v397 = vshrl.u32 %v396, 7
    %v398 = vsub.s32 0, %v397
    %v399 = vrot.slane %v394, %v398
    %v409 = vunpack.c.l.b16 %v386
    %v410 = vunpack.c.l.b16 %v387
    %v411 = vunpack.c.l.b16 %v388
    %v412 = vunpack.c.l.b16 %v389
    %v413 = vunpack.c.l.b16 %v390
    %v414 = vunpack.c.l.b16 %v391
    %v415 = vunpack.c.l.b16 %v392
    %v416 = vunpack.c.l.b16 %v393
    %v417 = vpack.c.b16 %v410, %v409
    %v418 = vpack.c.b16 %v412, %v411
    %v419 = vpack.c.b16 %v414, %v413
    %v420 = vpack.c.b16 %v416, %v415
    %vm425 = vcmask 523264
    %v427 = vsel %vm425, %v385, 0
    %429 = vmatprep.subr.bf16.mxu0 0
    %430 = vmatpush1.bf16.msra.mxu0 0
    %431 = vmatprep.subr.bf16.mxu0 0
    %432 = vmatpush1.bf16.msra.mxu0 0
    %433 = vmatprep.subr.bf16.mxu0 0
    %434 = vmatpush1.bf16.msra.mxu0 0
    %435 = vmatprep.subr.bf16.mxu0 0
    %436 = vmatpush1.bf16.msra.mxu0 0
    %437 = vmatprep.subr.bf16.mxu0 0
    %438 = vmatpush1.bf16.msra.mxu0 %v420
    %439 = vmatprep.subr.bf16.mxu0 0
    %440 = vmatpush1.bf16.msra.mxu0 %v419
    %441 = vmatprep.subr.bf16.mxu0 0
    %442 = vmatpush1.bf16.msra.mxu0 %v418
    %443 = vmatprep.subr.bf16.mxu0 0
    %444 = vmatpush1.bf16.msra.mxu0 %v417
    %445 = vmatprep.subr.bf16.mxu0 0
    %446 = vmatpush2.bf16.msra.mxu0 0
    %447 = vmatprep.subr.bf16.mxu0 0
    %448 = vmatpush2.bf16.msra.mxu0 0
    %449 = vmatprep.subr.bf16.mxu0 0
    %450 = vmatpush2.bf16.msra.mxu0 0
    %451 = vmatprep.subr.bf16.mxu0 0
    %452 = vmatpush2.bf16.msra.mxu0 0
    %453 = vmatprep.subr.bf16.mxu0 0
    %454 = vmatpush2.bf16.msra.mxu0 0
    %455 = vmatprep.subr.bf16.mxu0 0
    %456 = vmatpush2.bf16.msra.mxu0 0
    %457 = vmatprep.subr.bf16.mxu0 0
    %458 = vmatpush2.bf16.msra.mxu0 0
    %459 = vmatprep.subr.bf16.mxu0 0
    %460 = vmatpush2.bf16.msra.mxu0 0
    %461 = vmatprep.mubr.bf16.mxu0 0
    %462 = vmatmul.mubr.bf16.gmra.mxu0 %v427
    %v463 = vpop.f32.mrf.mxu0
    %v464 = vadd.f32 %v399, %v463
    %v465 = vpop.f32.mrf.mxu0
    %v466 = vpop.f32.mrf.mxu0
    %v467 = vpop.f32.mrf.mxu0
    %468 = vdwg.mxu0
    %v469 = vmax.f32 %v464, 0.0
    %v470 = vpack.c.bf16 %v469, %v469
    %v471 = vld [vmem:[%s5] sm:$0xff]
    %v472 = vld [vmem:[%s5 + $0x8] sm:$0xff]
    %v473 = vld [vmem:[%s5 + $0x10] sm:$0xf]
    %v474 = vld [vmem:[%s5 + $0x14] sm:$0xff]
    %v475 = vld [vmem:[%s5 + $0x1c] sm:$0xff]
    %v476 = vld [vmem:[%s5 + $0x24] sm:$0xf]
    %v477 = vld [vmem:[%s5 + $0x28] sm:$0xff]
    %v478 = vld [vmem:[%s5 + $0x30] sm:$0xff]
    %v479 = vld [vmem:[%s5 + $0x38] sm:$0xf]
    %v480 = vld [vmem:[%s5 + $0x3c] sm:$0xff]
    %v481 = vld [vmem:[%s5 + $0x44] sm:$0xff]
    %v482 = vld [vmem:[%s5 + $0x4c] sm:$0xf]
    %v483 = vld [vmem:[%s5 + $0x50] sm:$0xff]
    %v484 = vld [vmem:[%s5 + $0x58] sm:$0xff]
    %v485 = vld [vmem:[%s5 + $0x60] sm:$0xf]
    %v486 = vld [vmem:[%s5 + $0x64] sm:$0xff]
    %v487 = vld [vmem:[%s5 + $0x6c] sm:$0xff]
    %v488 = vld [vmem:[%s5 + $0x74] sm:$0xf]
    %v489 = vld [vmem:[%s5 + $0x78] sm:$0xff]
    %v490 = vld [vmem:[%s5 + $0x80] sm:$0xff]
    %v491 = vld [vmem:[%s5 + $0x88] sm:$0xf]
    %v492 = vld [vmem:[%s5 + $0x8c] sm:$0xff]
    %v493 = vld [vmem:[%s5 + $0x94] sm:$0xff]
    %v494 = vld [vmem:[%s5 + $0x9c] sm:$0xf]
    %v495 = vld [vmem:[%s6] sm:$0x1f]
    %v497 = vlaneseq
    %v498 = vshrl.u32 %v497, 7
    %v499 = vsub.s32 0, %v498
    %v500 = vrot.slane %v495, %v499
    %v501 = vlaneseq
    %v502 = vshrl.u32 %v501, 7
    %v503 = vsub.s32 1, %v502
    %v504 = vrot.slane %v495, %v503
    %v505 = vlaneseq
    %v506 = vshrl.u32 %v505, 7
    %v507 = vsub.s32 2, %v506
    %v508 = vrot.slane %v495, %v507
    %v509 = vlaneseq
    %v510 = vshrl.u32 %v509, 7
    %v511 = vsub.s32 3, %v510
    %v512 = vrot.slane %v495, %v511
    %v513 = vlaneseq
    %v514 = vshrl.u32 %v513, 7
    %v515 = vsub.s32 4, %v514
    %v516 = vrot.slane %v495, %v515
    %v546 = vunpack.c.l.b16 %v471
    %v547 = vunpack.c.h.b16 %v471
    %v548 = vunpack.c.l.b16 %v472
    %v549 = vunpack.c.h.b16 %v472
    %v550 = vunpack.c.l.b16 %v473
    %v551 = vunpack.c.l.b16 %v474
    %v552 = vunpack.c.h.b16 %v474
    %v553 = vunpack.c.l.b16 %v475
    %v554 = vunpack.c.h.b16 %v475
    %v555 = vunpack.c.l.b16 %v476
    %v556 = vunpack.c.l.b16 %v477
    %v557 = vunpack.c.h.b16 %v477
    %v558 = vunpack.c.l.b16 %v478
    %v559 = vunpack.c.h.b16 %v478
    %v560 = vunpack.c.l.b16 %v479
    %v561 = vunpack.c.l.b16 %v480
    %v562 = vunpack.c.h.b16 %v480
    %v563 = vunpack.c.l.b16 %v481
    %v564 = vunpack.c.h.b16 %v481
    %v565 = vunpack.c.l.b16 %v482
    %v566 = vunpack.c.l.b16 %v483
    %v567 = vunpack.c.h.b16 %v483
    %v568 = vunpack.c.l.b16 %v484
    %v569 = vunpack.c.h.b16 %v484
    %v570 = vunpack.c.l.b16 %v485
    %v571 = vunpack.c.l.b16 %v486
    %v572 = vunpack.c.h.b16 %v486
    %v573 = vunpack.c.l.b16 %v487
    %v574 = vunpack.c.h.b16 %v487
    %v575 = vunpack.c.l.b16 %v488
    %v576 = vunpack.c.l.b16 %v489
    %v577 = vunpack.c.h.b16 %v489
    %v578 = vunpack.c.l.b16 %v490
    %v579 = vunpack.c.h.b16 %v490
    %v580 = vunpack.c.l.b16 %v491
    %v581 = vunpack.c.l.b16 %v492
    %v582 = vunpack.c.h.b16 %v492
    %v583 = vunpack.c.l.b16 %v493
    %v584 = vunpack.c.h.b16 %v493
    %v585 = vunpack.c.l.b16 %v494
    %v586 = vpack.c.b16 %v551, %v546
    %v587 = vpack.c.b16 %v552, %v547
    %v588 = vpack.c.b16 %v553, %v548
    %v589 = vpack.c.b16 %v554, %v549
    %v590 = vpack.c.b16 %v555, %v550
    %v591 = vpack.c.b16 %v561, %v556
    %v592 = vpack.c.b16 %v562, %v557
    %v593 = vpack.c.b16 %v563, %v558
    %v594 = vpack.c.b16 %v564, %v559
    %v595 = vpack.c.b16 %v565, %v560
    %v596 = vpack.c.b16 %v571, %v566
    %v597 = vpack.c.b16 %v572, %v567
    %v598 = vpack.c.b16 %v573, %v568
    %v599 = vpack.c.b16 %v574, %v569
    %v600 = vpack.c.b16 %v575, %v570
    %v601 = vpack.c.b16 %v581, %v576
    %v602 = vpack.c.b16 %v582, %v577
    %v603 = vpack.c.b16 %v583, %v578
    %v604 = vpack.c.b16 %v584, %v579
    %v605 = vpack.c.b16 %v585, %v580
    %v627 = vsel %vm425, %v470, 0
    %629 = vmatprep.subr.bf16.mxu0 0
    %630 = vmatpush1.bf16.msra.mxu0 0
    %631 = vmatprep.subr.bf16.mxu0 0
    %632 = vmatpush1.bf16.msra.mxu0 0
    %633 = vmatprep.subr.bf16.mxu0 0
    %634 = vmatpush1.bf16.msra.mxu0 0
    %635 = vmatprep.subr.bf16.mxu0 0
    %636 = vmatpush1.bf16.msra.mxu0 0
    %637 = vmatprep.subr.bf16.mxu0 %v602
    %638 = vmatpush1.bf16.msra.mxu0 %v601
    %639 = vmatprep.subr.bf16.mxu0 %v597
    %640 = vmatpush1.bf16.msra.mxu0 %v596
    %641 = vmatprep.subr.bf16.mxu0 %v592
    %642 = vmatpush1.bf16.msra.mxu0 %v591
    %643 = vmatprep.subr.bf16.mxu0 %v587
    %644 = vmatpush1.bf16.msra.mxu0 %v586
    %645 = vmatprep.subr.bf16.mxu0 0
    %646 = vmatpush2.bf16.msra.mxu0 0
    %647 = vmatprep.subr.bf16.mxu0 0
    %648 = vmatpush2.bf16.msra.mxu0 0
    %649 = vmatprep.subr.bf16.mxu0 0
    %650 = vmatpush2.bf16.msra.mxu0 0
    %651 = vmatprep.subr.bf16.mxu0 0
    %652 = vmatpush2.bf16.msra.mxu0 0
    %653 = vmatprep.subr.bf16.mxu0 0
    %654 = vmatpush2.bf16.msra.mxu0 0
    %655 = vmatprep.subr.bf16.mxu0 0
    %656 = vmatpush2.bf16.msra.mxu0 0
    %657 = vmatprep.subr.bf16.mxu0 0
    %658 = vmatpush2.bf16.msra.mxu0 0
    %659 = vmatprep.subr.bf16.mxu0 0
    %660 = vmatpush2.bf16.msra.mxu0 0
    %661 = vmatprep.mubr.bf16.mxu0 0
    %662 = vmatmul.mubr.bf16.gmra.mxu0 %v627
    %v663 = vpop.f32.mrf.mxu0
    %v664 = vadd.f32 %v500, %v663
    %v665 = vpop.f32.mrf.mxu0
    %v666 = vadd.f32 %v504, %v665
    %v667 = vpop.f32.mrf.mxu0
    %v668 = vpop.f32.mrf.mxu0
    %669 = vdwg.mxu0
    %670 = vmatprep.subr.bf16.mxu0 0
    %671 = vmatpush1.bf16.msra.mxu0 0
    %672 = vmatprep.subr.bf16.mxu0 0
    %673 = vmatpush1.bf16.msra.mxu0 0
    %674 = vmatprep.subr.bf16.mxu0 0
    %675 = vmatpush1.bf16.msra.mxu0 0
    %676 = vmatprep.subr.bf16.mxu0 0
    %677 = vmatpush1.bf16.msra.mxu0 0
    %678 = vmatprep.subr.bf16.mxu0 %v604
    %679 = vmatpush1.bf16.msra.mxu0 %v603
    %680 = vmatprep.subr.bf16.mxu0 %v599
    %681 = vmatpush1.bf16.msra.mxu0 %v598
    %682 = vmatprep.subr.bf16.mxu0 %v594
    %683 = vmatpush1.bf16.msra.mxu0 %v593
    %684 = vmatprep.subr.bf16.mxu0 %v589
    %685 = vmatpush1.bf16.msra.mxu0 %v588
    %686 = vmatprep.subr.bf16.mxu0 0
    %687 = vmatpush2.bf16.msra.mxu0 0
    %688 = vmatprep.subr.bf16.mxu0 0
    %689 = vmatpush2.bf16.msra.mxu0 0
    %690 = vmatprep.subr.bf16.mxu0 0
    %691 = vmatpush2.bf16.msra.mxu0 0
    %692 = vmatprep.subr.bf16.mxu0 0
    %693 = vmatpush2.bf16.msra.mxu0 0
    %694 = vmatprep.subr.bf16.mxu0 0
    %695 = vmatpush2.bf16.msra.mxu0 0
    %696 = vmatprep.subr.bf16.mxu0 0
    %697 = vmatpush2.bf16.msra.mxu0 0
    %698 = vmatprep.subr.bf16.mxu0 0
    %699 = vmatpush2.bf16.msra.mxu0 0
    %700 = vmatprep.subr.bf16.mxu0 0
    %701 = vmatpush2.bf16.msra.mxu0 0
    %702 = vmatprep.mubr.bf16.mxu0 0
    %703 = vmatmul.mubr.bf16.gmra.mxu0 %v627
    %v704 = vpop.f32.mrf.mxu0
    %v705 = vadd.f32 %v508, %v704
    %v706 = vpop.f32.mrf.mxu0
    %v707 = vadd.f32 %v512, %v706
    %v708 = vpop.f32.mrf.mxu0
    %v709 = vpop.f32.mrf.mxu0
    %710 = vdwg.mxu0
    %711 = vmatprep.subr.bf16.mxu0 0
    %712 = vmatpush1.bf16.msra.mxu0 0
    %713 = vmatprep.subr.bf16.mxu0 0
    %714 = vmatpush1.bf16.msra.mxu0 0
    %715 = vmatprep.subr.bf16.mxu0 0
    %716 = vmatpush1.bf16.msra.mxu0 0
    %717 = vmatprep.subr.bf16.mxu0 0
    %718 = vmatpush1.bf16.msra.mxu0 0
    %719 = vmatprep.subr.bf16.mxu0 0
    %720 = vmatpush1.bf16.msra.mxu0 %v605
    %721 = vmatprep.subr.bf16.mxu0 0
    %722 = vmatpush1.bf16.msra.mxu0 %v600
    %723 = vmatprep.subr.bf16.mxu0 0
    %724 = vmatpush1.bf16.msra.mxu0 %v595
    %725 = vmatprep.subr.bf16.mxu0 0
    %726 = vmatpush1.bf16.msra.mxu0 %v590
    %727 = vmatprep.subr.bf16.mxu0 0
    %728 = vmatpush2.bf16.msra.mxu0 0
    %729 = vmatprep.subr.bf16.mxu0 0
    %730 = vmatpush2.bf16.msra.mxu0 0
    %731 = vmatprep.subr.bf16.mxu0 0
    %732 = vmatpush2.bf16.msra.mxu0 0
    %733 = vmatprep.subr.bf16.mxu0 0
    %734 = vmatpush2.bf16.msra.mxu0 0
    %735 = vmatprep.subr.bf16.mxu0 0
    %736 = vmatpush2.bf16.msra.mxu0 0
    %737 = vmatprep.subr.bf16.mxu0 0
    %738 = vmatpush2.bf16.msra.mxu0 0
    %739 = vmatprep.subr.bf16.mxu0 0
    %740 = vmatpush2.bf16.msra.mxu0 0
    %741 = vmatprep.subr.bf16.mxu0 0
    %742 = vmatpush2.bf16.msra.mxu0 0
    %743 = vmatprep.mubr.bf16.mxu0 0
    %744 = vmatmul.mubr.bf16.gmra.mxu0 %v627
    %v745 = vpop.f32.mrf.mxu0
    %v746 = vadd.f32 %v516, %v745
    %v747 = vpop.f32.mrf.mxu0
    %v748 = vpop.f32.mrf.mxu0
    %v749 = vpop.f32.mrf.mxu0
    %750 = vdwg.mxu0
    %v751 = vlaneseq
    %v752 = vand.u32 %v751, 127
    %vm753 = vcmp.lt.s32.totalorder %v752, 5
    %vm754 = vcmp.lt.s32.totalorder %v752, 6
    %v755 = vsel %vm753, %v664, -1e+30
    %vm756 = vcmask 1046528
    %v757 = vsel %vm756, %v755, -inf
    %758 = vmax.xlane.f32.xlu0 %v757
    %v759 = vpop.xlane.xlu0 %758
    %v760 = vsub.f32 %v755, %v759
    %v761 = vmul.f32 %v760, 1.442695
    %v762 = vpow.pop %v761
    %v763 = vsel %vm753, %v762, 0.0
    %v764 = vsel %vm756, %v763, 0.0
    %765 = vadd.xlane.f32.xlu0 %v764
    %v766 = vpop.xlane.xlu0 %765
    %v767 = vrcp.pop %v766
    %v768 = vmul.f32 %v763, %v767
    %v769 = vsel %vm756, %v666, -inf
    %v770 = vrot.slane %v769, 4
    %v771 = vmax.f32 %v769, %v770
    %v772 = vrot.slane %v771, 2
    %v773 = vmax.f32 %v771, %v772
    %v774 = vrot.slane %v773, 1
    %v775 = vmax.f32 %v773, %v774
    %v776 = vsub.f32 %v666, %v775
    %v777 = vmul.f32 %v776, 1.442695
    %v778 = vpow.pop %v777
    %v779 = vsel %vm756, %v778, 0.0
    %v780 = vrot.slane %v779, 4
    %v781 = vadd.f32 %v779, %v780
    %v782 = vrot.slane %v781, 2
    %v783 = vadd.f32 %v781, %v782
    %v784 = vrot.slane %v783, 1
    %v785 = vadd.f32 %v783, %v784
    %v786 = vrcp.pop %v785
    %v787 = vmul.f32 %v778, %v786
    %v788 = vsel %vm753, %v787, 0.0
    %v789 = vmul.f32 %v768, %v788
    %790 = vst [vmem:[#allocation2] sm:$0x7f] %v789
    %v791 = vsel %vm756, %v789, 0.0
    %v792 = vrot.slane %v791, 4
    %v793 = vadd.f32 %v791, %v792
    %v794 = vrot.slane %v793, 2
    %v795 = vadd.f32 %v793, %v794
    %v796 = vrot.slane %v795, 1
    %v797 = vadd.f32 %v795, %v796
    %798 = vst [vmem:[#allocation4] sm:$0x1] %v797
    %v799 = vsel %vm754, %v705, -1e+30
    %v800 = vsel %vm756, %v799, -inf
    %801 = vmax.xlane.f32.xlu0 %v800
    %v802 = vpop.xlane.xlu0 %801
    %v803 = vsub.f32 %v799, %v802
    %v804 = vmul.f32 %v803, 1.442695
    %v805 = vpow.pop %v804
    %v806 = vsel %vm754, %v805, 0.0
    %v807 = vsel %vm756, %v806, 0.0
    %808 = vadd.xlane.f32.xlu0 %v807
    %v809 = vpop.xlane.xlu0 %808
    %v810 = vrcp.pop %v809
    %v811 = vmul.f32 %v806, %v810
    %812 = vst [vmem:[#allocation6] sm:$0x7f] %v811
    %v813 = vadd.f32 %v811, 0.0
    %v814 = vsel %vm754, %v707, -1e+30
    %v815 = vsel %vm756, %v814, -inf
    %816 = vmax.xlane.f32.xlu0 %v815
    %v817 = vpop.xlane.xlu0 %816
    %v818 = vsub.f32 %v814, %v817
    %v819 = vmul.f32 %v818, 1.442695
    %v820 = vpow.pop %v819
    %v821 = vsel %vm754, %v820, 0.0
    %v822 = vsel %vm756, %v821, 0.0
    %823 = vadd.xlane.f32.xlu0 %v822
    %v824 = vpop.xlane.xlu0 %823
    %v825 = vrcp.pop %v824
    %v826 = vmul.f32 %v821, %v825
    %s827 = scalar_lea.vmem [#allocation6], 8
    %828 = vst [vmem:[%s827] sm:$0x7f] %v826
    %v829 = vadd.f32 %v813, %v826
    %v830 = vsel %vm754, %v746, -1e+30
    %v831 = vsel %vm756, %v830, -inf
    %832 = vmax.xlane.f32.xlu0 %v831
    %v833 = vpop.xlane.xlu0 %832
    %v834 = vsub.f32 %v830, %v833
    %v835 = vmul.f32 %v834, 1.442695
    %v836 = vpow.pop %v835
    %v837 = vsel %vm754, %v836, 0.0
    %v838 = vsel %vm756, %v837, 0.0
    %839 = vadd.xlane.f32.xlu0 %v838
    %v840 = vpop.xlane.xlu0 %839
    %v841 = vrcp.pop %v840
    %v842 = vmul.f32 %v837, %v841
    %s843 = scalar_lea.vmem [#allocation6], 16
    %844 = vst [vmem:[%s843] sm:$0x7f] %v842
    %v845 = vadd.f32 %v829, %v842
    %v846 = vmul.f32 %v845, 0.33333334
    %847 = vst [vmem:[%s10] sm:$0x7f] %v846
    // Predicated region
    $region30: #{_device_forward.7} parent=1 // pred_check
      _
    $region31: #{_device_forward.7} parent=1 // pred_check_branch
      %849 = sbr.rel (0) target = $region33
    $region32: #{_device_forward.7} parent=1 // pred_region
      %s851 = ssub.s32 128, 128
      %852 = vsyncadd [#allocation3], %s851
      %s854 = sshll.u32 [#allocation2], 4
      %s855 = int_to_ptr.vmem [resolvable:$true] %s854
      %857 = dma.vmem_to_hbm [thread:$0]  %s855, 128, %s7, [#allocation3]
    $region33: #{_device_forward.7} parent=1 // pred_fallthru
      _
    // Predicated region
    $region34: #{_device_forward.7} parent=1 // pred_check
      _
    $region35: #{_device_forward.7} parent=1 // pred_check_branch
      %859 = sbr.rel (0) target = $region37
    $region36: #{_device_forward.7} parent=1 // pred_region
      %s861 = ssub.s32 16, 16
      %862 = vsyncadd [#allocation5], %s861
      %s864 = sshll.u32 [#allocation4], 4
      %s865 = int_to_ptr.vmem [resolvable:$true] %s864
      %867 = dma.vmem_to_hbm [thread:$0]  %s865, 16, %s8, [#allocation5]
    $region37: #{_device_forward.7} parent=1 // pred_fallthru
      _
    // Predicated region
    $region38: #{_device_forward.7} parent=1 // pred_check
      _
    $region39: #{_device_forward.7} parent=1 // pred_check_branch
      %869 = sbr.rel (0) target = $region41
    $region40: #{_device_forward.7} parent=1 // pred_region
      %s871 = ssub.s32 384, 384
      %872 = vsyncadd [#allocation5], %s871
      %s873 = sshll.u32 [#allocation6], 4
      %s874 = int_to_ptr.vmem [resolvable:$true] %s873
      %879 = dma.vmem_to_hbm [thread:$0]  %s874, 384, %s9, [#allocation5], 128, 128, 8
    $region41: #{_device_forward.7} parent=1 // pred_fallthru
      _
    // Predicated region
    $region42: #{_device_forward.7} parent=1 // pred_check
      _
    $region43: #{_device_forward.7} parent=1 // pred_check_branch
      %881 = sbr.rel (0) target = $region45
    $region44: #{_device_forward.7} parent=1 // pred_region
      _
    $region45: #{_device_forward.7} parent=1 // pred_fallthru
      _
    // Predicated region
    $region46: #{_device_forward.7} parent=1 // pred_check
      _
    $region47: #{_device_forward.7} parent=1 // pred_check_branch
      %883 = sbr.rel (0) target = $region49
    $region48: #{_device_forward.7} parent=1 // pred_region
      %884 = dma.done [#allocation3], 128
    $region49: #{_device_forward.7} parent=1 // pred_fallthru
      _
    // Predicated region
    $region50: #{_device_forward.7} parent=1 // pred_check
      _
    $region51: #{_device_forward.7} parent=1 // pred_check_branch
      %886 = sbr.rel (0) target = $region53
    $region52: #{_device_forward.7} parent=1 // pred_region
      %887 = dma.done [#allocation5], 16
    $region53: #{_device_forward.7} parent=1 // pred_fallthru
      _
    // Predicated region
    $region54: #{_device_forward.7} parent=1 // pred_check
      _
    $region55: #{_device_forward.7} parent=1 // pred_check_branch
      %889 = sbr.rel (0) target = $region57
    $region56: #{_device_forward.7} parent=1 // pred_region
      %890 = dma.done [#allocation5], 384
    $region57: #{_device_forward.7} parent=1 // pred_fallthru
      _
    // Predicated region
    $region58: #{_device_forward.7} parent=1 // pred_check
      _
    $region59: #{_device_forward.7} parent=1 // pred_check_branch
      %892 = sbr.rel (0) target = $region61
    $region60: #{_device_forward.7} parent=1 // pred_region
      _
    $region61: #{_device_forward.7} parent=1 // pred_fallthru
      _
    %893 = vsyncpa [#allocation3], 1
    %894 = vsyncpa [#allocation5], 1

</llo_original>
